<compile_context>
chip_gen: v7x
topology: tpu7x:2x2x1
jax: 0.10.0
libtpu: 0.0.40
codegen_flags: <defaults>
</compile_context>

<pallas_src>
import jax
import jax.numpy as jnp
from jax.experimental import pallas as pl
from jax.experimental.pallas import tpu as pltpu

# ----------------------------- config ---------------------------------------
VOCAB = 64
MAXPOS = 16
HIDDEN = 32
INTER = 64
NHEADS = 2
HEAD_DIM = HIDDEN // NHEADS
LAYERS = 2
NUM_EMOTIONS = 7
NUM_SENTIMENTS = 3
LN_EPS = 1e-12

QKV_PAD = 128     # fused QKV output dim padded 3H=96 -> 128 (lane-dense)
FFN_PAD = 128     # FFN intermediate padded INTER=64 -> 128 (lane-dense)
HEAD_MID = 128    # classifier-head intermediates padded to 128 lanes
HEAD_OUT = 128    # combined logits slab [emotion(7) | sentiment(3) | pad]


# ----------------------------- kernel helpers --------------------------------
def _layernorm(x, g, b):
    mean = jnp.mean(x, axis=-1, keepdims=True)
    var = jnp.mean((x - mean) ** 2, axis=-1, keepdims=True)
    return (x - mean) * jax.lax.rsqrt(var + LN_EPS) * g + b


# ----------------------------- fused full-model kernel -----------------------
def _bert_kernel(emb_ref, mask_ref, eg_ref, eb_ref,
                 wqkv_ref, bqkv_ref, wo_ref, bo_ref, g1_ref, b1_ref,
                 wfi_ref, bfi_ref, wfo_ref, bfo_ref, g2_ref, b2_ref,
                 wp_ref, bp_ref, hw1_ref, hb1_ref, hw2_ref, hb2_ref,
                 hw3_ref, hb3_ref,
                 o_ref):
    """grid = (B,).  One grid step runs one batch element end-to-end:
    embedding LN -> LAYERS transformer layers (unrolled in-kernel loop over
    VMEM-resident stacked weights) -> pooler -> both classifier heads.
    The only output is the [1, 1, HEAD_OUT] logits slab (no [B,S,H] HBM
    writeback)."""
    # Embedding LayerNorm initializes the residual stream (carried as a value
    # through the unrolled layer loop; never leaves VMEM/vregs).
    x = _layernorm(emb_ref[0], eg_ref[...], eb_ref[...])          # [S, H]

    # Additive key-mask bias, computed ONCE per batch element (hoisted out of
    # the layer loop).  Kept in f32; softmax max-subtraction keeps fully
    # masked rows well-conditioned.
    bias = (1.0 - mask_ref[0]) * (-1e9)                           # [1, S]

    for l in range(LAYERS):      # unrolled: weights indexed with static l
        # Fused QKV projection (1/sqrt(D) folded into the Q columns at pack
        # time; output padded to 128 lanes so qkv is lane-dense).
        qkv = jnp.dot(x, wqkv_ref[l],
                      preferred_element_type=jnp.float32) + bqkv_ref[l]

        # Per-head attention; heads merged via per-head row-slabs of Wo
        # (concat-free: ctx @ Wo == sum_h ctx_h @ Wo[h*D:(h+1)*D, :]).
        wo = wo_ref[l]                                            # [H, H]
        attn = bo_ref[l]                                          # [1, H]
        for h in range(NHEADS):
            lo, hi = h * HEAD_DIM, (h + 1) * HEAD_DIM
            qh = qkv[:, lo:hi]                                    # [S, D]
            kh = qkv[:, HIDDEN + lo:HIDDEN + hi]                  # [S, D]
            vh = qkv[:, 2 * HIDDEN + lo:2 * HIDDEN + hi]          # [S, D]
            s = jax.lax.dot_general(qh, kh, (((1,), (1,)), ((), ())),
                                    preferred_element_type=jnp.float32) + bias
            s = s - jnp.max(s, axis=-1, keepdims=True)
            p = jnp.exp(s)
            p = p * pl.reciprocal(jnp.sum(p, axis=-1, keepdims=True),
                                  approx=True)
            ctx_h = jnp.dot(p, vh, preferred_element_type=jnp.float32)
            attn = attn + jnp.dot(ctx_h, wo[lo:hi, :],
                                  preferred_element_type=jnp.float32)

        x = _layernorm(attn + x, g1_ref[l], b1_ref[l])

        # Feed-forward, intermediate padded to 128 lanes.  tanh-approx GELU
        # (EUP), ~1e-3 relative from PyTorch's exact-erf GELU.
        hdn = jnp.dot(x, wfi_ref[l],
                      preferred_element_type=jnp.float32) + bfi_ref[l]
        hdn = 0.5 * hdn * (1.0 + jnp.tanh(
            0.7978845608028654 * (hdn + 0.044715 * hdn * hdn * hdn)))
        ffn = jnp.dot(hdn, wfo_ref[l],
                      preferred_element_type=jnp.float32) + bfo_ref[l]
        x = _layernorm(ffn + x, g2_ref[l], b2_ref[l])

    # Pooler (tanh over the CLS token) + both classifier heads, fused.
    # Heads are packed block-diagonally into lane-dense 128-wide matrices.
    # Dropout layers are inference-mode identities.
    cls = x[0:1, :]                                               # [1, H]
    pooled = jnp.tanh(jnp.dot(cls, wp_ref[...],
                              preferred_element_type=jnp.float32) + bp_ref[...])
    t = jnp.maximum(jnp.dot(pooled, hw1_ref[...],
                            preferred_element_type=jnp.float32) + hb1_ref[...],
                    0.0)
    t = jnp.maximum(jnp.dot(t, hw2_ref[...],
                            preferred_element_type=jnp.float32) + hb2_ref[...],
                    0.0)
    o_ref[0] = jnp.dot(t, hw3_ref[...],
                       preferred_element_type=jnp.float32) + hb3_ref[...]


# ----------------------------- parameters ------------------------------------
def init_params(key):
    keys = iter(jax.random.split(key, 256))

    def dense(fan_in, fan_out):
        w = jax.random.normal(next(keys), (fan_in, fan_out), jnp.float32) * 0.02
        b = jnp.zeros((1, fan_out), jnp.float32)
        return {"w": w, "b": b}

    def ln():
        return {"g": jnp.ones((1, HIDDEN), jnp.float32),
                "b": jnp.zeros((1, HIDDEN), jnp.float32)}

    params = {
        "word_emb": jax.random.normal(next(keys), (VOCAB, HIDDEN), jnp.float32) * 0.02,
        "pos_emb": jax.random.normal(next(keys), (MAXPOS, HIDDEN), jnp.float32) * 0.02,
        "type_emb": jax.random.normal(next(keys), (2, HIDDEN), jnp.float32) * 0.02,
        "emb_ln": ln(),
        "layers": [],
        "pooler": dense(HIDDEN, HIDDEN),
    }
    for _ in range(LAYERS):
        params["layers"].append({
            "q": dense(HIDDEN, HIDDEN),
            "k": dense(HIDDEN, HIDDEN),
            "v": dense(HIDDEN, HIDDEN),
            "o": dense(HIDDEN, HIDDEN),
            "attn_ln": ln(),
            "ffn_in": dense(HIDDEN, INTER),
            "ffn_out": dense(INTER, HIDDEN),
            "ffn_ln": ln(),
        })

    def head(num_out):
        return {"fc1": dense(HIDDEN, HIDDEN),
                "fc2": dense(HIDDEN, HIDDEN // 2),
                "fc3": dense(HIDDEN // 2, num_out)}

    params["emotion_head"] = head(NUM_EMOTIONS)
    params["sentiment_head"] = head(NUM_SENTIMENTS)
    return params


def pack_params(p):
    """One-time repacking: stack per-layer weights along a layer axis, fuse
    QKV (attention scale folded into Q), zero-pad the QKV / FFN intermediates
    to 128 lanes, and pack the two classifier heads block-diagonally into
    lane-dense 128-wide matrices with a single 128-wide logits output."""
    scale = 1.0 / float(HEAD_DIM) ** 0.5
    ls = p["layers"]
    H, H2 = HIDDEN, HIDDEN // 2

    def stk(fn):
        return jnp.stack([fn(l) for l in ls], axis=0)

    def pad_cols(a, width):
        return jnp.pad(a, ((0, 0), (0, width - a.shape[1])))

    packed = {
        "word_emb": p["word_emb"], "pos_emb": p["pos_emb"],
        "type_emb": p["type_emb"],
        "emb_ln_g": p["emb_ln"]["g"], "emb_ln_b": p["emb_ln"]["b"],
        # Fused QKV padded 3H=96 -> 128 lanes (scale folded into Q columns).
        "w_qkv": stk(lambda l: pad_cols(jnp.concatenate(
            [l["q"]["w"] * scale, l["k"]["w"], l["v"]["w"]], axis=1), QKV_PAD)),
        "b_qkv": stk(lambda l: pad_cols(jnp.concatenate(
            [l["q"]["b"] * scale, l["k"]["b"], l["v"]["b"]], axis=1), QKV_PAD)),
        "w_o": stk(lambda l: l["o"]["w"]),
        "b_o": stk(lambda l: l["o"]["b"]),
        "ln1_g": stk(lambda l: l["attn_ln"]["g"]),
        "ln1_b": stk(lambda l: l["attn_ln"]["b"]),
        # FFN intermediate padded INTER=64 -> 128 lanes (zero cols / rows).
        "w_fi": stk(lambda l: pad_cols(l["ffn_in"]["w"], FFN_PAD)),
        "b_fi": stk(lambda l: pad_cols(l["ffn_in"]["b"], FFN_PAD)),
        "w_fo": stk(lambda l: jnp.pad(l["ffn_out"]["w"],
                                      ((0, FFN_PAD - INTER), (0, 0)))),
        "b_fo": stk(lambda l: l["ffn_out"]["b"]),
        "ln2_g": stk(lambda l: l["ffn_ln"]["g"]),
        "ln2_b": stk(lambda l: l["ffn_ln"]["b"]),
        "pool_w": p["pooler"]["w"], "pool_b": p["pooler"]["b"],
    }

    e, s = p["emotion_head"], p["sentiment_head"]

    # fc1 of both heads side by side, padded to 128 lanes.
    w1 = jnp.zeros((H, HEAD_MID), jnp.float32)
    w1 = w1.at[:, :H].set(e["fc1"]["w"])
    w1 = w1.at[:, H:2 * H].set(s["fc1"]["w"])
    b1 = jnp.zeros((1, HEAD_MID), jnp.float32)
    b1 = b1.at[:, :H].set(e["fc1"]["b"])
    b1 = b1.at[:, H:2 * H].set(s["fc1"]["b"])

    # fc2 block-diagonal (emotion sees only emotion fc1 output, etc.).
    w2 = jnp.zeros((HEAD_MID, HEAD_MID), jnp.float32)
    w2 = w2.at[:H, :H2].set(e["fc2"]["w"])
    w2 = w2.at[H:2 * H, H2:2 * H2].set(s["fc2"]["w"])
    b2 = jnp.zeros((1, HEAD_MID), jnp.float32)
    b2 = b2.at[:, :H2].set(e["fc2"]["b"])
    b2 = b2.at[:, H2:2 * H2].set(s["fc2"]["b"])

    # fc3 block-diagonal into one lane-dense 128-wide logits slab.
    w3 = jnp.zeros((HEAD_MID, HEAD_OUT), jnp.float32)
    w3 = w3.at[:H2, :NUM_EMOTIONS].set(e["fc3"]["w"])
    w3 = w3.at[H2:2 * H2,
               NUM_EMOTIONS:NUM_EMOTIONS + NUM_SENTIMENTS].set(s["fc3"]["w"])
    b3 = jnp.zeros((1, HEAD_OUT), jnp.float32)
    b3 = b3.at[:, :NUM_EMOTIONS].set(e["fc3"]["b"])
    b3 = b3.at[:, NUM_EMOTIONS:NUM_EMOTIONS + NUM_SENTIMENTS].set(s["fc3"]["b"])

    packed.update(head_w1=w1, head_b1=b1, head_w2=w2, head_b2=b2,
                  head_w3=w3, head_b3=b3)
    return packed


# ----------------------------- forward pass ----------------------------------
def _const_spec(arr):
    """Whole-array VMEM-resident block, constant over the batch grid axis."""
    shp = tuple(arr.shape)
    return pl.BlockSpec(shp, lambda b, _shp=shp: (0,) * len(_shp))


def bert_multitask_forward(packed, input_ids, attention_mask):
    B, S = input_ids.shape
    H = HIDDEN

    # Embedding gathers (JAX glue; token_type_ids are all zeros).
    tok = jnp.take(packed["word_emb"], input_ids, axis=0)              # [B,S,H]
    pos = jnp.take(packed["pos_emb"], jnp.arange(S), axis=0)[None]     # [1,S,H]
    typ = packed["type_emb"][0][None, None, :]                         # [1,1,H]
    emb = tok + pos + typ                                              # [B,S,H]
    mask = attention_mask.astype(jnp.float32)[:, None, :]              # [B,1,S]

    weight_args = [
        packed["emb_ln_g"], packed["emb_ln_b"],
        packed["w_qkv"], packed["b_qkv"], packed["w_o"], packed["b_o"],
        packed["ln1_g"], packed["ln1_b"],
        packed["w_fi"], packed["b_fi"], packed["w_fo"], packed["b_fo"],
        packed["ln2_g"], packed["ln2_b"],
        packed["pool_w"], packed["pool_b"],
        packed["head_w1"], packed["head_b1"],
        packed["head_w2"], packed["head_b2"],
        packed["head_w3"], packed["head_b3"],
    ]

    in_specs = ([pl.BlockSpec((1, S, H), lambda b: (b, 0, 0)),   # embeddings
                 pl.BlockSpec((1, 1, S), lambda b: (b, 0, 0))]   # attn mask
                + [_const_spec(a) for a in weight_args])

    logits = pl.pallas_call(
        _bert_kernel,
        out_shape=jax.ShapeDtypeStruct((B, 1, HEAD_OUT), jnp.float32),
        grid=(B,),
        in_specs=in_specs,
        out_specs=pl.BlockSpec((1, 1, HEAD_OUT), lambda b: (b, 0, 0)),
        compiler_params=pltpu.CompilerParams(
            dimension_semantics=("parallel",)),   # v7x: 2 TCs split the batch
    )(emb, mask, *weight_args)

    logits = logits[:, 0, :]                                           # [B,128]
    return {"emotion": logits[:, :NUM_EMOTIONS],
            "sentiment": logits[:, NUM_EMOTIONS:NUM_EMOTIONS + NUM_SENTIMENTS]}


# ----------------------------- main ------------------------------------------
if __name__ == "__main__":
    key = jax.random.PRNGKey(0)
    pkey, ikey = jax.random.split(key)
    params = init_params(pkey)
    packed = pack_params(params)          # one-time weight repacking

    B, S = 2, 8
    input_ids = jax.random.randint(ikey, (B, S), 0, VOCAB, dtype=jnp.int32)
    attention_mask = jnp.array(
        [[1, 1, 1, 1, 1, 1, 1, 1],
         [1, 1, 1, 1, 1, 1, 0, 0]], dtype=jnp.int32)

    fwd = jax.jit(bert_multitask_forward)
    out = fwd(packed, input_ids, attention_mask)
    out = jax.block_until_ready(out)

    assert out["emotion"].shape == (B, NUM_EMOTIONS)
    assert out["sentiment"].shape == (B, NUM_SENTIMENTS)
    assert bool(jnp.all(jnp.isfinite(out["emotion"])))
    assert bool(jnp.all(jnp.isfinite(out["sentiment"])))
    print("KERNEL_OK")
</pallas_src>

<mosaic_0001>
module attributes {stable_mosaic.version = 11 : i64} {
  func.func @_bert_kernel(%arg0: i32, %arg1: memref<1x8x32xf32, #tpu.memory_space<vmem>>, %arg2: memref<1x1x8xf32, #tpu.memory_space<vmem>>, %arg3: memref<1x32xf32, #tpu.memory_space<vmem>>, %arg4: memref<1x32xf32, #tpu.memory_space<vmem>>, %arg5: memref<2x32x128xf32, #tpu.memory_space<vmem>>, %arg6: memref<2x1x128xf32, #tpu.memory_space<vmem>>, %arg7: memref<2x32x32xf32, #tpu.memory_space<vmem>>, %arg8: memref<2x1x32xf32, #tpu.memory_space<vmem>>, %arg9: memref<2x1x32xf32, #tpu.memory_space<vmem>>, %arg10: memref<2x1x32xf32, #tpu.memory_space<vmem>>, %arg11: memref<2x32x128xf32, #tpu.memory_space<vmem>>, %arg12: memref<2x1x128xf32, #tpu.memory_space<vmem>>, %arg13: memref<2x128x32xf32, #tpu.memory_space<vmem>>, %arg14: memref<2x1x32xf32, #tpu.memory_space<vmem>>, %arg15: memref<2x1x32xf32, #tpu.memory_space<vmem>>, %arg16: memref<2x1x32xf32, #tpu.memory_space<vmem>>, %arg17: memref<32x32xf32, #tpu.memory_space<vmem>>, %arg18: memref<1x32xf32, #tpu.memory_space<vmem>>, %arg19: memref<32x128xf32, #tpu.memory_space<vmem>>, %arg20: memref<1x128xf32, #tpu.memory_space<vmem>>, %arg21: memref<128x128xf32, #tpu.memory_space<vmem>>, %arg22: memref<1x128xf32, #tpu.memory_space<vmem>>, %arg23: memref<128x128xf32, #tpu.memory_space<vmem>>, %arg24: memref<1x128xf32, #tpu.memory_space<vmem>>, %arg25: memref<1x1x128xf32, #tpu.memory_space<vmem>>) attributes {dimension_semantics = [#tpu.dimension_semantics<parallel>], iteration_bounds = array<i64: 2>, scalar_prefetch = 0 : i64, scratch_operands = 0 : i64, tpu.core_type = #tpu.core_type<tc>, window_params = [{transform_indices = @transform_0, window_bounds = array<i64: 1, 8, 32>}, {transform_indices = @transform_1, window_bounds = array<i64: 1, 1, 8>}, {pipeline_mode = #tpu.pipeline_mode<synchronous>, transform_indices = @transform_2, window_bounds = array<i64: 1, 32>}, {pipeline_mode = #tpu.pipeline_mode<synchronous>, transform_indices = @transform_3, window_bounds = array<i64: 1, 32>}, {pipeline_mode = #tpu.pipeline_mode<synchronous>, transform_indices = @transform_4, window_bounds = array<i64: 2, 32, 128>}, {pipeline_mode = #tpu.pipeline_mode<synchronous>, transform_indices = @transform_5, window_bounds = array<i64: 2, 1, 128>}, {pipeline_mode = #tpu.pipeline_mode<synchronous>, transform_indices = @transform_6, window_bounds = array<i64: 2, 32, 32>}, {pipeline_mode = #tpu.pipeline_mode<synchronous>, transform_indices = @transform_7, window_bounds = array<i64: 2, 1, 32>}, {pipeline_mode = #tpu.pipeline_mode<synchronous>, transform_indices = @transform_8, window_bounds = array<i64: 2, 1, 32>}, {pipeline_mode = #tpu.pipeline_mode<synchronous>, transform_indices = @transform_9, window_bounds = array<i64: 2, 1, 32>}, {pipeline_mode = #tpu.pipeline_mode<synchronous>, transform_indices = @transform_10, window_bounds = array<i64: 2, 32, 128>}, {pipeline_mode = #tpu.pipeline_mode<synchronous>, transform_indices = @transform_11, window_bounds = array<i64: 2, 1, 128>}, {pipeline_mode = #tpu.pipeline_mode<synchronous>, transform_indices = @transform_12, window_bounds = array<i64: 2, 128, 32>}, {pipeline_mode = #tpu.pipeline_mode<synchronous>, transform_indices = @transform_13, window_bounds = array<i64: 2, 1, 32>}, {pipeline_mode = #tpu.pipeline_mode<synchronous>, transform_indices = @transform_14, window_bounds = array<i64: 2, 1, 32>}, {pipeline_mode = #tpu.pipeline_mode<synchronous>, transform_indices = @transform_15, window_bounds = array<i64: 2, 1, 32>}, {pipeline_mode = #tpu.pipeline_mode<synchronous>, transform_indices = @transform_16, window_bounds = array<i64: 32, 32>}, {pipeline_mode = #tpu.pipeline_mode<synchronous>, transform_indices = @transform_17, window_bounds = array<i64: 1, 32>}, {pipeline_mode = #tpu.pipeline_mode<synchronous>, transform_indices = @transform_18, window_bounds = array<i64: 32, 128>}, {pipeline_mode = #tpu.pipeline_mode<synchronous>, transform_indices = @transform_19, window_bounds = array<i64: 1, 128>}, {pipeline_mode = #tpu.pipeline_mode<synchronous>, transform_indices = @transform_20, window_bounds = array<i64: 128, 128>}, {pipeline_mode = #tpu.pipeline_mode<synchronous>, transform_indices = @transform_21, window_bounds = array<i64: 1, 128>}, {pipeline_mode = #tpu.pipeline_mode<synchronous>, transform_indices = @transform_22, window_bounds = array<i64: 128, 128>}, {pipeline_mode = #tpu.pipeline_mode<synchronous>, transform_indices = @transform_23, window_bounds = array<i64: 1, 128>}, {transform_indices = @transform_24, window_bounds = array<i64: 1, 1, 128>}]} {
    %c0 = arith.constant 0 : index
    %c0_0 = arith.constant 0 : index
    %c0_1 = arith.constant 0 : index
    %0 = vector.load %arg1[%c0, %c0_0, %c0_1] : memref<1x8x32xf32, #tpu.memory_space<vmem>>, vector<1x8x32xf32>
    %1 = vector.shape_cast %0 : vector<1x8x32xf32> to vector<8x32xf32>
    %c0_2 = arith.constant 0 : index
    %c0_3 = arith.constant 0 : index
    %2 = vector.load %arg3[%c0_2, %c0_3] : memref<1x32xf32, #tpu.memory_space<vmem>>, vector<1x32xf32>
    %c0_4 = arith.constant 0 : index
    %c0_5 = arith.constant 0 : index
    %3 = vector.load %arg4[%c0_4, %c0_5] : memref<1x32xf32, #tpu.memory_space<vmem>>, vector<1x32xf32>
    %cst = arith.constant dense<0.000000e+00> : vector<8xf32>
    %4 = vector.multi_reduction <add>, %1, %cst [1] : vector<8x32xf32> to vector<8xf32>
    %5 = vector.shape_cast %4 : vector<8xf32> to vector<8x1xf32>
    %cst_6 = arith.constant 3.200000e+01 : f32
    %6 = vector.broadcast %cst_6 : f32 to vector<8x1xf32>
    %7 = arith.divf %5, %6 : vector<8x1xf32>
    %8 = vector.broadcast %7 : vector<8x1xf32> to vector<8x32xf32>
    %9 = arith.subf %1, %8 : vector<8x32xf32>
    %10 = arith.mulf %9, %9 : vector<8x32xf32>
    %cst_7 = arith.constant dense<0.000000e+00> : vector<8xf32>
    %11 = vector.multi_reduction <add>, %10, %cst_7 [1] : vector<8x32xf32> to vector<8xf32>
    %12 = vector.shape_cast %11 : vector<8xf32> to vector<8x1xf32>
    %cst_8 = arith.constant 3.200000e+01 : f32
    %13 = vector.broadcast %cst_8 : f32 to vector<8x1xf32>
    %14 = arith.divf %12, %13 : vector<8x1xf32>
    %15 = vector.broadcast %7 : vector<8x1xf32> to vector<8x32xf32>
    %16 = arith.subf %1, %15 : vector<8x32xf32>
    %cst_9 = arith.constant 9.99999996E-13 : f32
    %17 = vector.broadcast %cst_9 : f32 to vector<8x1xf32>
    %18 = arith.addf %14, %17 : vector<8x1xf32>
    %19 = math.rsqrt %18 : vector<8x1xf32>
    %20 = vector.broadcast %19 : vector<8x1xf32> to vector<8x32xf32>
    %21 = arith.mulf %16, %20 : vector<8x32xf32>
    %22 = vector.broadcast %2 : vector<1x32xf32> to vector<8x32xf32>
    %23 = arith.mulf %21, %22 : vector<8x32xf32>
    %24 = vector.broadcast %3 : vector<1x32xf32> to vector<8x32xf32>
    %25 = arith.addf %23, %24 : vector<8x32xf32>
    %c0_10 = arith.constant 0 : index
    %c0_11 = arith.constant 0 : index
    %c0_12 = arith.constant 0 : index
    %26 = vector.load %arg2[%c0_10, %c0_11, %c0_12] : memref<1x1x8xf32, #tpu.memory_space<vmem>>, vector<1x1x8xf32>
    %27 = vector.shape_cast %26 : vector<1x1x8xf32> to vector<1x8xf32>
    %cst_13 = arith.constant 1.000000e+00 : f32
    %28 = vector.broadcast %cst_13 : f32 to vector<1x8xf32>
    %29 = arith.subf %28, %27 : vector<1x8xf32>
    %cst_14 = arith.constant -1.000000e+09 : f32
    %30 = vector.broadcast %cst_14 : f32 to vector<1x8xf32>
    %31 = arith.mulf %29, %30 : vector<1x8xf32>
    %c0_15 = arith.constant 0 : index
    %c0_16 = arith.constant 0 : index
    %c0_17 = arith.constant 0 : index
    %32 = vector.load %arg5[%c0_15, %c0_16, %c0_17] : memref<2x32x128xf32, #tpu.memory_space<vmem>>, vector<1x32x128xf32>
    %33 = vector.shape_cast %32 : vector<1x32x128xf32> to vector<32x128xf32>
    %cst_18 = arith.constant dense<0.000000e+00> : vector<8x128xf32>
    %34 = tpu.matmul %25, %33, %cst_18 {dimension_numbers = #tpu.dot_dimension_numbers<[1], [0], [0], [1], [0, 0, 1, 1], [], []>} : vector<8x32xf32>, vector<32x128xf32>, vector<8x128xf32> -> vector<8x128xf32>
    %c0_19 = arith.constant 0 : index
    %c0_20 = arith.constant 0 : index
    %c0_21 = arith.constant 0 : index
    %35 = vector.load %arg6[%c0_19, %c0_20, %c0_21] : memref<2x1x128xf32, #tpu.memory_space<vmem>>, vector<1x1x128xf32>
    %36 = vector.shape_cast %35 : vector<1x1x128xf32> to vector<1x128xf32>
    %37 = vector.broadcast %36 : vector<1x128xf32> to vector<8x128xf32>
    %38 = arith.addf %34, %37 : vector<8x128xf32>
    %c0_22 = arith.constant 0 : index
    %c0_23 = arith.constant 0 : index
    %c0_24 = arith.constant 0 : index
    %39 = vector.load %arg7[%c0_22, %c0_23, %c0_24] : memref<2x32x32xf32, #tpu.memory_space<vmem>>, vector<1x32x32xf32>
    %40 = vector.shape_cast %39 : vector<1x32x32xf32> to vector<32x32xf32>
    %c0_25 = arith.constant 0 : index
    %c0_26 = arith.constant 0 : index
    %c0_27 = arith.constant 0 : index
    %41 = vector.load %arg8[%c0_25, %c0_26, %c0_27] : memref<2x1x32xf32, #tpu.memory_space<vmem>>, vector<1x1x32xf32>
    %42 = vector.shape_cast %41 : vector<1x1x32xf32> to vector<1x32xf32>
    %43 = vector.extract_strided_slice %38 {offsets = [0, 0], sizes = [8, 16], strides = [1, 1]} : vector<8x128xf32> to vector<8x16xf32>
    %44 = vector.extract_strided_slice %38 {offsets = [0, 32], sizes = [8, 16], strides = [1, 1]} : vector<8x128xf32> to vector<8x16xf32>
    %45 = vector.extract_strided_slice %38 {offsets = [0, 64], sizes = [8, 16], strides = [1, 1]} : vector<8x128xf32> to vector<8x16xf32>
    %cst_28 = arith.constant dense<0.000000e+00> : vector<8x8xf32>
    %46 = tpu.matmul %43, %44, %cst_28 {dimension_numbers = #tpu.dot_dimension_numbers<[1], [1], [0], [0], [0, 0, 1, 0], [], []>} : vector<8x16xf32>, vector<8x16xf32>, vector<8x8xf32> -> vector<8x8xf32>
    %47 = vector.broadcast %31 : vector<1x8xf32> to vector<8x8xf32>
    %48 = arith.addf %46, %47 : vector<8x8xf32>
    %cst_29 = arith.constant dense<0xFF800000> : vector<8xf32>
    %49 = vector.multi_reduction <maximumf>, %48, %cst_29 [1] : vector<8x8xf32> to vector<8xf32>
    %50 = vector.shape_cast %49 : vector<8xf32> to vector<8x1xf32>
    %51 = vector.broadcast %50 : vector<8x1xf32> to vector<8x8xf32>
    %52 = arith.subf %48, %51 : vector<8x8xf32>
    %53 = math.exp %52 : vector<8x8xf32>
    %cst_30 = arith.constant dense<0.000000e+00> : vector<8xf32>
    %54 = vector.multi_reduction <add>, %53, %cst_30 [1] : vector<8x8xf32> to vector<8xf32>
    %55 = vector.shape_cast %54 : vector<8xf32> to vector<8x1xf32>
    %56 = tpu.reciprocal %55 {approx = true} : vector<8x1xf32> -> vector<8x1xf32>
    %57 = vector.broadcast %56 : vector<8x1xf32> to vector<8x8xf32>
    %58 = arith.mulf %53, %57 : vector<8x8xf32>
    %cst_31 = arith.constant dense<0.000000e+00> : vector<8x16xf32>
    %59 = tpu.matmul %58, %45, %cst_31 {dimension_numbers = #tpu.dot_dimension_numbers<[1], [0], [0], [1], [0, 0, 1, 1], [], []>} : vector<8x8xf32>, vector<8x16xf32>, vector<8x16xf32> -> vector<8x16xf32>
    %60 = vector.extract_strided_slice %40 {offsets = [0, 0], sizes = [16, 32], strides = [1, 1]} : vector<32x32xf32> to vector<16x32xf32>
    %cst_32 = arith.constant dense<0.000000e+00> : vector<8x32xf32>
    %61 = tpu.matmul %59, %60, %cst_32 {dimension_numbers = #tpu.dot_dimension_numbers<[1], [0], [0], [1], [0, 0, 1, 1], [], []>} : vector<8x16xf32>, vector<16x32xf32>, vector<8x32xf32> -> vector<8x32xf32>
    %62 = vector.broadcast %42 : vector<1x32xf32> to vector<8x32xf32>
    %63 = arith.addf %62, %61 : vector<8x32xf32>
    %64 = vector.extract_strided_slice %38 {offsets = [0, 16], sizes = [8, 16], strides = [1, 1]} : vector<8x128xf32> to vector<8x16xf32>
    %65 = vector.extract_strided_slice %38 {offsets = [0, 48], sizes = [8, 16], strides = [1, 1]} : vector<8x128xf32> to vector<8x16xf32>
    %66 = vector.extract_strided_slice %38 {offsets = [0, 80], sizes = [8, 16], strides = [1, 1]} : vector<8x128xf32> to vector<8x16xf32>
    %cst_33 = arith.constant dense<0.000000e+00> : vector<8x8xf32>
    %67 = tpu.matmul %64, %65, %cst_33 {dimension_numbers = #tpu.dot_dimension_numbers<[1], [1], [0], [0], [0, 0, 1, 0], [], []>} : vector<8x16xf32>, vector<8x16xf32>, vector<8x8xf32> -> vector<8x8xf32>
    %68 = vector.broadcast %31 : vector<1x8xf32> to vector<8x8xf32>
    %69 = arith.addf %67, %68 : vector<8x8xf32>
    %cst_34 = arith.constant dense<0xFF800000> : vector<8xf32>
    %70 = vector.multi_reduction <maximumf>, %69, %cst_34 [1] : vector<8x8xf32> to vector<8xf32>
    %71 = vector.shape_cast %70 : vector<8xf32> to vector<8x1xf32>
    %72 = vector.broadcast %71 : vector<8x1xf32> to vector<8x8xf32>
    %73 = arith.subf %69, %72 : vector<8x8xf32>
    %74 = math.exp %73 : vector<8x8xf32>
    %cst_35 = arith.constant dense<0.000000e+00> : vector<8xf32>
    %75 = vector.multi_reduction <add>, %74, %cst_35 [1] : vector<8x8xf32> to vector<8xf32>
    %76 = vector.shape_cast %75 : vector<8xf32> to vector<8x1xf32>
    %77 = tpu.reciprocal %76 {approx = true} : vector<8x1xf32> -> vector<8x1xf32>
    %78 = vector.broadcast %77 : vector<8x1xf32> to vector<8x8xf32>
    %79 = arith.mulf %74, %78 : vector<8x8xf32>
    %cst_36 = arith.constant dense<0.000000e+00> : vector<8x16xf32>
    %80 = tpu.matmul %79, %66, %cst_36 {dimension_numbers = #tpu.dot_dimension_numbers<[1], [0], [0], [1], [0, 0, 1, 1], [], []>} : vector<8x8xf32>, vector<8x16xf32>, vector<8x16xf32> -> vector<8x16xf32>
    %81 = vector.extract_strided_slice %40 {offsets = [16, 0], sizes = [16, 32], strides = [1, 1]} : vector<32x32xf32> to vector<16x32xf32>
    %cst_37 = arith.constant dense<0.000000e+00> : vector<8x32xf32>
    %82 = tpu.matmul %80, %81, %cst_37 {dimension_numbers = #tpu.dot_dimension_numbers<[1], [0], [0], [1], [0, 0, 1, 1], [], []>} : vector<8x16xf32>, vector<16x32xf32>, vector<8x32xf32> -> vector<8x32xf32>
    %83 = arith.addf %63, %82 : vector<8x32xf32>
    %84 = arith.addf %83, %25 : vector<8x32xf32>
    %c0_38 = arith.constant 0 : index
    %c0_39 = arith.constant 0 : index
    %c0_40 = arith.constant 0 : index
    %85 = vector.load %arg9[%c0_38, %c0_39, %c0_40] : memref<2x1x32xf32, #tpu.memory_space<vmem>>, vector<1x1x32xf32>
    %86 = vector.shape_cast %85 : vector<1x1x32xf32> to vector<1x32xf32>
    %c0_41 = arith.constant 0 : index
    %c0_42 = arith.constant 0 : index
    %c0_43 = arith.constant 0 : index
    %87 = vector.load %arg10[%c0_41, %c0_42, %c0_43] : memref<2x1x32xf32, #tpu.memory_space<vmem>>, vector<1x1x32xf32>
    %88 = vector.shape_cast %87 : vector<1x1x32xf32> to vector<1x32xf32>
    %cst_44 = arith.constant dense<0.000000e+00> : vector<8xf32>
    %89 = vector.multi_reduction <add>, %84, %cst_44 [1] : vector<8x32xf32> to vector<8xf32>
    %90 = vector.shape_cast %89 : vector<8xf32> to vector<8x1xf32>
    %cst_45 = arith.constant 3.200000e+01 : f32
    %91 = vector.broadcast %cst_45 : f32 to vector<8x1xf32>
    %92 = arith.divf %90, %91 : vector<8x1xf32>
    %93 = vector.broadcast %92 : vector<8x1xf32> to vector<8x32xf32>
    %94 = arith.subf %84, %93 : vector<8x32xf32>
    %95 = arith.mulf %94, %94 : vector<8x32xf32>
    %cst_46 = arith.constant dense<0.000000e+00> : vector<8xf32>
    %96 = vector.multi_reduction <add>, %95, %cst_46 [1] : vector<8x32xf32> to vector<8xf32>
    %97 = vector.shape_cast %96 : vector<8xf32> to vector<8x1xf32>
    %cst_47 = arith.constant 3.200000e+01 : f32
    %98 = vector.broadcast %cst_47 : f32 to vector<8x1xf32>
    %99 = arith.divf %97, %98 : vector<8x1xf32>
    %100 = vector.broadcast %92 : vector<8x1xf32> to vector<8x32xf32>
    %101 = arith.subf %84, %100 : vector<8x32xf32>
    %cst_48 = arith.constant 9.99999996E-13 : f32
    %102 = vector.broadcast %cst_48 : f32 to vector<8x1xf32>
    %103 = arith.addf %99, %102 : vector<8x1xf32>
    %104 = math.rsqrt %103 : vector<8x1xf32>
    %105 = vector.broadcast %104 : vector<8x1xf32> to vector<8x32xf32>
    %106 = arith.mulf %101, %105 : vector<8x32xf32>
    %107 = vector.broadcast %86 : vector<1x32xf32> to vector<8x32xf32>
    %108 = arith.mulf %106, %107 : vector<8x32xf32>
    %109 = vector.broadcast %88 : vector<1x32xf32> to vector<8x32xf32>
    %110 = arith.addf %108, %109 : vector<8x32xf32>
    %c0_49 = arith.constant 0 : index
    %c0_50 = arith.constant 0 : index
    %c0_51 = arith.constant 0 : index
    %111 = vector.load %arg11[%c0_49, %c0_50, %c0_51] : memref<2x32x128xf32, #tpu.memory_space<vmem>>, vector<1x32x128xf32>
    %112 = vector.shape_cast %111 : vector<1x32x128xf32> to vector<32x128xf32>
    %cst_52 = arith.constant dense<0.000000e+00> : vector<8x128xf32>
    %113 = tpu.matmul %110, %112, %cst_52 {dimension_numbers = #tpu.dot_dimension_numbers<[1], [0], [0], [1], [0, 0, 1, 1], [], []>} : vector<8x32xf32>, vector<32x128xf32>, vector<8x128xf32> -> vector<8x128xf32>
    %c0_53 = arith.constant 0 : index
    %c0_54 = arith.constant 0 : index
    %c0_55 = arith.constant 0 : index
    %114 = vector.load %arg12[%c0_53, %c0_54, %c0_55] : memref<2x1x128xf32, #tpu.memory_space<vmem>>, vector<1x1x128xf32>
    %115 = vector.shape_cast %114 : vector<1x1x128xf32> to vector<1x128xf32>
    %116 = vector.broadcast %115 : vector<1x128xf32> to vector<8x128xf32>
    %117 = arith.addf %113, %116 : vector<8x128xf32>
    %cst_56 = arith.constant 5.000000e-01 : f32
    %118 = vector.broadcast %cst_56 : f32 to vector<8x128xf32>
    %119 = arith.mulf %118, %117 : vector<8x128xf32>
    %cst_57 = arith.constant 4.471500e-02 : f32
    %120 = vector.broadcast %cst_57 : f32 to vector<8x128xf32>
    %121 = arith.mulf %120, %117 : vector<8x128xf32>
    %122 = arith.mulf %121, %117 : vector<8x128xf32>
    %123 = arith.mulf %122, %117 : vector<8x128xf32>
    %124 = arith.addf %117, %123 : vector<8x128xf32>
    %cst_58 = arith.constant 0.797884583 : f32
    %125 = vector.broadcast %cst_58 : f32 to vector<8x128xf32>
    %126 = arith.mulf %125, %124 : vector<8x128xf32>
    %127 = math.tanh %126 : vector<8x128xf32>
    %cst_59 = arith.constant 1.000000e+00 : f32
    %128 = vector.broadcast %cst_59 : f32 to vector<8x128xf32>
    %129 = arith.addf %128, %127 : vector<8x128xf32>
    %130 = arith.mulf %119, %129 : vector<8x128xf32>
    %c0_60 = arith.constant 0 : index
    %c0_61 = arith.constant 0 : index
    %c0_62 = arith.constant 0 : index
    %131 = vector.load %arg13[%c0_60, %c0_61, %c0_62] : memref<2x128x32xf32, #tpu.memory_space<vmem>>, vector<1x128x32xf32>
    %132 = vector.shape_cast %131 : vector<1x128x32xf32> to vector<128x32xf32>
    %cst_63 = arith.constant dense<0.000000e+00> : vector<8x32xf32>
    %133 = tpu.matmul %130, %132, %cst_63 {dimension_numbers = #tpu.dot_dimension_numbers<[1], [0], [0], [1], [0, 0, 1, 1], [], []>} : vector<8x128xf32>, vector<128x32xf32>, vector<8x32xf32> -> vector<8x32xf32>
    %c0_64 = arith.constant 0 : index
    %c0_65 = arith.constant 0 : index
    %c0_66 = arith.constant 0 : index
    %134 = vector.load %arg14[%c0_64, %c0_65, %c0_66] : memref<2x1x32xf32, #tpu.memory_space<vmem>>, vector<1x1x32xf32>
    %135 = vector.shape_cast %134 : vector<1x1x32xf32> to vector<1x32xf32>
    %136 = vector.broadcast %135 : vector<1x32xf32> to vector<8x32xf32>
    %137 = arith.addf %133, %136 : vector<8x32xf32>
    %138 = arith.addf %137, %110 : vector<8x32xf32>
    %c0_67 = arith.constant 0 : index
    %c0_68 = arith.constant 0 : index
    %c0_69 = arith.constant 0 : index
    %139 = vector.load %arg15[%c0_67, %c0_68, %c0_69] : memref<2x1x32xf32, #tpu.memory_space<vmem>>, vector<1x1x32xf32>
    %140 = vector.shape_cast %139 : vector<1x1x32xf32> to vector<1x32xf32>
    %c0_70 = arith.constant 0 : index
    %c0_71 = arith.constant 0 : index
    %c0_72 = arith.constant 0 : index
    %141 = vector.load %arg16[%c0_70, %c0_71, %c0_72] : memref<2x1x32xf32, #tpu.memory_space<vmem>>, vector<1x1x32xf32>
    %142 = vector.shape_cast %141 : vector<1x1x32xf32> to vector<1x32xf32>
    %cst_73 = arith.constant dense<0.000000e+00> : vector<8xf32>
    %143 = vector.multi_reduction <add>, %138, %cst_73 [1] : vector<8x32xf32> to vector<8xf32>
    %144 = vector.shape_cast %143 : vector<8xf32> to vector<8x1xf32>
    %cst_74 = arith.constant 3.200000e+01 : f32
    %145 = vector.broadcast %cst_74 : f32 to vector<8x1xf32>
    %146 = arith.divf %144, %145 : vector<8x1xf32>
    %147 = vector.broadcast %146 : vector<8x1xf32> to vector<8x32xf32>
    %148 = arith.subf %138, %147 : vector<8x32xf32>
    %149 = arith.mulf %148, %148 : vector<8x32xf32>
    %cst_75 = arith.constant dense<0.000000e+00> : vector<8xf32>
    %150 = vector.multi_reduction <add>, %149, %cst_75 [1] : vector<8x32xf32> to vector<8xf32>
    %151 = vector.shape_cast %150 : vector<8xf32> to vector<8x1xf32>
    %cst_76 = arith.constant 3.200000e+01 : f32
    %152 = vector.broadcast %cst_76 : f32 to vector<8x1xf32>
    %153 = arith.divf %151, %152 : vector<8x1xf32>
    %154 = vector.broadcast %146 : vector<8x1xf32> to vector<8x32xf32>
    %155 = arith.subf %138, %154 : vector<8x32xf32>
    %cst_77 = arith.constant 9.99999996E-13 : f32
    %156 = vector.broadcast %cst_77 : f32 to vector<8x1xf32>
    %157 = arith.addf %153, %156 : vector<8x1xf32>
    %158 = math.rsqrt %157 : vector<8x1xf32>
    %159 = vector.broadcast %158 : vector<8x1xf32> to vector<8x32xf32>
    %160 = arith.mulf %155, %159 : vector<8x32xf32>
    %161 = vector.broadcast %140 : vector<1x32xf32> to vector<8x32xf32>
    %162 = arith.mulf %160, %161 : vector<8x32xf32>
    %163 = vector.broadcast %142 : vector<1x32xf32> to vector<8x32xf32>
    %164 = arith.addf %162, %163 : vector<8x32xf32>
    %c1 = arith.constant 1 : index
    %c0_78 = arith.constant 0 : index
    %c0_79 = arith.constant 0 : index
    %165 = vector.load %arg5[%c1, %c0_78, %c0_79] : memref<2x32x128xf32, #tpu.memory_space<vmem>>, vector<1x32x128xf32>
    %166 = vector.shape_cast %165 : vector<1x32x128xf32> to vector<32x128xf32>
    %cst_80 = arith.constant dense<0.000000e+00> : vector<8x128xf32>
    %167 = tpu.matmul %164, %166, %cst_80 {dimension_numbers = #tpu.dot_dimension_numbers<[1], [0], [0], [1], [0, 0, 1, 1], [], []>} : vector<8x32xf32>, vector<32x128xf32>, vector<8x128xf32> -> vector<8x128xf32>
    %c1_81 = arith.constant 1 : index
    %c0_82 = arith.constant 0 : index
    %c0_83 = arith.constant 0 : index
    %168 = vector.load %arg6[%c1_81, %c0_82, %c0_83] : memref<2x1x128xf32, #tpu.memory_space<vmem>>, vector<1x1x128xf32>
    %169 = vector.shape_cast %168 : vector<1x1x128xf32> to vector<1x128xf32>
    %170 = vector.broadcast %169 : vector<1x128xf32> to vector<8x128xf32>
    %171 = arith.addf %167, %170 : vector<8x128xf32>
    %c1_84 = arith.constant 1 : index
    %c0_85 = arith.constant 0 : index
    %c0_86 = arith.constant 0 : index
    %172 = vector.load %arg7[%c1_84, %c0_85, %c0_86] : memref<2x32x32xf32, #tpu.memory_space<vmem>>, vector<1x32x32xf32>
    %173 = vector.shape_cast %172 : vector<1x32x32xf32> to vector<32x32xf32>
    %c1_87 = arith.constant 1 : index
    %c0_88 = arith.constant 0 : index
    %c0_89 = arith.constant 0 : index
    %174 = vector.load %arg8[%c1_87, %c0_88, %c0_89] : memref<2x1x32xf32, #tpu.memory_space<vmem>>, vector<1x1x32xf32>
    %175 = vector.shape_cast %174 : vector<1x1x32xf32> to vector<1x32xf32>
    %176 = vector.extract_strided_slice %171 {offsets = [0, 0], sizes = [8, 16], strides = [1, 1]} : vector<8x128xf32> to vector<8x16xf32>
    %177 = vector.extract_strided_slice %171 {offsets = [0, 32], sizes = [8, 16], strides = [1, 1]} : vector<8x128xf32> to vector<8x16xf32>
    %178 = vector.extract_strided_slice %171 {offsets = [0, 64], sizes = [8, 16], strides = [1, 1]} : vector<8x128xf32> to vector<8x16xf32>
    %cst_90 = arith.constant dense<0.000000e+00> : vector<8x8xf32>
    %179 = tpu.matmul %176, %177, %cst_90 {dimension_numbers = #tpu.dot_dimension_numbers<[1], [1], [0], [0], [0, 0, 1, 0], [], []>} : vector<8x16xf32>, vector<8x16xf32>, vector<8x8xf32> -> vector<8x8xf32>
    %180 = vector.broadcast %31 : vector<1x8xf32> to vector<8x8xf32>
    %181 = arith.addf %179, %180 : vector<8x8xf32>
    %cst_91 = arith.constant dense<0xFF800000> : vector<8xf32>
    %182 = vector.multi_reduction <maximumf>, %181, %cst_91 [1] : vector<8x8xf32> to vector<8xf32>
    %183 = vector.shape_cast %182 : vector<8xf32> to vector<8x1xf32>
    %184 = vector.broadcast %183 : vector<8x1xf32> to vector<8x8xf32>
    %185 = arith.subf %181, %184 : vector<8x8xf32>
    %186 = math.exp %185 : vector<8x8xf32>
    %cst_92 = arith.constant dense<0.000000e+00> : vector<8xf32>
    %187 = vector.multi_reduction <add>, %186, %cst_92 [1] : vector<8x8xf32> to vector<8xf32>
    %188 = vector.shape_cast %187 : vector<8xf32> to vector<8x1xf32>
    %189 = tpu.reciprocal %188 {approx = true} : vector<8x1xf32> -> vector<8x1xf32>
    %190 = vector.broadcast %189 : vector<8x1xf32> to vector<8x8xf32>
    %191 = arith.mulf %186, %190 : vector<8x8xf32>
    %cst_93 = arith.constant dense<0.000000e+00> : vector<8x16xf32>
    %192 = tpu.matmul %191, %178, %cst_93 {dimension_numbers = #tpu.dot_dimension_numbers<[1], [0], [0], [1], [0, 0, 1, 1], [], []>} : vector<8x8xf32>, vector<8x16xf32>, vector<8x16xf32> -> vector<8x16xf32>
    %193 = vector.extract_strided_slice %173 {offsets = [0, 0], sizes = [16, 32], strides = [1, 1]} : vector<32x32xf32> to vector<16x32xf32>
    %cst_94 = arith.constant dense<0.000000e+00> : vector<8x32xf32>
    %194 = tpu.matmul %192, %193, %cst_94 {dimension_numbers = #tpu.dot_dimension_numbers<[1], [0], [0], [1], [0, 0, 1, 1], [], []>} : vector<8x16xf32>, vector<16x32xf32>, vector<8x32xf32> -> vector<8x32xf32>
    %195 = vector.broadcast %175 : vector<1x32xf32> to vector<8x32xf32>
    %196 = arith.addf %195, %194 : vector<8x32xf32>
    %197 = vector.extract_strided_slice %171 {offsets = [0, 16], sizes = [8, 16], strides = [1, 1]} : vector<8x128xf32> to vector<8x16xf32>
    %198 = vector.extract_strided_slice %171 {offsets = [0, 48], sizes = [8, 16], strides = [1, 1]} : vector<8x128xf32> to vector<8x16xf32>
    %199 = vector.extract_strided_slice %171 {offsets = [0, 80], sizes = [8, 16], strides = [1, 1]} : vector<8x128xf32> to vector<8x16xf32>
    %cst_95 = arith.constant dense<0.000000e+00> : vector<8x8xf32>
    %200 = tpu.matmul %197, %198, %cst_95 {dimension_numbers = #tpu.dot_dimension_numbers<[1], [1], [0], [0], [0, 0, 1, 0], [], []>} : vector<8x16xf32>, vector<8x16xf32>, vector<8x8xf32> -> vector<8x8xf32>
    %201 = vector.broadcast %31 : vector<1x8xf32> to vector<8x8xf32>
    %202 = arith.addf %200, %201 : vector<8x8xf32>
    %cst_96 = arith.constant dense<0xFF800000> : vector<8xf32>
    %203 = vector.multi_reduction <maximumf>, %202, %cst_96 [1] : vector<8x8xf32> to vector<8xf32>
    %204 = vector.shape_cast %203 : vector<8xf32> to vector<8x1xf32>
    %205 = vector.broadcast %204 : vector<8x1xf32> to vector<8x8xf32>
    %206 = arith.subf %202, %205 : vector<8x8xf32>
    %207 = math.exp %206 : vector<8x8xf32>
    %cst_97 = arith.constant dense<0.000000e+00> : vector<8xf32>
    %208 = vector.multi_reduction <add>, %207, %cst_97 [1] : vector<8x8xf32> to vector<8xf32>
    %209 = vector.shape_cast %208 : vector<8xf32> to vector<8x1xf32>
    %210 = tpu.reciprocal %209 {approx = true} : vector<8x1xf32> -> vector<8x1xf32>
    %211 = vector.broadcast %210 : vector<8x1xf32> to vector<8x8xf32>
    %212 = arith.mulf %207, %211 : vector<8x8xf32>
    %cst_98 = arith.constant dense<0.000000e+00> : vector<8x16xf32>
    %213 = tpu.matmul %212, %199, %cst_98 {dimension_numbers = #tpu.dot_dimension_numbers<[1], [0], [0], [1], [0, 0, 1, 1], [], []>} : vector<8x8xf32>, vector<8x16xf32>, vector<8x16xf32> -> vector<8x16xf32>
    %214 = vector.extract_strided_slice %173 {offsets = [16, 0], sizes = [16, 32], strides = [1, 1]} : vector<32x32xf32> to vector<16x32xf32>
    %cst_99 = arith.constant dense<0.000000e+00> : vector<8x32xf32>
    %215 = tpu.matmul %213, %214, %cst_99 {dimension_numbers = #tpu.dot_dimension_numbers<[1], [0], [0], [1], [0, 0, 1, 1], [], []>} : vector<8x16xf32>, vector<16x32xf32>, vector<8x32xf32> -> vector<8x32xf32>
    %216 = arith.addf %196, %215 : vector<8x32xf32>
    %217 = arith.addf %216, %164 : vector<8x32xf32>
    %c1_100 = arith.constant 1 : index
    %c0_101 = arith.constant 0 : index
    %c0_102 = arith.constant 0 : index
    %218 = vector.load %arg9[%c1_100, %c0_101, %c0_102] : memref<2x1x32xf32, #tpu.memory_space<vmem>>, vector<1x1x32xf32>
    %219 = vector.shape_cast %218 : vector<1x1x32xf32> to vector<1x32xf32>
    %c1_103 = arith.constant 1 : index
    %c0_104 = arith.constant 0 : index
    %c0_105 = arith.constant 0 : index
    %220 = vector.load %arg10[%c1_103, %c0_104, %c0_105] : memref<2x1x32xf32, #tpu.memory_space<vmem>>, vector<1x1x32xf32>
    %221 = vector.shape_cast %220 : vector<1x1x32xf32> to vector<1x32xf32>
    %cst_106 = arith.constant dense<0.000000e+00> : vector<8xf32>
    %222 = vector.multi_reduction <add>, %217, %cst_106 [1] : vector<8x32xf32> to vector<8xf32>
    %223 = vector.shape_cast %222 : vector<8xf32> to vector<8x1xf32>
    %cst_107 = arith.constant 3.200000e+01 : f32
    %224 = vector.broadcast %cst_107 : f32 to vector<8x1xf32>
    %225 = arith.divf %223, %224 : vector<8x1xf32>
    %226 = vector.broadcast %225 : vector<8x1xf32> to vector<8x32xf32>
    %227 = arith.subf %217, %226 : vector<8x32xf32>
    %228 = arith.mulf %227, %227 : vector<8x32xf32>
    %cst_108 = arith.constant dense<0.000000e+00> : vector<8xf32>
    %229 = vector.multi_reduction <add>, %228, %cst_108 [1] : vector<8x32xf32> to vector<8xf32>
    %230 = vector.shape_cast %229 : vector<8xf32> to vector<8x1xf32>
    %cst_109 = arith.constant 3.200000e+01 : f32
    %231 = vector.broadcast %cst_109 : f32 to vector<8x1xf32>
    %232 = arith.divf %230, %231 : vector<8x1xf32>
    %233 = vector.broadcast %225 : vector<8x1xf32> to vector<8x32xf32>
    %234 = arith.subf %217, %233 : vector<8x32xf32>
    %cst_110 = arith.constant 9.99999996E-13 : f32
    %235 = vector.broadcast %cst_110 : f32 to vector<8x1xf32>
    %236 = arith.addf %232, %235 : vector<8x1xf32>
    %237 = math.rsqrt %236 : vector<8x1xf32>
    %238 = vector.broadcast %237 : vector<8x1xf32> to vector<8x32xf32>
    %239 = arith.mulf %234, %238 : vector<8x32xf32>
    %240 = vector.broadcast %219 : vector<1x32xf32> to vector<8x32xf32>
    %241 = arith.mulf %239, %240 : vector<8x32xf32>
    %242 = vector.broadcast %221 : vector<1x32xf32> to vector<8x32xf32>
    %243 = arith.addf %241, %242 : vector<8x32xf32>
    %c1_111 = arith.constant 1 : index
    %c0_112 = arith.constant 0 : index
    %c0_113 = arith.constant 0 : index
    %244 = vector.load %arg11[%c1_111, %c0_112, %c0_113] : memref<2x32x128xf32, #tpu.memory_space<vmem>>, vector<1x32x128xf32>
    %245 = vector.shape_cast %244 : vector<1x32x128xf32> to vector<32x128xf32>
    %cst_114 = arith.constant dense<0.000000e+00> : vector<8x128xf32>
    %246 = tpu.matmul %243, %245, %cst_114 {dimension_numbers = #tpu.dot_dimension_numbers<[1], [0], [0], [1], [0, 0, 1, 1], [], []>} : vector<8x32xf32>, vector<32x128xf32>, vector<8x128xf32> -> vector<8x128xf32>
    %c1_115 = arith.constant 1 : index
    %c0_116 = arith.constant 0 : index
    %c0_117 = arith.constant 0 : index
    %247 = vector.load %arg12[%c1_115, %c0_116, %c0_117] : memref<2x1x128xf32, #tpu.memory_space<vmem>>, vector<1x1x128xf32>
    %248 = vector.shape_cast %247 : vector<1x1x128xf32> to vector<1x128xf32>
    %249 = vector.broadcast %248 : vector<1x128xf32> to vector<8x128xf32>
    %250 = arith.addf %246, %249 : vector<8x128xf32>
    %cst_118 = arith.constant 5.000000e-01 : f32
    %251 = vector.broadcast %cst_118 : f32 to vector<8x128xf32>
    %252 = arith.mulf %251, %250 : vector<8x128xf32>
    %cst_119 = arith.constant 4.471500e-02 : f32
    %253 = vector.broadcast %cst_119 : f32 to vector<8x128xf32>
    %254 = arith.mulf %253, %250 : vector<8x128xf32>
    %255 = arith.mulf %254, %250 : vector<8x128xf32>
    %256 = arith.mulf %255, %250 : vector<8x128xf32>
    %257 = arith.addf %250, %256 : vector<8x128xf32>
    %cst_120 = arith.constant 0.797884583 : f32
    %258 = vector.broadcast %cst_120 : f32 to vector<8x128xf32>
    %259 = arith.mulf %258, %257 : vector<8x128xf32>
    %260 = math.tanh %259 : vector<8x128xf32>
    %cst_121 = arith.constant 1.000000e+00 : f32
    %261 = vector.broadcast %cst_121 : f32 to vector<8x128xf32>
    %262 = arith.addf %261, %260 : vector<8x128xf32>
    %263 = arith.mulf %252, %262 : vector<8x128xf32>
    %c1_122 = arith.constant 1 : index
    %c0_123 = arith.constant 0 : index
    %c0_124 = arith.constant 0 : index
    %264 = vector.load %arg13[%c1_122, %c0_123, %c0_124] : memref<2x128x32xf32, #tpu.memory_space<vmem>>, vector<1x128x32xf32>
    %265 = vector.shape_cast %264 : vector<1x128x32xf32> to vector<128x32xf32>
    %cst_125 = arith.constant dense<0.000000e+00> : vector<8x32xf32>
    %266 = tpu.matmul %263, %265, %cst_125 {dimension_numbers = #tpu.dot_dimension_numbers<[1], [0], [0], [1], [0, 0, 1, 1], [], []>} : vector<8x128xf32>, vector<128x32xf32>, vector<8x32xf32> -> vector<8x32xf32>
    %c1_126 = arith.constant 1 : index
    %c0_127 = arith.constant 0 : index
    %c0_128 = arith.constant 0 : index
    %267 = vector.load %arg14[%c1_126, %c0_127, %c0_128] : memref<2x1x32xf32, #tpu.memory_space<vmem>>, vector<1x1x32xf32>
    %268 = vector.shape_cast %267 : vector<1x1x32xf32> to vector<1x32xf32>
    %269 = vector.broadcast %268 : vector<1x32xf32> to vector<8x32xf32>
    %270 = arith.addf %266, %269 : vector<8x32xf32>
    %271 = arith.addf %270, %243 : vector<8x32xf32>
    %c1_129 = arith.constant 1 : index
    %c0_130 = arith.constant 0 : index
    %c0_131 = arith.constant 0 : index
    %272 = vector.load %arg15[%c1_129, %c0_130, %c0_131] : memref<2x1x32xf32, #tpu.memory_space<vmem>>, vector<1x1x32xf32>
    %273 = vector.shape_cast %272 : vector<1x1x32xf32> to vector<1x32xf32>
    %c1_132 = arith.constant 1 : index
    %c0_133 = arith.constant 0 : index
    %c0_134 = arith.constant 0 : index
    %274 = vector.load %arg16[%c1_132, %c0_133, %c0_134] : memref<2x1x32xf32, #tpu.memory_space<vmem>>, vector<1x1x32xf32>
    %275 = vector.shape_cast %274 : vector<1x1x32xf32> to vector<1x32xf32>
    %cst_135 = arith.constant dense<0.000000e+00> : vector<8xf32>
    %276 = vector.multi_reduction <add>, %271, %cst_135 [1] : vector<8x32xf32> to vector<8xf32>
    %277 = vector.shape_cast %276 : vector<8xf32> to vector<8x1xf32>
    %cst_136 = arith.constant 3.200000e+01 : f32
    %278 = vector.broadcast %cst_136 : f32 to vector<8x1xf32>
    %279 = arith.divf %277, %278 : vector<8x1xf32>
    %280 = vector.broadcast %279 : vector<8x1xf32> to vector<8x32xf32>
    %281 = arith.subf %271, %280 : vector<8x32xf32>
    %282 = arith.mulf %281, %281 : vector<8x32xf32>
    %cst_137 = arith.constant dense<0.000000e+00> : vector<8xf32>
    %283 = vector.multi_reduction <add>, %282, %cst_137 [1] : vector<8x32xf32> to vector<8xf32>
    %284 = vector.shape_cast %283 : vector<8xf32> to vector<8x1xf32>
    %cst_138 = arith.constant 3.200000e+01 : f32
    %285 = vector.broadcast %cst_138 : f32 to vector<8x1xf32>
    %286 = arith.divf %284, %285 : vector<8x1xf32>
    %287 = vector.broadcast %279 : vector<8x1xf32> to vector<8x32xf32>
    %288 = arith.subf %271, %287 : vector<8x32xf32>
    %cst_139 = arith.constant 9.99999996E-13 : f32
    %289 = vector.broadcast %cst_139 : f32 to vector<8x1xf32>
    %290 = arith.addf %286, %289 : vector<8x1xf32>
    %291 = math.rsqrt %290 : vector<8x1xf32>
    %292 = vector.broadcast %291 : vector<8x1xf32> to vector<8x32xf32>
    %293 = arith.mulf %288, %292 : vector<8x32xf32>
    %294 = vector.broadcast %273 : vector<1x32xf32> to vector<8x32xf32>
    %295 = arith.mulf %293, %294 : vector<8x32xf32>
    %296 = vector.broadcast %275 : vector<1x32xf32> to vector<8x32xf32>
    %297 = arith.addf %295, %296 : vector<8x32xf32>
    %298 = vector.extract_strided_slice %297 {offsets = [0, 0], sizes = [1, 32], strides = [1, 1]} : vector<8x32xf32> to vector<1x32xf32>
    %c0_140 = arith.constant 0 : index
    %c0_141 = arith.constant 0 : index
    %299 = vector.load %arg17[%c0_140, %c0_141] : memref<32x32xf32, #tpu.memory_space<vmem>>, vector<32x32xf32>
    %cst_142 = arith.constant dense<0.000000e+00> : vector<1x32xf32>
    %300 = tpu.matmul %298, %299, %cst_142 {dimension_numbers = #tpu.dot_dimension_numbers<[1], [0], [0], [1], [0, 0, 1, 1], [], []>} : vector<1x32xf32>, vector<32x32xf32>, vector<1x32xf32> -> vector<1x32xf32>
    %c0_143 = arith.constant 0 : index
    %c0_144 = arith.constant 0 : index
    %301 = vector.load %arg18[%c0_143, %c0_144] : memref<1x32xf32, #tpu.memory_space<vmem>>, vector<1x32xf32>
    %302 = arith.addf %300, %301 : vector<1x32xf32>
    %303 = math.tanh %302 : vector<1x32xf32>
    %c0_145 = arith.constant 0 : index
    %c0_146 = arith.constant 0 : index
    %304 = vector.load %arg19[%c0_145, %c0_146] : memref<32x128xf32, #tpu.memory_space<vmem>>, vector<32x128xf32>
    %cst_147 = arith.constant dense<0.000000e+00> : vector<1x128xf32>
    %305 = tpu.matmul %303, %304, %cst_147 {dimension_numbers = #tpu.dot_dimension_numbers<[1], [0], [0], [1], [0, 0, 1, 1], [], []>} : vector<1x32xf32>, vector<32x128xf32>, vector<1x128xf32> -> vector<1x128xf32>
    %c0_148 = arith.constant 0 : index
    %c0_149 = arith.constant 0 : index
    %306 = vector.load %arg20[%c0_148, %c0_149] : memref<1x128xf32, #tpu.memory_space<vmem>>, vector<1x128xf32>
    %307 = arith.addf %305, %306 : vector<1x128xf32>
    %cst_150 = arith.constant 0.000000e+00 : f32
    %308 = vector.broadcast %cst_150 : f32 to vector<1x128xf32>
    %309 = arith.maximumf %307, %308 : vector<1x128xf32>
    %c0_151 = arith.constant 0 : index
    %c0_152 = arith.constant 0 : index
    %310 = vector.load %arg21[%c0_151, %c0_152] : memref<128x128xf32, #tpu.memory_space<vmem>>, vector<128x128xf32>
    %cst_153 = arith.constant dense<0.000000e+00> : vector<1x128xf32>
    %311 = tpu.matmul %309, %310, %cst_153 {dimension_numbers = #tpu.dot_dimension_numbers<[1], [0], [0], [1], [0, 0, 1, 1], [], []>} : vector<1x128xf32>, vector<128x128xf32>, vector<1x128xf32> -> vector<1x128xf32>
    %c0_154 = arith.constant 0 : index
    %c0_155 = arith.constant 0 : index
    %312 = vector.load %arg22[%c0_154, %c0_155] : memref<1x128xf32, #tpu.memory_space<vmem>>, vector<1x128xf32>
    %313 = arith.addf %311, %312 : vector<1x128xf32>
    %cst_156 = arith.constant 0.000000e+00 : f32
    %314 = vector.broadcast %cst_156 : f32 to vector<1x128xf32>
    %315 = arith.maximumf %313, %314 : vector<1x128xf32>
    %c0_157 = arith.constant 0 : index
    %c0_158 = arith.constant 0 : index
    %316 = vector.load %arg23[%c0_157, %c0_158] : memref<128x128xf32, #tpu.memory_space<vmem>>, vector<128x128xf32>
    %cst_159 = arith.constant dense<0.000000e+00> : vector<1x128xf32>
    %317 = tpu.matmul %315, %316, %cst_159 {dimension_numbers = #tpu.dot_dimension_numbers<[1], [0], [0], [1], [0, 0, 1, 1], [], []>} : vector<1x128xf32>, vector<128x128xf32>, vector<1x128xf32> -> vector<1x128xf32>
    %c0_160 = arith.constant 0 : index
    %c0_161 = arith.constant 0 : index
    %318 = vector.load %arg24[%c0_160, %c0_161] : memref<1x128xf32, #tpu.memory_space<vmem>>, vector<1x128xf32>
    %319 = arith.addf %317, %318 : vector<1x128xf32>
    %c0_162 = arith.constant 0 : index
    %c0_163 = arith.constant 0 : index
    %c0_164 = arith.constant 0 : index
    %320 = vector.load %arg25[%c0_162, %c0_163, %c0_164] : memref<1x1x128xf32, #tpu.memory_space<vmem>>, vector<1x1x128xf32>
    %321 = vector.shape_cast %320 : vector<1x1x128xf32> to vector<1x128xf32>
    %322 = vector.shape_cast %319 : vector<1x128xf32> to vector<1x1x128xf32>
    tpu.vector_store %arg25[%c0_162, %c0_163, %c0_164], %322 {strides = array<i32>} : memref<1x1x128xf32, #tpu.memory_space<vmem>>, vector<1x1x128xf32>,
    return
  }
  func.func @transform_0(%arg0: i32) -> (i32, i32, i32) {
    %c0_i32 = arith.constant 0 : i32
    %c0_i32_0 = arith.constant 0 : i32
    %c0_i32_1 = arith.constant 0 : i32
    return %arg0, %c0_i32, %c0_i32_0 : i32, i32, i32
  }
  func.func @transform_1(%arg0: i32) -> (i32, i32, i32) {
    %c0_i32 = arith.constant 0 : i32
    %c0_i32_0 = arith.constant 0 : i32
    %c0_i32_1 = arith.constant 0 : i32
    return %arg0, %c0_i32, %c0_i32_0 : i32, i32, i32
  }
  func.func @transform_2(%arg0: i32) -> (i32, i32) {
    %c0_i32 = arith.constant 0 : i32
    %c0_i32_0 = arith.constant 0 : i32
    %c0_i32_1 = arith.constant 0 : i32
    return %c0_i32, %c0_i32_0 : i32, i32
  }
  func.func @transform_3(%arg0: i32) -> (i32, i32) {
    %c0_i32 = arith.constant 0 : i32
    %c0_i32_0 = arith.constant 0 : i32
    %c0_i32_1 = arith.constant 0 : i32
    return %c0_i32, %c0_i32_0 : i32, i32
  }
  func.func @transform_4(%arg0: i32) -> (i32, i32, i32) {
    %c0_i32 = arith.constant 0 : i32
    %c0_i32_0 = arith.constant 0 : i32
    %c0_i32_1 = arith.constant 0 : i32
    %c0_i32_2 = arith.constant 0 : i32
    return %c0_i32, %c0_i32_0, %c0_i32_1 : i32, i32, i32
  }
  func.func @transform_5(%arg0: i32) -> (i32, i32, i32) {
    %c0_i32 = arith.constant 0 : i32
    %c0_i32_0 = arith.constant 0 : i32
    %c0_i32_1 = arith.constant 0 : i32
    %c0_i32_2 = arith.constant 0 : i32
    return %c0_i32, %c0_i32_0, %c0_i32_1 : i32, i32, i32
  }
  func.func @transform_6(%arg0: i32) -> (i32, i32, i32) {
    %c0_i32 = arith.constant 0 : i32
    %c0_i32_0 = arith.constant 0 : i32
    %c0_i32_1 = arith.constant 0 : i32
    %c0_i32_2 = arith.constant 0 : i32
    return %c0_i32, %c0_i32_0, %c0_i32_1 : i32, i32, i32
  }
  func.func @transform_7(%arg0: i32) -> (i32, i32, i32) {
    %c0_i32 = arith.constant 0 : i32
    %c0_i32_0 = arith.constant 0 : i32
    %c0_i32_1 = arith.constant 0 : i32
    %c0_i32_2 = arith.constant 0 : i32
    return %c0_i32, %c0_i32_0, %c0_i32_1 : i32, i32, i32
  }
  func.func @transform_8(%arg0: i32) -> (i32, i32, i32) {
    %c0_i32 = arith.constant 0 : i32
    %c0_i32_0 = arith.constant 0 : i32
    %c0_i32_1 = arith.constant 0 : i32
    %c0_i32_2 = arith.constant 0 : i32
    return %c0_i32, %c0_i32_0, %c0_i32_1 : i32, i32, i32
  }
  func.func @transform_9(%arg0: i32) -> (i32, i32, i32) {
    %c0_i32 = arith.constant 0 : i32
    %c0_i32_0 = arith.constant 0 : i32
    %c0_i32_1 = arith.constant 0 : i32
    %c0_i32_2 = arith.constant 0 : i32
    return %c0_i32, %c0_i32_0, %c0_i32_1 : i32, i32, i32
  }
  func.func @transform_10(%arg0: i32) -> (i32, i32, i32) {
    %c0_i32 = arith.constant 0 : i32
    %c0_i32_0 = arith.constant 0 : i32
    %c0_i32_1 = arith.constant 0 : i32
    %c0_i32_2 = arith.constant 0 : i32
    return %c0_i32, %c0_i32_0, %c0_i32_1 : i32, i32, i32
  }
  func.func @transform_11(%arg0: i32) -> (i32, i32, i32) {
    %c0_i32 = arith.constant 0 : i32
    %c0_i32_0 = arith.constant 0 : i32
    %c0_i32_1 = arith.constant 0 : i32
    %c0_i32_2 = arith.constant 0 : i32
    return %c0_i32, %c0_i32_0, %c0_i32_1 : i32, i32, i32
  }
  func.func @transform_12(%arg0: i32) -> (i32, i32, i32) {
    %c0_i32 = arith.constant 0 : i32
    %c0_i32_0 = arith.constant 0 : i32
    %c0_i32_1 = arith.constant 0 : i32
    %c0_i32_2 = arith.constant 0 : i32
    return %c0_i32, %c0_i32_0, %c0_i32_1 : i32, i32, i32
  }
  func.func @transform_13(%arg0: i32) -> (i32, i32, i32) {
    %c0_i32 = arith.constant 0 : i32
    %c0_i32_0 = arith.constant 0 : i32
    %c0_i32_1 = arith.constant 0 : i32
    %c0_i32_2 = arith.constant 0 : i32
    return %c0_i32, %c0_i32_0, %c0_i32_1 : i32, i32, i32
  }
  func.func @transform_14(%arg0: i32) -> (i32, i32, i32) {
    %c0_i32 = arith.constant 0 : i32
    %c0_i32_0 = arith.constant 0 : i32
    %c0_i32_1 = arith.constant 0 : i32
    %c0_i32_2 = arith.constant 0 : i32
    return %c0_i32, %c0_i32_0, %c0_i32_1 : i32, i32, i32
  }
  func.func @transform_15(%arg0: i32) -> (i32, i32, i32) {
    %c0_i32 = arith.constant 0 : i32
    %c0_i32_0 = arith.constant 0 : i32
    %c0_i32_1 = arith.constant 0 : i32
    %c0_i32_2 = arith.constant 0 : i32
    return %c0_i32, %c0_i32_0, %c0_i32_1 : i32, i32, i32
  }
  func.func @transform_16(%arg0: i32) -> (i32, i32) {
    %c0_i32 = arith.constant 0 : i32
    %c0_i32_0 = arith.constant 0 : i32
    %c0_i32_1 = arith.constant 0 : i32
    return %c0_i32, %c0_i32_0 : i32, i32
  }
  func.func @transform_17(%arg0: i32) -> (i32, i32) {
    %c0_i32 = arith.constant 0 : i32
    %c0_i32_0 = arith.constant 0 : i32
    %c0_i32_1 = arith.constant 0 : i32
    return %c0_i32, %c0_i32_0 : i32, i32
  }
  func.func @transform_18(%arg0: i32) -> (i32, i32) {
    %c0_i32 = arith.constant 0 : i32
    %c0_i32_0 = arith.constant 0 : i32
    %c0_i32_1 = arith.constant 0 : i32
    return %c0_i32, %c0_i32_0 : i32, i32
  }
  func.func @transform_19(%arg0: i32) -> (i32, i32) {
    %c0_i32 = arith.constant 0 : i32
    %c0_i32_0 = arith.constant 0 : i32
    %c0_i32_1 = arith.constant 0 : i32
    return %c0_i32, %c0_i32_0 : i32, i32
  }
  func.func @transform_20(%arg0: i32) -> (i32, i32) {
    %c0_i32 = arith.constant 0 : i32
    %c0_i32_0 = arith.constant 0 : i32
    %c0_i32_1 = arith.constant 0 : i32
    return %c0_i32, %c0_i32_0 : i32, i32
  }
  func.func @transform_21(%arg0: i32) -> (i32, i32) {
    %c0_i32 = arith.constant 0 : i32
    %c0_i32_0 = arith.constant 0 : i32
    %c0_i32_1 = arith.constant 0 : i32
    return %c0_i32, %c0_i32_0 : i32, i32
  }
  func.func @transform_22(%arg0: i32) -> (i32, i32) {
    %c0_i32 = arith.constant 0 : i32
    %c0_i32_0 = arith.constant 0 : i32
    %c0_i32_1 = arith.constant 0 : i32
    return %c0_i32, %c0_i32_0 : i32, i32
  }
  func.func @transform_23(%arg0: i32) -> (i32, i32) {
    %c0_i32 = arith.constant 0 : i32
    %c0_i32_0 = arith.constant 0 : i32
    %c0_i32_1 = arith.constant 0 : i32
    return %c0_i32, %c0_i32_0 : i32, i32
  }
  func.func @transform_24(%arg0: i32) -> (i32, i32, i32) {
    %c0_i32 = arith.constant 0 : i32
    %c0_i32_0 = arith.constant 0 : i32
    %c0_i32_1 = arith.constant 0 : i32
    return %arg0, %c0_i32, %c0_i32_0 : i32, i32, i32
  }
}

</mosaic_0001>

<llo_original>
// kernel: bert_multitask_forward.1
$region0: #{bert_multitask_forward.1}
  #allocation0 [shape = 'u32[]', space=smem, size = 0x4, offset = 0x4, fixed_abs, tag = 'smem constant byte address 0x4 - core index']
  #allocation1 [shape = 'u32[144,128]{1,0:T(1,128)}', space=vmem, size = 0x12000, scoped, tag = 'internal scratch']
  %s0 = inlined_call_operand.vmem [shape: f32[2,8,32], index: 0, kind: input, shape index: {}]
  %s1 = inlined_call_operand.vmem [shape: f32[2,1,8], index: 1, kind: input, shape index: {}]
  %s2 = inlined_call_operand.vmem [shape: f32[1,32], index: 2, kind: input, shape index: {}]
  %s3 = inlined_call_operand.vmem [shape: f32[1,32], index: 3, kind: input, shape index: {}]
  %s4 = inlined_call_operand.vmem [shape: f32[2,32,128], index: 4, kind: input, shape index: {}]
  %s5 = inlined_call_operand.vmem [shape: f32[2,1,128], index: 5, kind: input, shape index: {}]
  %s6 = inlined_call_operand.vmem [shape: f32[2,32,32], index: 6, kind: input, shape index: {}]
  %s7 = inlined_call_operand.vmem [shape: f32[2,1,32], index: 7, kind: input, shape index: {}]
  %s8 = inlined_call_operand.vmem [shape: f32[2,1,32], index: 8, kind: input, shape index: {}]
  %s9 = inlined_call_operand.vmem [shape: f32[2,1,32], index: 9, kind: input, shape index: {}]
  %s10 = inlined_call_operand.vmem [shape: f32[2,32,128], index: 10, kind: input, shape index: {}]
  %s11 = inlined_call_operand.vmem [shape: f32[2,1,128], index: 11, kind: input, shape index: {}]
  %s12 = inlined_call_operand.vmem [shape: f32[2,128,32], index: 12, kind: input, shape index: {}]
  %s13 = inlined_call_operand.vmem [shape: f32[2,1,32], index: 13, kind: input, shape index: {}]
  %s14 = inlined_call_operand.vmem [shape: f32[2,1,32], index: 14, kind: input, shape index: {}]
  %s15 = inlined_call_operand.vmem [shape: f32[2,1,32], index: 15, kind: input, shape index: {}]
  %s16 = inlined_call_operand.vmem [shape: f32[32,32], index: 16, kind: input, shape index: {}]
  %s17 = inlined_call_operand.vmem [shape: f32[1,32], index: 17, kind: input, shape index: {}]
  %s18 = inlined_call_operand.vmem [shape: f32[32,128], index: 18, kind: input, shape index: {}]
  %s19 = inlined_call_operand.vmem [shape: f32[1,128], index: 19, kind: input, shape index: {}]
  %s20 = inlined_call_operand.vmem [shape: f32[128,128], index: 20, kind: input, shape index: {}]
  %s21 = inlined_call_operand.vmem [shape: f32[1,128], index: 21, kind: input, shape index: {}]
  %s22 = inlined_call_operand.vmem [shape: f32[128,128], index: 22, kind: input, shape index: {}]
  %s23 = inlined_call_operand.vmem [shape: f32[1,128], index: 23, kind: input, shape index: {}]
  %s24 = inlined_call_operand.vmem [shape: f32[2,1,128], index: 24, kind: output, shape index: {}]
  %s25 = sld [smem:[#allocation0]]
  $region129: #{bert_multitask_forward.1} parent=0
    _
  %s27 = ssub.s32 1, %s25
  %s28 = scalar_select 0, %s27, %s25
  loop: start=0, step=1, limit=4
  $region2: #{bert_multitask_forward.1} parent=0 // loop_pre_header
    _
  $region3: #{bert_multitask_forward.1} parent=0 // loop_header
    %s30 = sphi 0, %s34
    %p31 = scmp.ge.s32.totalorder %s30, 4
    %s40 = sphi 0, %s42
    %s43 = sphi 0, %s40
    %s44 = sphi 0, %s43
    %s60 = sphi 0, %s44
    %s66 = sphi 0, %s68
    %s69 = sphi 0, %s66
    %s70 = sphi 0, %s69
    %s86 = sphi 0, %s70
    %s90 = sphi 0, %s90
    %s92 = sphi 0, %s90
    %s93 = sphi 0, %s92
    %s107 = sphi 0, %s93
    %s111 = sphi 0, %s111
    %s113 = sphi 0, %s111
    %s114 = sphi 0, %s113
    %s128 = sphi 0, %s114
    %s132 = sphi 0, %s132
    %s134 = sphi 0, %s132
    %s135 = sphi 0, %s134
    %s149 = sphi 0, %s135
    %s153 = sphi 0, %s153
    %s155 = sphi 0, %s153
    %s156 = sphi 0, %s155
    %s170 = sphi 0, %s156
    %s174 = sphi 0, %s174
    %s176 = sphi 0, %s174
    %s177 = sphi 0, %s176
    %s191 = sphi 0, %s177
    %s195 = sphi 0, %s195
    %s197 = sphi 0, %s195
    %s198 = sphi 0, %s197
    %s212 = sphi 0, %s198
    %s216 = sphi 0, %s216
    %s218 = sphi 0, %s216
    %s219 = sphi 0, %s218
    %s233 = sphi 0, %s219
    %s237 = sphi 0, %s237
    %s239 = sphi 0, %s237
    %s240 = sphi 0, %s239
    %s254 = sphi 0, %s240
    %s258 = sphi 0, %s258
    %s260 = sphi 0, %s258
    %s261 = sphi 0, %s260
    %s275 = sphi 0, %s261
    %s279 = sphi 0, %s279
    %s281 = sphi 0, %s279
    %s282 = sphi 0, %s281
    %s296 = sphi 0, %s282
    %s300 = sphi 0, %s300
    %s302 = sphi 0, %s300
    %s303 = sphi 0, %s302
    %s317 = sphi 0, %s303
    %s321 = sphi 0, %s321
    %s323 = sphi 0, %s321
    %s324 = sphi 0, %s323
    %s338 = sphi 0, %s324
    %s342 = sphi 0, %s342
    %s344 = sphi 0, %s342
    %s345 = sphi 0, %s344
    %s359 = sphi 0, %s345
    %s363 = sphi 0, %s363
    %s365 = sphi 0, %s363
    %s366 = sphi 0, %s365
    %s380 = sphi 0, %s366
    %s384 = sphi 0, %s384
    %s386 = sphi 0, %s384
    %s387 = sphi 0, %s386
    %s401 = sphi 0, %s387
    %s405 = sphi 0, %s405
    %s407 = sphi 0, %s405
    %s408 = sphi 0, %s407
    %s422 = sphi 0, %s408
    %s426 = sphi 0, %s426
    %s428 = sphi 0, %s426
    %s429 = sphi 0, %s428
    %s443 = sphi 0, %s429
    %s447 = sphi 0, %s447
    %s449 = sphi 0, %s447
    %s450 = sphi 0, %s449
    %s464 = sphi 0, %s450
    %s468 = sphi 0, %s468
    %s470 = sphi 0, %s468
    %s471 = sphi 0, %s470
    %s485 = sphi 0, %s471
    %s489 = sphi 0, %s489
    %s491 = sphi 0, %s489
    %s492 = sphi 0, %s491
    %s506 = sphi 0, %s492
    %s510 = sphi 0, %s510
    %s512 = sphi 0, %s510
    %s513 = sphi 0, %s512
    %s527 = sphi 0, %s513
    %s531 = sphi 0, %s531
    %s533 = sphi 0, %s531
    %s534 = sphi 0, %s533
    %s548 = sphi 0, %s534
    %s554 = sphi 0, %s556
    %s557 = sphi 0, %s554
    %s558 = sphi 0, %s557
    %s574 = sphi 0, %s558
  $region4: #{bert_multitask_forward.1} parent=0 // loop_header_branch
    %33 = sbr.rel (%p31) target = $region8
  $region5: #{bert_multitask_forward.1} parent=0 // loop_body
    %s35 = ssub.s32 %s30, 1
    %s36 = ssub.s32 %s30, 2
    %s37 = sadd.s32 %s30, 1
    %s38 = ssub.s32 %s30, %s37
    %p39 = scmp.eq.s32.totalorder %s38, 0
    %s41 = sadd.s32 %s40, 1
    %s42 = scalar_select %p39, %s40, %s41
    %p45 = pneg %p39
    %p46 = scmp.eq.s32.totalorder %s30, 1
    %p47 = por %p45, %p46
    %p48 = scmp.ne.s32.totalorder %s40, %s43
    %p49 = scmp.eq.s32.totalorder %s30, 0
    %p50 = por %p48, %p49
    %p51 = scmp.ne.s32.totalorder %s40, %s43
    %p52 = scmp.eq.s32.totalorder %s35, 1
    %p53 = por %p51, %p52
    %p54 = scmp.ne.s32.totalorder %s43, %s44
    %p55 = scmp.eq.s32.totalorder %s35, 0
    %p56 = por %p54, %p55
    %p57 = scmp.ne.s32.totalorder %s43, %s44
    %p58 = scmp.eq.s32.totalorder %s36, 1
    %p59 = por %p57, %p58
    %p61 = scmp.ne.s32.totalorder %s44, %s60
    %p62 = scmp.eq.s32.totalorder %s36, 0
    %p63 = por %p61, %p62
    %s64 = ssub.s32 %s30, %s37
    %p65 = scmp.eq.s32.totalorder %s64, 0
    %s67 = sadd.s32 %s66, 1
    %s68 = scalar_select %p65, %s66, %s67
    %p71 = pneg %p65
    %p72 = scmp.eq.s32.totalorder %s30, 1
    %p73 = por %p71, %p72
    %p74 = scmp.ne.s32.totalorder %s66, %s69
    %p75 = scmp.eq.s32.totalorder %s30, 0
    %p76 = por %p74, %p75
    %p77 = scmp.ne.s32.totalorder %s66, %s69
    %p78 = scmp.eq.s32.totalorder %s35, 1
    %p79 = por %p77, %p78
    %p80 = scmp.ne.s32.totalorder %s69, %s70
    %p81 = scmp.eq.s32.totalorder %s35, 0
    %p82 = por %p80, %p81
    %p83 = scmp.ne.s32.totalorder %s69, %s70
    %p84 = scmp.eq.s32.totalorder %s36, 1
    %p85 = por %p83, %p84
    %p87 = scmp.ne.s32.totalorder %s70, %s86
    %p88 = scmp.eq.s32.totalorder %s36, 0
    %p89 = por %p87, %p88
    %s91 = sadd.s32 %s90, 1
    %p94 = scmp.eq.s32.totalorder %s30, 1
    %p95 = scmp.ne.s32.totalorder %s90, %s92
    %p96 = scmp.eq.s32.totalorder %s30, 0
    %p97 = por %p95, %p96
    %p98 = scmp.ne.s32.totalorder %s90, %s92
    %p99 = scmp.eq.s32.totalorder %s35, 1
    %p100 = por %p98, %p99
    %p101 = scmp.ne.s32.totalorder %s92, %s93
    %p102 = scmp.eq.s32.totalorder %s35, 0
    %p103 = por %p101, %p102
    %p104 = scmp.ne.s32.totalorder %s92, %s93
    %p105 = scmp.eq.s32.totalorder %s36, 1
    %p106 = por %p104, %p105
    %p108 = scmp.ne.s32.totalorder %s93, %s107
    %p109 = scmp.eq.s32.totalorder %s36, 0
    %p110 = por %p108, %p109
    %s112 = sadd.s32 %s111, 1
    %p115 = scmp.eq.s32.totalorder %s30, 1
    %p116 = scmp.ne.s32.totalorder %s111, %s113
    %p117 = scmp.eq.s32.totalorder %s30, 0
    %p118 = por %p116, %p117
    %p119 = scmp.ne.s32.totalorder %s111, %s113
    %p120 = scmp.eq.s32.totalorder %s35, 1
    %p121 = por %p119, %p120
    %p122 = scmp.ne.s32.totalorder %s113, %s114
    %p123 = scmp.eq.s32.totalorder %s35, 0
    %p124 = por %p122, %p123
    %p125 = scmp.ne.s32.totalorder %s113, %s114
    %p126 = scmp.eq.s32.totalorder %s36, 1
    %p127 = por %p125, %p126
    %p129 = scmp.ne.s32.totalorder %s114, %s128
    %p130 = scmp.eq.s32.totalorder %s36, 0
    %p131 = por %p129, %p130
    %s133 = sadd.s32 %s132, 1
    %p136 = scmp.eq.s32.totalorder %s30, 1
    %p137 = scmp.ne.s32.totalorder %s132, %s134
    %p138 = scmp.eq.s32.totalorder %s30, 0
    %p139 = por %p137, %p138
    %p140 = scmp.ne.s32.totalorder %s132, %s134
    %p141 = scmp.eq.s32.totalorder %s35, 1
    %p142 = por %p140, %p141
    %p143 = scmp.ne.s32.totalorder %s134, %s135
    %p144 = scmp.eq.s32.totalorder %s35, 0
    %p145 = por %p143, %p144
    %p146 = scmp.ne.s32.totalorder %s134, %s135
    %p147 = scmp.eq.s32.totalorder %s36, 1
    %p148 = por %p146, %p147
    %p150 = scmp.ne.s32.totalorder %s135, %s149
    %p151 = scmp.eq.s32.totalorder %s36, 0
    %p152 = por %p150, %p151
    %s154 = sadd.s32 %s153, 1
    %p157 = scmp.eq.s32.totalorder %s30, 1
    %p158 = scmp.ne.s32.totalorder %s153, %s155
    %p159 = scmp.eq.s32.totalorder %s30, 0
    %p160 = por %p158, %p159
    %p161 = scmp.ne.s32.totalorder %s153, %s155
    %p162 = scmp.eq.s32.totalorder %s35, 1
    %p163 = por %p161, %p162
    %p164 = scmp.ne.s32.totalorder %s155, %s156
    %p165 = scmp.eq.s32.totalorder %s35, 0
    %p166 = por %p164, %p165
    %p167 = scmp.ne.s32.totalorder %s155, %s156
    %p168 = scmp.eq.s32.totalorder %s36, 1
    %p169 = por %p167, %p168
    %p171 = scmp.ne.s32.totalorder %s156, %s170
    %p172 = scmp.eq.s32.totalorder %s36, 0
    %p173 = por %p171, %p172
    %s175 = sadd.s32 %s174, 1
    %p178 = scmp.eq.s32.totalorder %s30, 1
    %p179 = scmp.ne.s32.totalorder %s174, %s176
    %p180 = scmp.eq.s32.totalorder %s30, 0
    %p181 = por %p179, %p180
    %p182 = scmp.ne.s32.totalorder %s174, %s176
    %p183 = scmp.eq.s32.totalorder %s35, 1
    %p184 = por %p182, %p183
    %p185 = scmp.ne.s32.totalorder %s176, %s177
    %p186 = scmp.eq.s32.totalorder %s35, 0
    %p187 = por %p185, %p186
    %p188 = scmp.ne.s32.totalorder %s176, %s177
    %p189 = scmp.eq.s32.totalorder %s36, 1
    %p190 = por %p188, %p189
    %p192 = scmp.ne.s32.totalorder %s177, %s191
    %p193 = scmp.eq.s32.totalorder %s36, 0
    %p194 = por %p192, %p193
    %s196 = sadd.s32 %s195, 1
    %p199 = scmp.eq.s32.totalorder %s30, 1
    %p200 = scmp.ne.s32.totalorder %s195, %s197
    %p201 = scmp.eq.s32.totalorder %s30, 0
    %p202 = por %p200, %p201
    %p203 = scmp.ne.s32.totalorder %s195, %s197
    %p204 = scmp.eq.s32.totalorder %s35, 1
    %p205 = por %p203, %p204
    %p206 = scmp.ne.s32.totalorder %s197, %s198
    %p207 = scmp.eq.s32.totalorder %s35, 0
    %p208 = por %p206, %p207
    %p209 = scmp.ne.s32.totalorder %s197, %s198
    %p210 = scmp.eq.s32.totalorder %s36, 1
    %p211 = por %p209, %p210
    %p213 = scmp.ne.s32.totalorder %s198, %s212
    %p214 = scmp.eq.s32.totalorder %s36, 0
    %p215 = por %p213, %p214
    %s217 = sadd.s32 %s216, 1
    %p220 = scmp.eq.s32.totalorder %s30, 1
    %p221 = scmp.ne.s32.totalorder %s216, %s218
    %p222 = scmp.eq.s32.totalorder %s30, 0
    %p223 = por %p221, %p222
    %p224 = scmp.ne.s32.totalorder %s216, %s218
    %p225 = scmp.eq.s32.totalorder %s35, 1
    %p226 = por %p224, %p225
    %p227 = scmp.ne.s32.totalorder %s218, %s219
    %p228 = scmp.eq.s32.totalorder %s35, 0
    %p229 = por %p227, %p228
    %p230 = scmp.ne.s32.totalorder %s218, %s219
    %p231 = scmp.eq.s32.totalorder %s36, 1
    %p232 = por %p230, %p231
    %p234 = scmp.ne.s32.totalorder %s219, %s233
    %p235 = scmp.eq.s32.totalorder %s36, 0
    %p236 = por %p234, %p235
    %s238 = sadd.s32 %s237, 1
    %p241 = scmp.eq.s32.totalorder %s30, 1
    %p242 = scmp.ne.s32.totalorder %s237, %s239
    %p243 = scmp.eq.s32.totalorder %s30, 0
    %p244 = por %p242, %p243
    %p245 = scmp.ne.s32.totalorder %s237, %s239
    %p246 = scmp.eq.s32.totalorder %s35, 1
    %p247 = por %p245, %p246
    %p248 = scmp.ne.s32.totalorder %s239, %s240
    %p249 = scmp.eq.s32.totalorder %s35, 0
    %p250 = por %p248, %p249
    %p251 = scmp.ne.s32.totalorder %s239, %s240
    %p252 = scmp.eq.s32.totalorder %s36, 1
    %p253 = por %p251, %p252
    %p255 = scmp.ne.s32.totalorder %s240, %s254
    %p256 = scmp.eq.s32.totalorder %s36, 0
    %p257 = por %p255, %p256
    %s259 = sadd.s32 %s258, 1
    %p262 = scmp.eq.s32.totalorder %s30, 1
    %p263 = scmp.ne.s32.totalorder %s258, %s260
    %p264 = scmp.eq.s32.totalorder %s30, 0
    %p265 = por %p263, %p264
    %p266 = scmp.ne.s32.totalorder %s258, %s260
    %p267 = scmp.eq.s32.totalorder %s35, 1
    %p268 = por %p266, %p267
    %p269 = scmp.ne.s32.totalorder %s260, %s261
    %p270 = scmp.eq.s32.totalorder %s35, 0
    %p271 = por %p269, %p270
    %p272 = scmp.ne.s32.totalorder %s260, %s261
    %p273 = scmp.eq.s32.totalorder %s36, 1
    %p274 = por %p272, %p273
    %p276 = scmp.ne.s32.totalorder %s261, %s275
    %p277 = scmp.eq.s32.totalorder %s36, 0
    %p278 = por %p276, %p277
    %s280 = sadd.s32 %s279, 1
    %p283 = scmp.eq.s32.totalorder %s30, 1
    %p284 = scmp.ne.s32.totalorder %s279, %s281
    %p285 = scmp.eq.s32.totalorder %s30, 0
    %p286 = por %p284, %p285
    %p287 = scmp.ne.s32.totalorder %s279, %s281
    %p288 = scmp.eq.s32.totalorder %s35, 1
    %p289 = por %p287, %p288
    %p290 = scmp.ne.s32.totalorder %s281, %s282
    %p291 = scmp.eq.s32.totalorder %s35, 0
    %p292 = por %p290, %p291
    %p293 = scmp.ne.s32.totalorder %s281, %s282
    %p294 = scmp.eq.s32.totalorder %s36, 1
    %p295 = por %p293, %p294
    %p297 = scmp.ne.s32.totalorder %s282, %s296
    %p298 = scmp.eq.s32.totalorder %s36, 0
    %p299 = por %p297, %p298
    %s301 = sadd.s32 %s300, 1
    %p304 = scmp.eq.s32.totalorder %s30, 1
    %p305 = scmp.ne.s32.totalorder %s300, %s302
    %p306 = scmp.eq.s32.totalorder %s30, 0
    %p307 = por %p305, %p306
    %p308 = scmp.ne.s32.totalorder %s300, %s302
    %p309 = scmp.eq.s32.totalorder %s35, 1
    %p310 = por %p308, %p309
    %p311 = scmp.ne.s32.totalorder %s302, %s303
    %p312 = scmp.eq.s32.totalorder %s35, 0
    %p313 = por %p311, %p312
    %p314 = scmp.ne.s32.totalorder %s302, %s303
    %p315 = scmp.eq.s32.totalorder %s36, 1
    %p316 = por %p314, %p315
    %p318 = scmp.ne.s32.totalorder %s303, %s317
    %p319 = scmp.eq.s32.totalorder %s36, 0
    %p320 = por %p318, %p319
    %s322 = sadd.s32 %s321, 1
    %p325 = scmp.eq.s32.totalorder %s30, 1
    %p326 = scmp.ne.s32.totalorder %s321, %s323
    %p327 = scmp.eq.s32.totalorder %s30, 0
    %p328 = por %p326, %p327
    %p329 = scmp.ne.s32.totalorder %s321, %s323
    %p330 = scmp.eq.s32.totalorder %s35, 1
    %p331 = por %p329, %p330
    %p332 = scmp.ne.s32.totalorder %s323, %s324
    %p333 = scmp.eq.s32.totalorder %s35, 0
    %p334 = por %p332, %p333
    %p335 = scmp.ne.s32.totalorder %s323, %s324
    %p336 = scmp.eq.s32.totalorder %s36, 1
    %p337 = por %p335, %p336
    %p339 = scmp.ne.s32.totalorder %s324, %s338
    %p340 = scmp.eq.s32.totalorder %s36, 0
    %p341 = por %p339, %p340
    %s343 = sadd.s32 %s342, 1
    %p346 = scmp.eq.s32.totalorder %s30, 1
    %p347 = scmp.ne.s32.totalorder %s342, %s344
    %p348 = scmp.eq.s32.totalorder %s30, 0
    %p349 = por %p347, %p348
    %p350 = scmp.ne.s32.totalorder %s342, %s344
    %p351 = scmp.eq.s32.totalorder %s35, 1
    %p352 = por %p350, %p351
    %p353 = scmp.ne.s32.totalorder %s344, %s345
    %p354 = scmp.eq.s32.totalorder %s35, 0
    %p355 = por %p353, %p354
    %p356 = scmp.ne.s32.totalorder %s344, %s345
    %p357 = scmp.eq.s32.totalorder %s36, 1
    %p358 = por %p356, %p357
    %p360 = scmp.ne.s32.totalorder %s345, %s359
    %p361 = scmp.eq.s32.totalorder %s36, 0
    %p362 = por %p360, %p361
    %s364 = sadd.s32 %s363, 1
    %p367 = scmp.eq.s32.totalorder %s30, 1
    %p368 = scmp.ne.s32.totalorder %s363, %s365
    %p369 = scmp.eq.s32.totalorder %s30, 0
    %p370 = por %p368, %p369
    %p371 = scmp.ne.s32.totalorder %s363, %s365
    %p372 = scmp.eq.s32.totalorder %s35, 1
    %p373 = por %p371, %p372
    %p374 = scmp.ne.s32.totalorder %s365, %s366
    %p375 = scmp.eq.s32.totalorder %s35, 0
    %p376 = por %p374, %p375
    %p377 = scmp.ne.s32.totalorder %s365, %s366
    %p378 = scmp.eq.s32.totalorder %s36, 1
    %p379 = por %p377, %p378
    %p381 = scmp.ne.s32.totalorder %s366, %s380
    %p382 = scmp.eq.s32.totalorder %s36, 0
    %p383 = por %p381, %p382
    %s385 = sadd.s32 %s384, 1
    %p388 = scmp.eq.s32.totalorder %s30, 1
    %p389 = scmp.ne.s32.totalorder %s384, %s386
    %p390 = scmp.eq.s32.totalorder %s30, 0
    %p391 = por %p389, %p390
    %p392 = scmp.ne.s32.totalorder %s384, %s386
    %p393 = scmp.eq.s32.totalorder %s35, 1
    %p394 = por %p392, %p393
    %p395 = scmp.ne.s32.totalorder %s386, %s387
    %p396 = scmp.eq.s32.totalorder %s35, 0
    %p397 = por %p395, %p396
    %p398 = scmp.ne.s32.totalorder %s386, %s387
    %p399 = scmp.eq.s32.totalorder %s36, 1
    %p400 = por %p398, %p399
    %p402 = scmp.ne.s32.totalorder %s387, %s401
    %p403 = scmp.eq.s32.totalorder %s36, 0
    %p404 = por %p402, %p403
    %s406 = sadd.s32 %s405, 1
    %p409 = scmp.eq.s32.totalorder %s30, 1
    %p410 = scmp.ne.s32.totalorder %s405, %s407
    %p411 = scmp.eq.s32.totalorder %s30, 0
    %p412 = por %p410, %p411
    %p413 = scmp.ne.s32.totalorder %s405, %s407
    %p414 = scmp.eq.s32.totalorder %s35, 1
    %p415 = por %p413, %p414
    %p416 = scmp.ne.s32.totalorder %s407, %s408
    %p417 = scmp.eq.s32.totalorder %s35, 0
    %p418 = por %p416, %p417
    %p419 = scmp.ne.s32.totalorder %s407, %s408
    %p420 = scmp.eq.s32.totalorder %s36, 1
    %p421 = por %p419, %p420
    %p423 = scmp.ne.s32.totalorder %s408, %s422
    %p424 = scmp.eq.s32.totalorder %s36, 0
    %p425 = por %p423, %p424
    %s427 = sadd.s32 %s426, 1
    %p430 = scmp.eq.s32.totalorder %s30, 1
    %p431 = scmp.ne.s32.totalorder %s426, %s428
    %p432 = scmp.eq.s32.totalorder %s30, 0
    %p433 = por %p431, %p432
    %p434 = scmp.ne.s32.totalorder %s426, %s428
    %p435 = scmp.eq.s32.totalorder %s35, 1
    %p436 = por %p434, %p435
    %p437 = scmp.ne.s32.totalorder %s428, %s429
    %p438 = scmp.eq.s32.totalorder %s35, 0
    %p439 = por %p437, %p438
    %p440 = scmp.ne.s32.totalorder %s428, %s429
    %p441 = scmp.eq.s32.totalorder %s36, 1
    %p442 = por %p440, %p441
    %p444 = scmp.ne.s32.totalorder %s429, %s443
    %p445 = scmp.eq.s32.totalorder %s36, 0
    %p446 = por %p444, %p445
    %s448 = sadd.s32 %s447, 1
    %p451 = scmp.eq.s32.totalorder %s30, 1
    %p452 = scmp.ne.s32.totalorder %s447, %s449
    %p453 = scmp.eq.s32.totalorder %s30, 0
    %p454 = por %p452, %p453
    %p455 = scmp.ne.s32.totalorder %s447, %s449
    %p456 = scmp.eq.s32.totalorder %s35, 1
    %p457 = por %p455, %p456
    %p458 = scmp.ne.s32.totalorder %s449, %s450
    %p459 = scmp.eq.s32.totalorder %s35, 0
    %p460 = por %p458, %p459
    %p461 = scmp.ne.s32.totalorder %s449, %s450
    %p462 = scmp.eq.s32.totalorder %s36, 1
    %p463 = por %p461, %p462
    %p465 = scmp.ne.s32.totalorder %s450, %s464
    %p466 = scmp.eq.s32.totalorder %s36, 0
    %p467 = por %p465, %p466
    %s469 = sadd.s32 %s468, 1
    %p472 = scmp.eq.s32.totalorder %s30, 1
    %p473 = scmp.ne.s32.totalorder %s468, %s470
    %p474 = scmp.eq.s32.totalorder %s30, 0
    %p475 = por %p473, %p474
    %p476 = scmp.ne.s32.totalorder %s468, %s470
    %p477 = scmp.eq.s32.totalorder %s35, 1
    %p478 = por %p476, %p477
    %p479 = scmp.ne.s32.totalorder %s470, %s471
    %p480 = scmp.eq.s32.totalorder %s35, 0
    %p481 = por %p479, %p480
    %p482 = scmp.ne.s32.totalorder %s470, %s471
    %p483 = scmp.eq.s32.totalorder %s36, 1
    %p484 = por %p482, %p483
    %p486 = scmp.ne.s32.totalorder %s471, %s485
    %p487 = scmp.eq.s32.totalorder %s36, 0
    %p488 = por %p486, %p487
    %s490 = sadd.s32 %s489, 1
    %p493 = scmp.eq.s32.totalorder %s30, 1
    %p494 = scmp.ne.s32.totalorder %s489, %s491
    %p495 = scmp.eq.s32.totalorder %s30, 0
    %p496 = por %p494, %p495
    %p497 = scmp.ne.s32.totalorder %s489, %s491
    %p498 = scmp.eq.s32.totalorder %s35, 1
    %p499 = por %p497, %p498
    %p500 = scmp.ne.s32.totalorder %s491, %s492
    %p501 = scmp.eq.s32.totalorder %s35, 0
    %p502 = por %p500, %p501
    %p503 = scmp.ne.s32.totalorder %s491, %s492
    %p504 = scmp.eq.s32.totalorder %s36, 1
    %p505 = por %p503, %p504
    %p507 = scmp.ne.s32.totalorder %s492, %s506
    %p508 = scmp.eq.s32.totalorder %s36, 0
    %p509 = por %p507, %p508
    %s511 = sadd.s32 %s510, 1
    %p514 = scmp.eq.s32.totalorder %s30, 1
    %p515 = scmp.ne.s32.totalorder %s510, %s512
    %p516 = scmp.eq.s32.totalorder %s30, 0
    %p517 = por %p515, %p516
    %p518 = scmp.ne.s32.totalorder %s510, %s512
    %p519 = scmp.eq.s32.totalorder %s35, 1
    %p520 = por %p518, %p519
    %p521 = scmp.ne.s32.totalorder %s512, %s513
    %p522 = scmp.eq.s32.totalorder %s35, 0
    %p523 = por %p521, %p522
    %p524 = scmp.ne.s32.totalorder %s512, %s513
    %p525 = scmp.eq.s32.totalorder %s36, 1
    %p526 = por %p524, %p525
    %p528 = scmp.ne.s32.totalorder %s513, %s527
    %p529 = scmp.eq.s32.totalorder %s36, 0
    %p530 = por %p528, %p529
    %s532 = sadd.s32 %s531, 1
    %p535 = scmp.eq.s32.totalorder %s30, 1
    %p536 = scmp.ne.s32.totalorder %s531, %s533
    %p537 = scmp.eq.s32.totalorder %s30, 0
    %p538 = por %p536, %p537
    %p539 = scmp.ne.s32.totalorder %s531, %s533
    %p540 = scmp.eq.s32.totalorder %s35, 1
    %p541 = por %p539, %p540
    %p542 = scmp.ne.s32.totalorder %s533, %s534
    %p543 = scmp.eq.s32.totalorder %s35, 0
    %p544 = por %p542, %p543
    %p545 = scmp.ne.s32.totalorder %s533, %s534
    %p546 = scmp.eq.s32.totalorder %s36, 1
    %p547 = por %p545, %p546
    %p549 = scmp.ne.s32.totalorder %s534, %s548
    %p550 = scmp.eq.s32.totalorder %s36, 0
    %p551 = por %p549, %p550
    %s552 = ssub.s32 %s30, %s37
    %p553 = scmp.eq.s32.totalorder %s552, 0
    %s555 = sadd.s32 %s554, 1
    %s556 = scalar_select %p553, %s554, %s555
    %p559 = pneg %p553
    %p560 = scmp.eq.s32.totalorder %s30, 1
    %p561 = por %p559, %p560
    %p562 = scmp.ne.s32.totalorder %s554, %s557
    %p563 = scmp.eq.s32.totalorder %s30, 0
    %p564 = por %p562, %p563
    %p565 = scmp.ne.s32.totalorder %s554, %s557
    %p566 = scmp.eq.s32.totalorder %s35, 1
    %p567 = por %p565, %p566
    %p568 = scmp.ne.s32.totalorder %s557, %s558
    %p569 = scmp.eq.s32.totalorder %s35, 0
    %p570 = por %p568, %p569
    %p571 = scmp.ne.s32.totalorder %s557, %s558
    %p572 = scmp.eq.s32.totalorder %s36, 1
    %p573 = por %p571, %p572
    %p575 = scmp.ne.s32.totalorder %s558, %s574
    %p576 = scmp.eq.s32.totalorder %s36, 0
    %p577 = por %p575, %p576
    %p578 = scmp.le.s32.totalorder 1, %s30
    %p579 = scmp.lt.s32.totalorder %s30, 3
    %p580 = pnand %p578, %p579
    %p581 = pneg %p580
    // Predicated region
    $region9: #{bert_multitask_forward.1} parent=5 // pred_check
      _
    $region10: #{bert_multitask_forward.1} parent=5 // pred_check_branch
      %583 = sbr.rel (%p580) target = $region12
    $region11: #{bert_multitask_forward.1} parent=5 // pred_region
      %s584 = ssub.s32 %s30, 1
      // Predicated region
      $region13: #{bert_multitask_forward.1} parent=11 // pred_check
        %p585 = pneg %p103
      $region14: #{bert_multitask_forward.1} parent=11 // pred_check_branch
        %587 = sbr.rel (%p585) target = $region16
      $region15: #{bert_multitask_forward.1} parent=11 // pred_region
        _
      $region16: #{bert_multitask_forward.1} parent=11 // pred_fallthru
        _
      // Predicated region
      $region17: #{bert_multitask_forward.1} parent=11 // pred_check
        %p588 = pneg %p124
      $region18: #{bert_multitask_forward.1} parent=11 // pred_check_branch
        %590 = sbr.rel (%p588) target = $region20
      $region19: #{bert_multitask_forward.1} parent=11 // pred_region
        _
      $region20: #{bert_multitask_forward.1} parent=11 // pred_fallthru
        _
      // Predicated region
      $region21: #{bert_multitask_forward.1} parent=11 // pred_check
        %p591 = pneg %p145
      $region22: #{bert_multitask_forward.1} parent=11 // pred_check_branch
        %593 = sbr.rel (%p591) target = $region24
      $region23: #{bert_multitask_forward.1} parent=11 // pred_region
        _
      $region24: #{bert_multitask_forward.1} parent=11 // pred_fallthru
        _
      // Predicated region
      $region25: #{bert_multitask_forward.1} parent=11 // pred_check
        %p594 = pneg %p166
      $region26: #{bert_multitask_forward.1} parent=11 // pred_check_branch
        %596 = sbr.rel (%p594) target = $region28
      $region27: #{bert_multitask_forward.1} parent=11 // pred_region
        _
      $region28: #{bert_multitask_forward.1} parent=11 // pred_fallthru
        _
      // Predicated region
      $region29: #{bert_multitask_forward.1} parent=11 // pred_check
        %p597 = pneg %p187
      $region30: #{bert_multitask_forward.1} parent=11 // pred_check_branch
        %599 = sbr.rel (%p597) target = $region32
      $region31: #{bert_multitask_forward.1} parent=11 // pred_region
        _
      $region32: #{bert_multitask_forward.1} parent=11 // pred_fallthru
        _
      // Predicated region
      $region33: #{bert_multitask_forward.1} parent=11 // pred_check
        %p600 = pneg %p208
      $region34: #{bert_multitask_forward.1} parent=11 // pred_check_branch
        %602 = sbr.rel (%p600) target = $region36
      $region35: #{bert_multitask_forward.1} parent=11 // pred_region
        _
      $region36: #{bert_multitask_forward.1} parent=11 // pred_fallthru
        _
      // Predicated region
      $region37: #{bert_multitask_forward.1} parent=11 // pred_check
        %p603 = pneg %p229
      $region38: #{bert_multitask_forward.1} parent=11 // pred_check_branch
        %605 = sbr.rel (%p603) target = $region40
      $region39: #{bert_multitask_forward.1} parent=11 // pred_region
        _
      $region40: #{bert_multitask_forward.1} parent=11 // pred_fallthru
        _
      // Predicated region
      $region41: #{bert_multitask_forward.1} parent=11 // pred_check
        %p606 = pneg %p250
      $region42: #{bert_multitask_forward.1} parent=11 // pred_check_branch
        %608 = sbr.rel (%p606) target = $region44
      $region43: #{bert_multitask_forward.1} parent=11 // pred_region
        _
      $region44: #{bert_multitask_forward.1} parent=11 // pred_fallthru
        _
      // Predicated region
      $region45: #{bert_multitask_forward.1} parent=11 // pred_check
        %p609 = pneg %p271
      $region46: #{bert_multitask_forward.1} parent=11 // pred_check_branch
        %611 = sbr.rel (%p609) target = $region48
      $region47: #{bert_multitask_forward.1} parent=11 // pred_region
        _
      $region48: #{bert_multitask_forward.1} parent=11 // pred_fallthru
        _
      // Predicated region
      $region49: #{bert_multitask_forward.1} parent=11 // pred_check
        %p612 = pneg %p292
      $region50: #{bert_multitask_forward.1} parent=11 // pred_check_branch
        %614 = sbr.rel (%p612) target = $region52
      $region51: #{bert_multitask_forward.1} parent=11 // pred_region
        _
      $region52: #{bert_multitask_forward.1} parent=11 // pred_fallthru
        _
      // Predicated region
      $region53: #{bert_multitask_forward.1} parent=11 // pred_check
        %p615 = pneg %p313
      $region54: #{bert_multitask_forward.1} parent=11 // pred_check_branch
        %617 = sbr.rel (%p615) target = $region56
      $region55: #{bert_multitask_forward.1} parent=11 // pred_region
        _
      $region56: #{bert_multitask_forward.1} parent=11 // pred_fallthru
        _
      // Predicated region
      $region57: #{bert_multitask_forward.1} parent=11 // pred_check
        %p618 = pneg %p334
      $region58: #{bert_multitask_forward.1} parent=11 // pred_check_branch
        %620 = sbr.rel (%p618) target = $region60
      $region59: #{bert_multitask_forward.1} parent=11 // pred_region
        _
      $region60: #{bert_multitask_forward.1} parent=11 // pred_fallthru
        _
      // Predicated region
      $region61: #{bert_multitask_forward.1} parent=11 // pred_check
        %p621 = pneg %p355
      $region62: #{bert_multitask_forward.1} parent=11 // pred_check_branch
        %623 = sbr.rel (%p621) target = $region64
      $region63: #{bert_multitask_forward.1} parent=11 // pred_region
        _
      $region64: #{bert_multitask_forward.1} parent=11 // pred_fallthru
        _
      // Predicated region
      $region65: #{bert_multitask_forward.1} parent=11 // pred_check
        %p624 = pneg %p376
      $region66: #{bert_multitask_forward.1} parent=11 // pred_check_branch
        %626 = sbr.rel (%p624) target = $region68
      $region67: #{bert_multitask_forward.1} parent=11 // pred_region
        _
      $region68: #{bert_multitask_forward.1} parent=11 // pred_fallthru
        _
      // Predicated region
      $region69: #{bert_multitask_forward.1} parent=11 // pred_check
        %p627 = pneg %p397
      $region70: #{bert_multitask_forward.1} parent=11 // pred_check_branch
        %629 = sbr.rel (%p627) target = $region72
      $region71: #{bert_multitask_forward.1} parent=11 // pred_region
        _
      $region72: #{bert_multitask_forward.1} parent=11 // pred_fallthru
        _
      // Predicated region
      $region73: #{bert_multitask_forward.1} parent=11 // pred_check
        %p630 = pneg %p418
      $region74: #{bert_multitask_forward.1} parent=11 // pred_check_branch
        %632 = sbr.rel (%p630) target = $region76
      $region75: #{bert_multitask_forward.1} parent=11 // pred_region
        _
      $region76: #{bert_multitask_forward.1} parent=11 // pred_fallthru
        _
      // Predicated region
      $region77: #{bert_multitask_forward.1} parent=11 // pred_check
        %p633 = pneg %p439
      $region78: #{bert_multitask_forward.1} parent=11 // pred_check_branch
        %635 = sbr.rel (%p633) target = $region80
      $region79: #{bert_multitask_forward.1} parent=11 // pred_region
        _
      $region80: #{bert_multitask_forward.1} parent=11 // pred_fallthru
        _
      // Predicated region
      $region81: #{bert_multitask_forward.1} parent=11 // pred_check
        %p636 = pneg %p460
      $region82: #{bert_multitask_forward.1} parent=11 // pred_check_branch
        %638 = sbr.rel (%p636) target = $region84
      $region83: #{bert_multitask_forward.1} parent=11 // pred_region
        _
      $region84: #{bert_multitask_forward.1} parent=11 // pred_fallthru
        _
      // Predicated region
      $region85: #{bert_multitask_forward.1} parent=11 // pred_check
        %p639 = pneg %p481
      $region86: #{bert_multitask_forward.1} parent=11 // pred_check_branch
        %641 = sbr.rel (%p639) target = $region88
      $region87: #{bert_multitask_forward.1} parent=11 // pred_region
        _
      $region88: #{bert_multitask_forward.1} parent=11 // pred_fallthru
        _
      // Predicated region
      $region89: #{bert_multitask_forward.1} parent=11 // pred_check
        %p642 = pneg %p502
      $region90: #{bert_multitask_forward.1} parent=11 // pred_check_branch
        %644 = sbr.rel (%p642) target = $region92
      $region91: #{bert_multitask_forward.1} parent=11 // pred_region
        _
      $region92: #{bert_multitask_forward.1} parent=11 // pred_fallthru
        _
      // Predicated region
      $region93: #{bert_multitask_forward.1} parent=11 // pred_check
        %p645 = pneg %p523
      $region94: #{bert_multitask_forward.1} parent=11 // pred_check_branch
        %647 = sbr.rel (%p645) target = $region96
      $region95: #{bert_multitask_forward.1} parent=11 // pred_region
        _
      $region96: #{bert_multitask_forward.1} parent=11 // pred_fallthru
        _
      // Predicated region
      $region97: #{bert_multitask_forward.1} parent=11 // pred_check
        %p648 = pneg %p544
      $region98: #{bert_multitask_forward.1} parent=11 // pred_check_branch
        %650 = sbr.rel (%p648) target = $region100
      $region99: #{bert_multitask_forward.1} parent=11 // pred_region
        _
      $region100: #{bert_multitask_forward.1} parent=11 // pred_fallthru
        _
    $region12: #{bert_multitask_forward.1} parent=5 // pred_fallthru
      _
    %p651 = scmp.lt.s32.totalorder %s30, 2
    // Predicated region
    $region101: #{bert_multitask_forward.1} parent=5 // pred_check
      %p652 = pneg %p651
    $region102: #{bert_multitask_forward.1} parent=5 // pred_check_branch
      %654 = sbr.rel (%p652) target = $region104
    $region103: #{bert_multitask_forward.1} parent=5 // pred_region
      // Predicated region
      $region105: #{bert_multitask_forward.1} parent=103 // pred_check
        %p655 = pneg %p50
      $region106: #{bert_multitask_forward.1} parent=103 // pred_check_branch
        %657 = sbr.rel (%p655) target = $region108
      $region107: #{bert_multitask_forward.1} parent=103 // pred_region
        %p658 = scmp.lt.s32.totalorder %s30, 1
        %s659 = scalar_select %p658, %s30, 1
        %s660 = smul.addr %s659, 8
        %s661 = scalar_lea.vmem %s0, %s660
      $region108: #{bert_multitask_forward.1} parent=103 // pred_fallthru
        _
      // Predicated region
      $region109: #{bert_multitask_forward.1} parent=103 // pred_check
        %p662 = pneg %p76
      $region110: #{bert_multitask_forward.1} parent=103 // pred_check_branch
        %664 = sbr.rel (%p662) target = $region112
      $region111: #{bert_multitask_forward.1} parent=103 // pred_region
        %p665 = scmp.lt.s32.totalorder %s30, 1
        %s666 = scalar_select %p665, %s30, 1
        %s667 = scalar_lea.vmem %s1, %s666
      $region112: #{bert_multitask_forward.1} parent=103 // pred_fallthru
        _
    $region104: #{bert_multitask_forward.1} parent=5 // pred_fallthru
      _
    %p668 = scmp.le.s32.totalorder 1, %s30
    %p669 = scmp.lt.s32.totalorder %s30, 3
    %p670 = pnand %p668, %p669
    %p671 = pneg %p670
    // Predicated region
    $region113: #{bert_multitask_forward.1} parent=5 // pred_check
      _
    $region114: #{bert_multitask_forward.1} parent=5 // pred_check_branch
      %673 = sbr.rel (%p670) target = $region116
    $region115: #{bert_multitask_forward.1} parent=5 // pred_region
      %s674 = ssub.s32 %s30, 1
      %p675 = scmp.lt.s32.totalorder %s35, 1
      %s676 = scalar_select %p675, %s35, 1
      %s677 = smul.addr %s676, 8
      %s678 = scalar_lea.vmem %s0, %s677
      %p679 = pneg %p56
      %p680 = pneg %p53
      %p681 = scmp.lt.s32.totalorder %s35, 1
      %s682 = scalar_select %p681, %s35, 1
      %s683 = scalar_lea.vmem %s1, %s682
      %p684 = pneg %p82
      %p685 = pneg %p79
      %p686 = pneg %p103
      %p687 = pneg %p100
      %p688 = pneg %p124
      %p689 = pneg %p121
      %p690 = pneg %p145
      %p691 = pneg %p142
      %p692 = pneg %p166
      %p693 = pneg %p163
      %p694 = pneg %p187
      %p695 = pneg %p184
      %p696 = pneg %p208
      %p697 = pneg %p205
      %p698 = pneg %p229
      %p699 = pneg %p226
      %p700 = pneg %p250
      %p701 = pneg %p247
      %p702 = pneg %p271
      %p703 = pneg %p268
      %p704 = pneg %p292
      %p705 = pneg %p289
      %p706 = pneg %p313
      %p707 = pneg %p310
      %p708 = pneg %p334
      %p709 = pneg %p331
      %p710 = pneg %p355
      %p711 = pneg %p352
      %p712 = pneg %p376
      %p713 = pneg %p373
      %p714 = pneg %p397
      %p715 = pneg %p394
      %p716 = pneg %p418
      %p717 = pneg %p415
      %p718 = pneg %p439
      %p719 = pneg %p436
      %p720 = pneg %p460
      %p721 = pneg %p457
      %p722 = pneg %p481
      %p723 = pneg %p478
      %p724 = pneg %p502
      %p725 = pneg %p499
      %p726 = pneg %p523
      %p727 = pneg %p520
      %p728 = pneg %p544
      %p729 = pneg %p541
      %p730 = pneg %p570
      %p731 = pneg %p567
      %p732 = scmp.lt.s32.totalorder %s35, 1
      %s733 = scalar_select %p732, %s35, 1
      %s734 = scalar_lea.vmem %s24, %s733
      %p735 = scmp.lt.s32.totalorder %s35, 1
      %s736 = scalar_select %p735, %s35, 1
      %s737 = smul.addr %s736, 8
      %s738 = scalar_lea.vmem %s0, %s737
      %p739 = scmp.lt.s32.totalorder %s35, 1
      %s740 = scalar_select %p739, %s35, 1
      %s741 = scalar_lea.vmem %s1, %s740
      %p742 = scmp.lt.s32.totalorder %s35, 1
      %s743 = scalar_select %p742, %s35, 1
      %s744 = scalar_lea.vmem %s24, %s743
      %v745 = vld [vmem:[%s738] sm:$0xff]
      %v746 = vld [vmem:[%s2] sm:$0x1]
      %v747 = vld [vmem:[%s3] sm:$0x1]
      %vm748 = vcmask 261120
      %v749 = vsel %vm748, %v745, 0.0
      %750 = vadd.xlane.f32.xlu0 %v749
      %v751 = vpop.xlane.xlu0 %750
      %v752 = vrcp.pop 32.0
      %v753 = vmul.f32 %v751, %v752
      %v754 = vsub.f32 %v745, %v753
      %v755 = vmul.f32 %v754, %v754
      %v756 = vsel %vm748, %v755, 0.0
      %757 = vadd.xlane.f32.xlu0 %v756
      %v758 = vpop.xlane.xlu0 %757
      %v759 = vmul.f32 %v758, %v752
      %v760 = vadd.f32 %v759, 1e-12
      %v761 = vrsqrt.pop %v760
      %v762 = vmul.f32 %v754, %v761
      %v764 = vlaneseq
      %v765 = vshrl.u32 %v764, 7
      %v766 = vsub.s32 0, %v765
      %v767 = vrot.slane %v746, %v766
      %v769 = vmul.f32 %v762, %v767
      %v771 = vlaneseq
      %v772 = vshrl.u32 %v771, 7
      %v773 = vsub.s32 0, %v772
      %v774 = vrot.slane %v747, %v773
      %v776 = vadd.f32 %v769, %v774
      %v777 = vld [vmem:[%s741] sm:$0x1]
      %v778 = vsub.f32 1.0, %v777
      %v779 = vmul.f32 %v778, -1e+09
      %v780 = vld [vmem:[%s4] sm:$0xff]
      %v781 = vld [vmem:[%s4 + $0x8] sm:$0xff]
      %v782 = vld [vmem:[%s4 + $0x10] sm:$0xff]
      %v783 = vld [vmem:[%s4 + $0x18] sm:$0xff]
      %v784 = vld [vmem:[%s5] sm:$0x1]
      %v786 = vlaneseq
      %v787 = vshrl.u32 %v786, 7
      %v788 = vsub.s32 0, %v787
      %v789 = vrot.slane %v784, %v788
      %v792 = vsel %vm748, %v776, 0
      %794 = vmatprep.subr.mxu0 0.0
      %795 = vmatpush1.msra.mxu0 %v780
      %796 = vmatprep.subr.mxu0 0.0
      %797 = vmatpush1.msra.mxu0 %v781
      %798 = vmatprep.subr.mxu0 0.0
      %799 = vmatpush1.msra.mxu0 %v782
      %800 = vmatprep.subr.mxu0 0.0
      %801 = vmatpush1.msra.mxu0 %v783
      %802 = vmatprep.subr.mxu0 0.0
      %803 = vmatpush1.msra.mxu0 0.0
      %804 = vmatprep.subr.mxu0 0.0
      %805 = vmatpush1.msra.mxu0 0.0
      %806 = vmatprep.subr.mxu0 0.0
      %807 = vmatpush1.msra.mxu0 0.0
      %808 = vmatprep.subr.mxu0 0.0
      %809 = vmatpush1.msra.mxu0 0.0
      %810 = vmatprep.subr.mxu0 0.0
      %811 = vmatpush1.msra.mxu0 0.0
      %812 = vmatprep.subr.mxu0 0.0
      %813 = vmatpush1.msra.mxu0 0.0
      %814 = vmatprep.subr.mxu0 0.0
      %815 = vmatpush1.msra.mxu0 0.0
      %816 = vmatprep.subr.mxu0 0.0
      %817 = vmatpush1.msra.mxu0 0.0
      %818 = vmatprep.subr.mxu0 0.0
      %819 = vmatpush1.msra.mxu0 0.0
      %820 = vmatprep.subr.mxu0 0.0
      %821 = vmatpush1.msra.mxu0 0.0
      %822 = vmatprep.subr.mxu0 0.0
      %823 = vmatpush1.msra.mxu0 0.0
      %824 = vmatprep.subr.mxu0 0.0
      %825 = vmatpush1.msra.mxu0 0.0
      %826 = vmatprep.subr.mxu0 0.0
      %827 = vmatpush1.msra.mxu0 0.0
      %828 = vmatprep.subr.mxu0 0.0
      %829 = vmatpush1.msra.mxu0 0.0
      %830 = vmatprep.subr.mxu0 0.0
      %831 = vmatpush1.msra.mxu0 0.0
      %832 = vmatprep.subr.mxu0 0.0
      %833 = vmatpush1.msra.mxu0 0.0
      %834 = vmatprep.subr.mxu0 0.0
      %835 = vmatpush1.msra.mxu0 0.0
      %836 = vmatprep.subr.mxu0 0.0
      %837 = vmatpush1.msra.mxu0 0.0
      %838 = vmatprep.subr.mxu0 0.0
      %839 = vmatpush1.msra.mxu0 0.0
      %840 = vmatprep.subr.mxu0 0.0
      %841 = vmatpush1.msra.mxu0 0.0
      %842 = vmatprep.subr.mxu0 0.0
      %843 = vmatpush1.msra.mxu0 0.0
      %844 = vmatprep.subr.mxu0 0.0
      %845 = vmatpush1.msra.mxu0 0.0
      %846 = vmatprep.subr.mxu0 0.0
      %847 = vmatpush1.msra.mxu0 0.0
      %848 = vmatprep.subr.mxu0 0.0
      %849 = vmatpush1.msra.mxu0 0.0
      %850 = vmatprep.subr.mxu0 0.0
      %851 = vmatpush1.msra.mxu0 0.0
      %852 = vmatprep.subr.mxu0 0.0
      %853 = vmatpush1.msra.mxu0 0.0
      %854 = vmatprep.subr.mxu0 0.0
      %855 = vmatpush1.msra.mxu0 0.0
      %856 = vmatprep.subr.mxu0 0.0
      %857 = vmatpush1.msra.mxu0 0.0
      %858 = vmatprep.mubr.f32.mxu0 0.0
      %859 = vmatmul.mubr.f32.gmra.mrb[0].mxu0 %v792
      %v860 = vpop.f32.mrb[0].mxu0
      %v861 = vadd.f32 %v789, %v860
      %v862 = vpop.f32.mrb[0].mxu0
      %863 = vdwg.mxu0
      %v864 = vld [vmem:[%s6] sm:$0xff]
      %v865 = vld [vmem:[%s6 + $0x8] sm:$0xff]
      %v866 = vld [vmem:[%s6 + $0x10] sm:$0xff]
      %v867 = vld [vmem:[%s6 + $0x18] sm:$0xff]
      %v868 = vld [vmem:[%s7] sm:$0x1]
      %v870 = vlaneseq
      %v871 = vshrl.u32 %v870, 7
      %v872 = vsub.s32 0, %v871
      %v873 = vrot.slane %v779, %v872
      %876 = vrot.lane.b32.xlu0 %v861, 96
      %v877 = vpop.permute.xlu0 %876
      %vm878 = vcmask 130048
      %v879 = vsel %vm878, %v861, 0
      %v881 = vsel %vm878, %v877, 0
      %883 = vmatprep.subr.mxu0 0.0
      %884 = vmatpush1.xpose.msra.mxu0 %v881
      %885 = vmatprep.subr.mxu0 0.0
      %886 = vmatpush1.xpose.msra.mxu0 0.0
      %887 = vmatprep.subr.mxu0 0.0
      %888 = vmatpush1.xpose.msra.mxu0 0.0
      %889 = vmatprep.subr.mxu0 0.0
      %890 = vmatpush1.xpose.msra.mxu0 0.0
      %891 = vmatprep.subr.mxu0 0.0
      %892 = vmatpush1.xpose.msra.mxu0 0.0
      %893 = vmatprep.subr.mxu0 0.0
      %894 = vmatpush1.xpose.msra.mxu0 0.0
      %895 = vmatprep.subr.mxu0 0.0
      %896 = vmatpush1.xpose.msra.mxu0 0.0
      %897 = vmatprep.subr.mxu0 0.0
      %898 = vmatpush1.xpose.msra.mxu0 0.0
      %899 = vmatprep.subr.mxu0 0.0
      %900 = vmatpush1.xpose.msra.mxu0 0.0
      %901 = vmatprep.subr.mxu0 0.0
      %902 = vmatpush1.xpose.msra.mxu0 0.0
      %903 = vmatprep.subr.mxu0 0.0
      %904 = vmatpush1.xpose.msra.mxu0 0.0
      %905 = vmatprep.subr.mxu0 0.0
      %906 = vmatpush1.xpose.msra.mxu0 0.0
      %907 = vmatprep.subr.mxu0 0.0
      %908 = vmatpush1.xpose.msra.mxu0 0.0
      %909 = vmatprep.subr.mxu0 0.0
      %910 = vmatpush1.xpose.msra.mxu0 0.0
      %911 = vmatprep.subr.mxu0 0.0
      %912 = vmatpush1.xpose.msra.mxu0 0.0
      %913 = vmatprep.subr.mxu0 0.0
      %914 = vmatpush1.xpose.msra.mxu0 0.0
      %915 = vmatprep.subr.mxu0 0.0
      %916 = vmatpush1.xpose.msra.mxu0 0.0
      %917 = vmatprep.subr.mxu0 0.0
      %918 = vmatpush1.xpose.msra.mxu0 0.0
      %919 = vmatprep.subr.mxu0 0.0
      %920 = vmatpush1.xpose.msra.mxu0 0.0
      %921 = vmatprep.subr.mxu0 0.0
      %922 = vmatpush1.xpose.msra.mxu0 0.0
      %923 = vmatprep.subr.mxu0 0.0
      %924 = vmatpush1.xpose.msra.mxu0 0.0
      %925 = vmatprep.subr.mxu0 0.0
      %926 = vmatpush1.xpose.msra.mxu0 0.0
      %927 = vmatprep.subr.mxu0 0.0
      %928 = vmatpush1.xpose.msra.mxu0 0.0
      %929 = vmatprep.subr.mxu0 0.0
      %930 = vmatpush1.xpose.msra.mxu0 0.0
      %931 = vmatprep.subr.mxu0 0.0
      %932 = vmatpush1.xpose.msra.mxu0 0.0
      %933 = vmatprep.subr.mxu0 0.0
      %934 = vmatpush1.xpose.msra.mxu0 0.0
      %935 = vmatprep.subr.mxu0 0.0
      %936 = vmatpush1.xpose.msra.mxu0 0.0
      %937 = vmatprep.subr.mxu0 0.0
      %938 = vmatpush1.xpose.msra.mxu0 0.0
      %939 = vmatprep.subr.mxu0 0.0
      %940 = vmatpush1.xpose.msra.mxu0 0.0
      %941 = vmatprep.subr.mxu0 0.0
      %942 = vmatpush1.xpose.msra.mxu0 0.0
      %943 = vmatprep.subr.mxu0 0.0
      %944 = vmatpush1.xpose.msra.mxu0 0.0
      %945 = vmatprep.subr.mxu0 0.0
      %946 = vmatpush1.xpose.msra.mxu0 0.0
      %947 = vmatprep.mubr.f32.mxu0 0.0
      %948 = vmatmul.mubr.f32.gmra.mrb[0].mxu0 %v879
      %v949 = vpop.f32.mrb[0].mxu0
      %v950 = vadd.f32 %v873, %v949
      %v951 = vpop.f32.mrb[0].mxu0
      %952 = vdwg.mxu0
      %vm953 = vcmask 64512
      %v954 = vsel %vm953, %v950, -inf
      %955 = vmax.xlane.f32.xlu0 %v954
      %v956 = vpop.xlane.xlu0 %955
      %v957 = vsub.f32 %v950, %v956
      %v958 = vmul.f32 %v957, 1.442695
      %v959 = vpow.pop %v958
      %v960 = vsel %vm953, %v959, 0.0
      %961 = vadd.xlane.f32.xlu0 %v960
      %v962 = vpop.xlane.xlu0 %961
      %v963 = vrcp.pop %v962
      %v964 = vmul.f32 %v959, %v963
      %965 = vrot.lane.b32.xlu0 %v861, 64
      %v966 = vpop.permute.xlu0 %965
      %v969 = vsel %vm953, %v964, 0
      %971 = vmatprep.subr.mxu0 0.0
      %972 = vmatpush1.msra.mxu0 %v966
      %973 = vmatprep.subr.mxu0 0.0
      %974 = vmatpush1.msra.mxu0 0.0
      %975 = vmatprep.subr.mxu0 0.0
      %976 = vmatpush1.msra.mxu0 0.0
      %977 = vmatprep.subr.mxu0 0.0
      %978 = vmatpush1.msra.mxu0 0.0
      %979 = vmatprep.subr.mxu0 0.0
      %980 = vmatpush1.msra.mxu0 0.0
      %981 = vmatprep.subr.mxu0 0.0
      %982 = vmatpush1.msra.mxu0 0.0
      %983 = vmatprep.subr.mxu0 0.0
      %984 = vmatpush1.msra.mxu0 0.0
      %985 = vmatprep.subr.mxu0 0.0
      %986 = vmatpush1.msra.mxu0 0.0
      %987 = vmatprep.subr.mxu0 0.0
      %988 = vmatpush1.msra.mxu0 0.0
      %989 = vmatprep.subr.mxu0 0.0
      %990 = vmatpush1.msra.mxu0 0.0
      %991 = vmatprep.subr.mxu0 0.0
      %992 = vmatpush1.msra.mxu0 0.0
      %993 = vmatprep.subr.mxu0 0.0
      %994 = vmatpush1.msra.mxu0 0.0
      %995 = vmatprep.subr.mxu0 0.0
      %996 = vmatpush1.msra.mxu0 0.0
      %997 = vmatprep.subr.mxu0 0.0
      %998 = vmatpush1.msra.mxu0 0.0
      %999 = vmatprep.subr.mxu0 0.0
      %1000 = vmatpush1.msra.mxu0 0.0
      %1001 = vmatprep.subr.mxu0 0.0
      %1002 = vmatpush1.msra.mxu0 0.0
      %1003 = vmatprep.subr.mxu0 0.0
      %1004 = vmatpush1.msra.mxu0 0.0
      %1005 = vmatprep.subr.mxu0 0.0
      %1006 = vmatpush1.msra.mxu0 0.0
      %1007 = vmatprep.subr.mxu0 0.0
      %1008 = vmatpush1.msra.mxu0 0.0
      %1009 = vmatprep.subr.mxu0 0.0
      %1010 = vmatpush1.msra.mxu0 0.0
      %1011 = vmatprep.subr.mxu0 0.0
      %1012 = vmatpush1.msra.mxu0 0.0
      %1013 = vmatprep.subr.mxu0 0.0
      %1014 = vmatpush1.msra.mxu0 0.0
      %1015 = vmatprep.subr.mxu0 0.0
      %1016 = vmatpush1.msra.mxu0 0.0
      %1017 = vmatprep.subr.mxu0 0.0
      %1018 = vmatpush1.msra.mxu0 0.0
      %1019 = vmatprep.subr.mxu0 0.0
      %1020 = vmatpush1.msra.mxu0 0.0
      %1021 = vmatprep.subr.mxu0 0.0
      %1022 = vmatpush1.msra.mxu0 0.0
      %1023 = vmatprep.subr.mxu0 0.0
      %1024 = vmatpush1.msra.mxu0 0.0
      %1025 = vmatprep.subr.mxu0 0.0
      %1026 = vmatpush1.msra.mxu0 0.0
      %1027 = vmatprep.subr.mxu0 0.0
      %1028 = vmatpush1.msra.mxu0 0.0
      %1029 = vmatprep.subr.mxu0 0.0
      %1030 = vmatpush1.msra.mxu0 0.0
      %1031 = vmatprep.subr.mxu0 0.0
      %1032 = vmatpush1.msra.mxu0 0.0
      %1033 = vmatprep.subr.mxu0 0.0
      %1034 = vmatpush1.msra.mxu0 0.0
      %1035 = vmatprep.mubr.f32.mxu0 0.0
      %1036 = vmatmul.mubr.f32.gmra.mrb[0].mxu0 %v969
      %v1037 = vpop.f32.mrb[0].mxu0
      %v1038 = vadd.f32 0.0, %v1037
      %v1039 = vpop.f32.mrb[0].mxu0
      %1040 = vdwg.mxu0
      %v1042 = vsel %vm878, %v1038, 0
      %1044 = vmatprep.subr.mxu0 0.0
      %1045 = vmatpush1.msra.mxu0 %v864
      %1046 = vmatprep.subr.mxu0 0.0
      %1047 = vmatpush1.msra.mxu0 %v865
      %1048 = vmatprep.subr.mxu0 0.0
      %1049 = vmatpush1.msra.mxu0 0.0
      %1050 = vmatprep.subr.mxu0 0.0
      %1051 = vmatpush1.msra.mxu0 0.0
      %1052 = vmatprep.subr.mxu0 0.0
      %1053 = vmatpush1.msra.mxu0 0.0
      %1054 = vmatprep.subr.mxu0 0.0
      %1055 = vmatpush1.msra.mxu0 0.0
      %1056 = vmatprep.subr.mxu0 0.0
      %1057 = vmatpush1.msra.mxu0 0.0
      %1058 = vmatprep.subr.mxu0 0.0
      %1059 = vmatpush1.msra.mxu0 0.0
      %1060 = vmatprep.subr.mxu0 0.0
      %1061 = vmatpush1.msra.mxu0 0.0
      %1062 = vmatprep.subr.mxu0 0.0
      %1063 = vmatpush1.msra.mxu0 0.0
      %1064 = vmatprep.subr.mxu0 0.0
      %1065 = vmatpush1.msra.mxu0 0.0
      %1066 = vmatprep.subr.mxu0 0.0
      %1067 = vmatpush1.msra.mxu0 0.0
      %1068 = vmatprep.subr.mxu0 0.0
      %1069 = vmatpush1.msra.mxu0 0.0
      %1070 = vmatprep.subr.mxu0 0.0
      %1071 = vmatpush1.msra.mxu0 0.0
      %1072 = vmatprep.subr.mxu0 0.0
      %1073 = vmatpush1.msra.mxu0 0.0
      %1074 = vmatprep.subr.mxu0 0.0
      %1075 = vmatpush1.msra.mxu0 0.0
      %1076 = vmatprep.subr.mxu0 0.0
      %1077 = vmatpush1.msra.mxu0 0.0
      %1078 = vmatprep.subr.mxu0 0.0
      %1079 = vmatpush1.msra.mxu0 0.0
      %1080 = vmatprep.subr.mxu0 0.0
      %1081 = vmatpush1.msra.mxu0 0.0
      %1082 = vmatprep.subr.mxu0 0.0
      %1083 = vmatpush1.msra.mxu0 0.0
      %1084 = vmatprep.subr.mxu0 0.0
      %1085 = vmatpush1.msra.mxu0 0.0
      %1086 = vmatprep.subr.mxu0 0.0
      %1087 = vmatpush1.msra.mxu0 0.0
      %1088 = vmatprep.subr.mxu0 0.0
      %1089 = vmatpush1.msra.mxu0 0.0
      %1090 = vmatprep.subr.mxu0 0.0
      %1091 = vmatpush1.msra.mxu0 0.0
      %1092 = vmatprep.subr.mxu0 0.0
      %1093 = vmatpush1.msra.mxu0 0.0
      %1094 = vmatprep.subr.mxu0 0.0
      %1095 = vmatpush1.msra.mxu0 0.0
      %1096 = vmatprep.subr.mxu0 0.0
      %1097 = vmatpush1.msra.mxu0 0.0
      %1098 = vmatprep.subr.mxu0 0.0
      %1099 = vmatpush1.msra.mxu0 0.0
      %1100 = vmatprep.subr.mxu0 0.0
      %1101 = vmatpush1.msra.mxu0 0.0
      %1102 = vmatprep.subr.mxu0 0.0
      %1103 = vmatpush1.msra.mxu0 0.0
      %1104 = vmatprep.subr.mxu0 0.0
      %1105 = vmatpush1.msra.mxu0 0.0
      %1106 = vmatprep.subr.mxu0 0.0
      %1107 = vmatpush1.msra.mxu0 0.0
      %1108 = vmatprep.mubr.f32.mxu0 0.0
      %1109 = vmatmul.mubr.f32.gmra.mrb[0].mxu0 %v1042
      %v1110 = vpop.f32.mrb[0].mxu0
      %v1111 = vadd.f32 0.0, %v1110
      %v1112 = vpop.f32.mrb[0].mxu0
      %1113 = vdwg.mxu0
      %v1115 = vlaneseq
      %v1116 = vshrl.u32 %v1115, 7
      %v1117 = vsub.s32 0, %v1116
      %v1118 = vrot.slane %v868, %v1117
      %v1120 = vadd.f32 %v1118, %v1111
      %1121 = vrot.lane.b32.xlu0 %v861, 112
      %v1122 = vpop.permute.xlu0 %1121
      %1123 = vrot.lane.b32.xlu0 %v861, 80
      %v1124 = vpop.permute.xlu0 %1123
      %v1125 = vsel %vm878, %v1122, 0
      %v1127 = vsel %vm878, %v1124, 0
      %1129 = vmatprep.subr.mxu0 0.0
      %1130 = vmatpush1.xpose.msra.mxu0 %v1127
      %1131 = vmatprep.subr.mxu0 0.0
      %1132 = vmatpush1.xpose.msra.mxu0 0.0
      %1133 = vmatprep.subr.mxu0 0.0
      %1134 = vmatpush1.xpose.msra.mxu0 0.0
      %1135 = vmatprep.subr.mxu0 0.0
      %1136 = vmatpush1.xpose.msra.mxu0 0.0
      %1137 = vmatprep.subr.mxu0 0.0
      %1138 = vmatpush1.xpose.msra.mxu0 0.0
      %1139 = vmatprep.subr.mxu0 0.0
      %1140 = vmatpush1.xpose.msra.mxu0 0.0
      %1141 = vmatprep.subr.mxu0 0.0
      %1142 = vmatpush1.xpose.msra.mxu0 0.0
      %1143 = vmatprep.subr.mxu0 0.0
      %1144 = vmatpush1.xpose.msra.mxu0 0.0
      %1145 = vmatprep.subr.mxu0 0.0
      %1146 = vmatpush1.xpose.msra.mxu0 0.0
      %1147 = vmatprep.subr.mxu0 0.0
      %1148 = vmatpush1.xpose.msra.mxu0 0.0
      %1149 = vmatprep.subr.mxu0 0.0
      %1150 = vmatpush1.xpose.msra.mxu0 0.0
      %1151 = vmatprep.subr.mxu0 0.0
      %1152 = vmatpush1.xpose.msra.mxu0 0.0
      %1153 = vmatprep.subr.mxu0 0.0
      %1154 = vmatpush1.xpose.msra.mxu0 0.0
      %1155 = vmatprep.subr.mxu0 0.0
      %1156 = vmatpush1.xpose.msra.mxu0 0.0
      %1157 = vmatprep.subr.mxu0 0.0
      %1158 = vmatpush1.xpose.msra.mxu0 0.0
      %1159 = vmatprep.subr.mxu0 0.0
      %1160 = vmatpush1.xpose.msra.mxu0 0.0
      %1161 = vmatprep.subr.mxu0 0.0
      %1162 = vmatpush1.xpose.msra.mxu0 0.0
      %1163 = vmatprep.subr.mxu0 0.0
      %1164 = vmatpush1.xpose.msra.mxu0 0.0
      %1165 = vmatprep.subr.mxu0 0.0
      %1166 = vmatpush1.xpose.msra.mxu0 0.0
      %1167 = vmatprep.subr.mxu0 0.0
      %1168 = vmatpush1.xpose.msra.mxu0 0.0
      %1169 = vmatprep.subr.mxu0 0.0
      %1170 = vmatpush1.xpose.msra.mxu0 0.0
      %1171 = vmatprep.subr.mxu0 0.0
      %1172 = vmatpush1.xpose.msra.mxu0 0.0
      %1173 = vmatprep.subr.mxu0 0.0
      %1174 = vmatpush1.xpose.msra.mxu0 0.0
      %1175 = vmatprep.subr.mxu0 0.0
      %1176 = vmatpush1.xpose.msra.mxu0 0.0
      %1177 = vmatprep.subr.mxu0 0.0
      %1178 = vmatpush1.xpose.msra.mxu0 0.0
      %1179 = vmatprep.subr.mxu0 0.0
      %1180 = vmatpush1.xpose.msra.mxu0 0.0
      %1181 = vmatprep.subr.mxu0 0.0
      %1182 = vmatpush1.xpose.msra.mxu0 0.0
      %1183 = vmatprep.subr.mxu0 0.0
      %1184 = vmatpush1.xpose.msra.mxu0 0.0
      %1185 = vmatprep.subr.mxu0 0.0
      %1186 = vmatpush1.xpose.msra.mxu0 0.0
      %1187 = vmatprep.subr.mxu0 0.0
      %1188 = vmatpush1.xpose.msra.mxu0 0.0
      %1189 = vmatprep.subr.mxu0 0.0
      %1190 = vmatpush1.xpose.msra.mxu0 0.0
      %1191 = vmatprep.subr.mxu0 0.0
      %1192 = vmatpush1.xpose.msra.mxu0 0.0
      %1193 = vmatprep.mubr.f32.mxu0 0.0
      %1194 = vmatmul.mubr.f32.gmra.mrb[0].mxu0 %v1125
      %v1195 = vpop.f32.mrb[0].mxu0
      %v1196 = vadd.f32 %v873, %v1195
      %v1197 = vpop.f32.mrb[0].mxu0
      %1198 = vdwg.mxu0
      %v1199 = vsel %vm953, %v1196, -inf
      %1200 = vmax.xlane.f32.xlu0 %v1199
      %v1201 = vpop.xlane.xlu0 %1200
      %v1202 = vsub.f32 %v1196, %v1201
      %v1203 = vmul.f32 %v1202, 1.442695
      %v1204 = vpow.pop %v1203
      %v1205 = vsel %vm953, %v1204, 0.0
      %1206 = vadd.xlane.f32.xlu0 %v1205
      %v1207 = vpop.xlane.xlu0 %1206
      %v1208 = vrcp.pop %v1207
      %v1209 = vmul.f32 %v1204, %v1208
      %1210 = vrot.lane.b32.xlu0 %v861, 48
      %v1211 = vpop.permute.xlu0 %1210
      %v1214 = vsel %vm953, %v1209, 0
      %1216 = vmatprep.subr.mxu0 0.0
      %1217 = vmatpush1.msra.mxu0 %v1211
      %1218 = vmatprep.subr.mxu0 0.0
      %1219 = vmatpush1.msra.mxu0 0.0
      %1220 = vmatprep.subr.mxu0 0.0
      %1221 = vmatpush1.msra.mxu0 0.0
      %1222 = vmatprep.subr.mxu0 0.0
      %1223 = vmatpush1.msra.mxu0 0.0
      %1224 = vmatprep.subr.mxu0 0.0
      %1225 = vmatpush1.msra.mxu0 0.0
      %1226 = vmatprep.subr.mxu0 0.0
      %1227 = vmatpush1.msra.mxu0 0.0
      %1228 = vmatprep.subr.mxu0 0.0
      %1229 = vmatpush1.msra.mxu0 0.0
      %1230 = vmatprep.subr.mxu0 0.0
      %1231 = vmatpush1.msra.mxu0 0.0
      %1232 = vmatprep.subr.mxu0 0.0
      %1233 = vmatpush1.msra.mxu0 0.0
      %1234 = vmatprep.subr.mxu0 0.0
      %1235 = vmatpush1.msra.mxu0 0.0
      %1236 = vmatprep.subr.mxu0 0.0
      %1237 = vmatpush1.msra.mxu0 0.0
      %1238 = vmatprep.subr.mxu0 0.0
      %1239 = vmatpush1.msra.mxu0 0.0
      %1240 = vmatprep.subr.mxu0 0.0
      %1241 = vmatpush1.msra.mxu0 0.0
      %1242 = vmatprep.subr.mxu0 0.0
      %1243 = vmatpush1.msra.mxu0 0.0
      %1244 = vmatprep.subr.mxu0 0.0
      %1245 = vmatpush1.msra.mxu0 0.0
      %1246 = vmatprep.subr.mxu0 0.0
      %1247 = vmatpush1.msra.mxu0 0.0
      %1248 = vmatprep.subr.mxu0 0.0
      %1249 = vmatpush1.msra.mxu0 0.0
      %1250 = vmatprep.subr.mxu0 0.0
      %1251 = vmatpush1.msra.mxu0 0.0
      %1252 = vmatprep.subr.mxu0 0.0
      %1253 = vmatpush1.msra.mxu0 0.0
      %1254 = vmatprep.subr.mxu0 0.0
      %1255 = vmatpush1.msra.mxu0 0.0
      %1256 = vmatprep.subr.mxu0 0.0
      %1257 = vmatpush1.msra.mxu0 0.0
      %1258 = vmatprep.subr.mxu0 0.0
      %1259 = vmatpush1.msra.mxu0 0.0
      %1260 = vmatprep.subr.mxu0 0.0
      %1261 = vmatpush1.msra.mxu0 0.0
      %1262 = vmatprep.subr.mxu0 0.0
      %1263 = vmatpush1.msra.mxu0 0.0
      %1264 = vmatprep.subr.mxu0 0.0
      %1265 = vmatpush1.msra.mxu0 0.0
      %1266 = vmatprep.subr.mxu0 0.0
      %1267 = vmatpush1.msra.mxu0 0.0
      %1268 = vmatprep.subr.mxu0 0.0
      %1269 = vmatpush1.msra.mxu0 0.0
      %1270 = vmatprep.subr.mxu0 0.0
      %1271 = vmatpush1.msra.mxu0 0.0
      %1272 = vmatprep.subr.mxu0 0.0
      %1273 = vmatpush1.msra.mxu0 0.0
      %1274 = vmatprep.subr.mxu0 0.0
      %1275 = vmatpush1.msra.mxu0 0.0
      %1276 = vmatprep.subr.mxu0 0.0
      %1277 = vmatpush1.msra.mxu0 0.0
      %1278 = vmatprep.subr.mxu0 0.0
      %1279 = vmatpush1.msra.mxu0 0.0
      %1280 = vmatprep.mubr.f32.mxu0 0.0
      %1281 = vmatmul.mubr.f32.gmra.mrb[0].mxu0 %v1214
      %v1282 = vpop.f32.mrb[0].mxu0
      %v1283 = vadd.f32 0.0, %v1282
      %v1284 = vpop.f32.mrb[0].mxu0
      %1285 = vdwg.mxu0
      %v1287 = vsel %vm878, %v1283, 0
      %1289 = vmatprep.subr.mxu0 0.0
      %1290 = vmatpush1.msra.mxu0 %v866
      %1291 = vmatprep.subr.mxu0 0.0
      %1292 = vmatpush1.msra.mxu0 %v867
      %1293 = vmatprep.subr.mxu0 0.0
      %1294 = vmatpush1.msra.mxu0 0.0
      %1295 = vmatprep.subr.mxu0 0.0
      %1296 = vmatpush1.msra.mxu0 0.0
      %1297 = vmatprep.subr.mxu0 0.0
      %1298 = vmatpush1.msra.mxu0 0.0
      %1299 = vmatprep.subr.mxu0 0.0
      %1300 = vmatpush1.msra.mxu0 0.0
      %1301 = vmatprep.subr.mxu0 0.0
      %1302 = vmatpush1.msra.mxu0 0.0
      %1303 = vmatprep.subr.mxu0 0.0
      %1304 = vmatpush1.msra.mxu0 0.0
      %1305 = vmatprep.subr.mxu0 0.0
      %1306 = vmatpush1.msra.mxu0 0.0
      %1307 = vmatprep.subr.mxu0 0.0
      %1308 = vmatpush1.msra.mxu0 0.0
      %1309 = vmatprep.subr.mxu0 0.0
      %1310 = vmatpush1.msra.mxu0 0.0
      %1311 = vmatprep.subr.mxu0 0.0
      %1312 = vmatpush1.msra.mxu0 0.0
      %1313 = vmatprep.subr.mxu0 0.0
      %1314 = vmatpush1.msra.mxu0 0.0
      %1315 = vmatprep.subr.mxu0 0.0
      %1316 = vmatpush1.msra.mxu0 0.0
      %1317 = vmatprep.subr.mxu0 0.0
      %1318 = vmatpush1.msra.mxu0 0.0
      %1319 = vmatprep.subr.mxu0 0.0
      %1320 = vmatpush1.msra.mxu0 0.0
      %1321 = vmatprep.subr.mxu0 0.0
      %1322 = vmatpush1.msra.mxu0 0.0
      %1323 = vmatprep.subr.mxu0 0.0
      %1324 = vmatpush1.msra.mxu0 0.0
      %1325 = vmatprep.subr.mxu0 0.0
      %1326 = vmatpush1.msra.mxu0 0.0
      %1327 = vmatprep.subr.mxu0 0.0
      %1328 = vmatpush1.msra.mxu0 0.0
      %1329 = vmatprep.subr.mxu0 0.0
      %1330 = vmatpush1.msra.mxu0 0.0
      %1331 = vmatprep.subr.mxu0 0.0
      %1332 = vmatpush1.msra.mxu0 0.0
      %1333 = vmatprep.subr.mxu0 0.0
      %1334 = vmatpush1.msra.mxu0 0.0
      %1335 = vmatprep.subr.mxu0 0.0
      %1336 = vmatpush1.msra.mxu0 0.0
      %1337 = vmatprep.subr.mxu0 0.0
      %1338 = vmatpush1.msra.mxu0 0.0
      %1339 = vmatprep.subr.mxu0 0.0
      %1340 = vmatpush1.msra.mxu0 0.0
      %1341 = vmatprep.subr.mxu0 0.0
      %1342 = vmatpush1.msra.mxu0 0.0
      %1343 = vmatprep.subr.mxu0 0.0
      %1344 = vmatpush1.msra.mxu0 0.0
      %1345 = vmatprep.subr.mxu0 0.0
      %1346 = vmatpush1.msra.mxu0 0.0
      %1347 = vmatprep.subr.mxu0 0.0
      %1348 = vmatpush1.msra.mxu0 0.0
      %1349 = vmatprep.subr.mxu0 0.0
      %1350 = vmatpush1.msra.mxu0 0.0
      %1351 = vmatprep.subr.mxu0 0.0
      %1352 = vmatpush1.msra.mxu0 0.0
      %1353 = vmatprep.mubr.f32.mxu0 0.0
      %1354 = vmatmul.mubr.f32.gmra.mrb[0].mxu0 %v1287
      %v1355 = vpop.f32.mrb[0].mxu0
      %v1356 = vadd.f32 0.0, %v1355
      %v1357 = vpop.f32.mrb[0].mxu0
      %1358 = vdwg.mxu0
      %v1359 = vadd.f32 %v1120, %v1356
      %v1360 = vadd.f32 %v1359, %v776
      %v1361 = vld [vmem:[%s8] sm:$0x1]
      %v1362 = vld [vmem:[%s9] sm:$0x1]
      %v1363 = vsel %vm748, %v1360, 0.0
      %1364 = vadd.xlane.f32.xlu0 %v1363
      %v1365 = vpop.xlane.xlu0 %1364
      %v1366 = vmul.f32 %v1365, %v752
      %v1367 = vsub.f32 %v1360, %v1366
      %v1368 = vmul.f32 %v1367, %v1367
      %v1369 = vsel %vm748, %v1368, 0.0
      %1370 = vadd.xlane.f32.xlu0 %v1369
      %v1371 = vpop.xlane.xlu0 %1370
      %v1372 = vmul.f32 %v1371, %v752
      %v1373 = vadd.f32 %v1372, 1e-12
      %v1374 = vrsqrt.pop %v1373
      %v1375 = vmul.f32 %v1367, %v1374
      %v1377 = vlaneseq
      %v1378 = vshrl.u32 %v1377, 7
      %v1379 = vsub.s32 0, %v1378
      %v1380 = vrot.slane %v1361, %v1379
      %v1382 = vmul.f32 %v1375, %v1380
      %v1384 = vlaneseq
      %v1385 = vshrl.u32 %v1384, 7
      %v1386 = vsub.s32 0, %v1385
      %v1387 = vrot.slane %v1362, %v1386
      %v1389 = vadd.f32 %v1382, %v1387
      %v1390 = vld [vmem:[%s10] sm:$0xff]
      %v1391 = vld [vmem:[%s10 + $0x8] sm:$0xff]
      %v1392 = vld [vmem:[%s10 + $0x10] sm:$0xff]
      %v1393 = vld [vmem:[%s10 + $0x18] sm:$0xff]
      %v1394 = vld [vmem:[%s11] sm:$0x1]
      %v1396 = vlaneseq
      %v1397 = vshrl.u32 %v1396, 7
      %v1398 = vsub.s32 0, %v1397
      %v1399 = vrot.slane %v1394, %v1398
      %v1402 = vsel %vm748, %v1389, 0
      %1404 = vmatprep.subr.mxu0 0.0
      %1405 = vmatpush1.msra.mxu0 %v1390
      %1406 = vmatprep.subr.mxu0 0.0
      %1407 = vmatpush1.msra.mxu0 %v1391
      %1408 = vmatprep.subr.mxu0 0.0
      %1409 = vmatpush1.msra.mxu0 %v1392
      %1410 = vmatprep.subr.mxu0 0.0
      %1411 = vmatpush1.msra.mxu0 %v1393
      %1412 = vmatprep.subr.mxu0 0.0
      %1413 = vmatpush1.msra.mxu0 0.0
      %1414 = vmatprep.subr.mxu0 0.0
      %1415 = vmatpush1.msra.mxu0 0.0
      %1416 = vmatprep.subr.mxu0 0.0
      %1417 = vmatpush1.msra.mxu0 0.0
      %1418 = vmatprep.subr.mxu0 0.0
      %1419 = vmatpush1.msra.mxu0 0.0
      %1420 = vmatprep.subr.mxu0 0.0
      %1421 = vmatpush1.msra.mxu0 0.0
      %1422 = vmatprep.subr.mxu0 0.0
      %1423 = vmatpush1.msra.mxu0 0.0
      %1424 = vmatprep.subr.mxu0 0.0
      %1425 = vmatpush1.msra.mxu0 0.0
      %1426 = vmatprep.subr.mxu0 0.0
      %1427 = vmatpush1.msra.mxu0 0.0
      %1428 = vmatprep.subr.mxu0 0.0
      %1429 = vmatpush1.msra.mxu0 0.0
      %1430 = vmatprep.subr.mxu0 0.0
      %1431 = vmatpush1.msra.mxu0 0.0
      %1432 = vmatprep.subr.mxu0 0.0
      %1433 = vmatpush1.msra.mxu0 0.0
      %1434 = vmatprep.subr.mxu0 0.0
      %1435 = vmatpush1.msra.mxu0 0.0
      %1436 = vmatprep.subr.mxu0 0.0
      %1437 = vmatpush1.msra.mxu0 0.0
      %1438 = vmatprep.subr.mxu0 0.0
      %1439 = vmatpush1.msra.mxu0 0.0
      %1440 = vmatprep.subr.mxu0 0.0
      %1441 = vmatpush1.msra.mxu0 0.0
      %1442 = vmatprep.subr.mxu0 0.0
      %1443 = vmatpush1.msra.mxu0 0.0
      %1444 = vmatprep.subr.mxu0 0.0
      %1445 = vmatpush1.msra.mxu0 0.0
      %1446 = vmatprep.subr.mxu0 0.0
      %1447 = vmatpush1.msra.mxu0 0.0
      %1448 = vmatprep.subr.mxu0 0.0
      %1449 = vmatpush1.msra.mxu0 0.0
      %1450 = vmatprep.subr.mxu0 0.0
      %1451 = vmatpush1.msra.mxu0 0.0
      %1452 = vmatprep.subr.mxu0 0.0
      %1453 = vmatpush1.msra.mxu0 0.0
      %1454 = vmatprep.subr.mxu0 0.0
      %1455 = vmatpush1.msra.mxu0 0.0
      %1456 = vmatprep.subr.mxu0 0.0
      %1457 = vmatpush1.msra.mxu0 0.0
      %1458 = vmatprep.subr.mxu0 0.0
      %1459 = vmatpush1.msra.mxu0 0.0
      %1460 = vmatprep.subr.mxu0 0.0
      %1461 = vmatpush1.msra.mxu0 0.0
      %1462 = vmatprep.subr.mxu0 0.0
      %1463 = vmatpush1.msra.mxu0 0.0
      %1464 = vmatprep.subr.mxu0 0.0
      %1465 = vmatpush1.msra.mxu0 0.0
      %1466 = vmatprep.subr.mxu0 0.0
      %1467 = vmatpush1.msra.mxu0 0.0
      %1468 = vmatprep.mubr.f32.mxu0 0.0
      %1469 = vmatmul.mubr.f32.gmra.mrb[0].mxu0 %v1402
      %v1470 = vpop.f32.mrb[0].mxu0
      %v1471 = vadd.f32 %v1399, %v1470
      %v1472 = vpop.f32.mrb[0].mxu0
      %1473 = vdwg.mxu0
      %v1474 = vmul.f32 %v1471, 0.5
      %v1475 = vmul.f32 %v1471, 0.044715
      %v1476 = vmul.f32 %v1475, %v1471
      %v1477 = vmul.f32 %v1476, %v1471
      %v1478 = vadd.f32 %v1471, %v1477
      %v1479 = vmul.f32 %v1478, 0.7978846
      %v1480 = vtanh.pop %v1479
      %v1481 = vadd.f32 %v1480, 1.0
      %v1482 = vmul.f32 %v1474, %v1481
      %v1483 = vld [vmem:[%s12] sm:$0xff]
      %v1484 = vld [vmem:[%s12 + $0x8] sm:$0xff]
      %v1485 = vld [vmem:[%s12 + $0x10] sm:$0xff]
      %v1486 = vld [vmem:[%s12 + $0x18] sm:$0xff]
      %v1487 = vld [vmem:[%s12 + $0x20] sm:$0xff]
      %v1488 = vld [vmem:[%s12 + $0x28] sm:$0xff]
      %v1489 = vld [vmem:[%s12 + $0x30] sm:$0xff]
      %v1490 = vld [vmem:[%s12 + $0x38] sm:$0xff]
      %v1491 = vld [vmem:[%s12 + $0x40] sm:$0xff]
      %v1492 = vld [vmem:[%s12 + $0x48] sm:$0xff]
      %v1493 = vld [vmem:[%s12 + $0x50] sm:$0xff]
      %v1494 = vld [vmem:[%s12 + $0x58] sm:$0xff]
      %v1495 = vld [vmem:[%s12 + $0x60] sm:$0xff]
      %v1496 = vld [vmem:[%s12 + $0x68] sm:$0xff]
      %v1497 = vld [vmem:[%s12 + $0x70] sm:$0xff]
      %v1498 = vld [vmem:[%s12 + $0x78] sm:$0xff]
      %v1499 = vld [vmem:[%s13] sm:$0x1]
      %v1501 = vlaneseq
      %v1502 = vshrl.u32 %v1501, 7
      %v1503 = vsub.s32 0, %v1502
      %v1504 = vrot.slane %v1499, %v1503
      %1506 = vmatprep.subr.mxu0 0.0
      %1507 = vmatpush1.msra.mxu0 %v1483
      %1508 = vmatprep.subr.mxu0 0.0
      %1509 = vmatpush1.msra.mxu0 %v1484
      %1510 = vmatprep.subr.mxu0 0.0
      %1511 = vmatpush1.msra.mxu0 %v1485
      %1512 = vmatprep.subr.mxu0 0.0
      %1513 = vmatpush1.msra.mxu0 %v1486
      %1514 = vmatprep.subr.mxu0 0.0
      %1515 = vmatpush1.msra.mxu0 %v1487
      %1516 = vmatprep.subr.mxu0 0.0
      %1517 = vmatpush1.msra.mxu0 %v1488
      %1518 = vmatprep.subr.mxu0 0.0
      %1519 = vmatpush1.msra.mxu0 %v1489
      %1520 = vmatprep.subr.mxu0 0.0
      %1521 = vmatpush1.msra.mxu0 %v1490
      %1522 = vmatprep.subr.mxu0 0.0
      %1523 = vmatpush1.msra.mxu0 %v1491
      %1524 = vmatprep.subr.mxu0 0.0
      %1525 = vmatpush1.msra.mxu0 %v1492
      %1526 = vmatprep.subr.mxu0 0.0
      %1527 = vmatpush1.msra.mxu0 %v1493
      %1528 = vmatprep.subr.mxu0 0.0
      %1529 = vmatpush1.msra.mxu0 %v1494
      %1530 = vmatprep.subr.mxu0 0.0
      %1531 = vmatpush1.msra.mxu0 %v1495
      %1532 = vmatprep.subr.mxu0 0.0
      %1533 = vmatpush1.msra.mxu0 %v1496
      %1534 = vmatprep.subr.mxu0 0.0
      %1535 = vmatpush1.msra.mxu0 %v1497
      %1536 = vmatprep.subr.mxu0 0.0
      %1537 = vmatpush1.msra.mxu0 %v1498
      %1538 = vmatprep.subr.mxu0 0.0
      %1539 = vmatpush1.msra.mxu0 0.0
      %1540 = vmatprep.subr.mxu0 0.0
      %1541 = vmatpush1.msra.mxu0 0.0
      %1542 = vmatprep.subr.mxu0 0.0
      %1543 = vmatpush1.msra.mxu0 0.0
      %1544 = vmatprep.subr.mxu0 0.0
      %1545 = vmatpush1.msra.mxu0 0.0
      %1546 = vmatprep.subr.mxu0 0.0
      %1547 = vmatpush1.msra.mxu0 0.0
      %1548 = vmatprep.subr.mxu0 0.0
      %1549 = vmatpush1.msra.mxu0 0.0
      %1550 = vmatprep.subr.mxu0 0.0
      %1551 = vmatpush1.msra.mxu0 0.0
      %1552 = vmatprep.subr.mxu0 0.0
      %1553 = vmatpush1.msra.mxu0 0.0
      %1554 = vmatprep.subr.mxu0 0.0
      %1555 = vmatpush1.msra.mxu0 0.0
      %1556 = vmatprep.subr.mxu0 0.0
      %1557 = vmatpush1.msra.mxu0 0.0
      %1558 = vmatprep.subr.mxu0 0.0
      %1559 = vmatpush1.msra.mxu0 0.0
      %1560 = vmatprep.subr.mxu0 0.0
      %1561 = vmatpush1.msra.mxu0 0.0
      %1562 = vmatprep.subr.mxu0 0.0
      %1563 = vmatpush1.msra.mxu0 0.0
      %1564 = vmatprep.subr.mxu0 0.0
      %1565 = vmatpush1.msra.mxu0 0.0
      %1566 = vmatprep.subr.mxu0 0.0
      %1567 = vmatpush1.msra.mxu0 0.0
      %1568 = vmatprep.subr.mxu0 0.0
      %1569 = vmatpush1.msra.mxu0 0.0
      %1570 = vmatprep.mubr.f32.mxu0 0.0
      %1571 = vmatmul.mubr.f32.gmra.mrb[0].mxu0 %v1482
      %v1572 = vpop.f32.mrb[0].mxu0
      %v1573 = vadd.f32 %v1504, %v1572
      %v1574 = vpop.f32.mrb[0].mxu0
      %1575 = vdwg.mxu0
      %v1576 = vadd.f32 %v1573, %v1389
      %v1577 = vld [vmem:[%s14] sm:$0x1]
      %v1578 = vld [vmem:[%s15] sm:$0x1]
      %v1579 = vsel %vm748, %v1576, 0.0
      %1580 = vadd.xlane.f32.xlu0 %v1579
      %v1581 = vpop.xlane.xlu0 %1580
      %v1582 = vmul.f32 %v1581, %v752
      %v1583 = vsub.f32 %v1576, %v1582
      %v1584 = vmul.f32 %v1583, %v1583
      %v1585 = vsel %vm748, %v1584, 0.0
      %1586 = vadd.xlane.f32.xlu0 %v1585
      %v1587 = vpop.xlane.xlu0 %1586
      %v1588 = vmul.f32 %v1587, %v752
      %v1589 = vadd.f32 %v1588, 1e-12
      %v1590 = vrsqrt.pop %v1589
      %v1591 = vmul.f32 %v1583, %v1590
      %v1593 = vlaneseq
      %v1594 = vshrl.u32 %v1593, 7
      %v1595 = vsub.s32 0, %v1594
      %v1596 = vrot.slane %v1577, %v1595
      %v1598 = vmul.f32 %v1591, %v1596
      %v1600 = vlaneseq
      %v1601 = vshrl.u32 %v1600, 7
      %v1602 = vsub.s32 0, %v1601
      %v1603 = vrot.slane %v1578, %v1602
      %v1605 = vadd.f32 %v1598, %v1603
      %s1606 = scalar_lea.vmem %s4, 32
      %v1607 = vld [vmem:[%s1606] sm:$0xff]
      %v1608 = vld [vmem:[%s1606 + $0x8] sm:$0xff]
      %v1609 = vld [vmem:[%s1606 + $0x10] sm:$0xff]
      %v1610 = vld [vmem:[%s1606 + $0x18] sm:$0xff]
      %s1611 = scalar_lea.vmem %s5, 1
      %v1612 = vld [vmem:[%s1611] sm:$0x1]
      %v1614 = vlaneseq
      %v1615 = vshrl.u32 %v1614, 7
      %v1616 = vsub.s32 0, %v1615
      %v1617 = vrot.slane %v1612, %v1616
      %v1620 = vsel %vm748, %v1605, 0
      %1622 = vmatprep.subr.mxu0 0.0
      %1623 = vmatpush1.msra.mxu0 %v1607
      %1624 = vmatprep.subr.mxu0 0.0
      %1625 = vmatpush1.msra.mxu0 %v1608
      %1626 = vmatprep.subr.mxu0 0.0
      %1627 = vmatpush1.msra.mxu0 %v1609
      %1628 = vmatprep.subr.mxu0 0.0
      %1629 = vmatpush1.msra.mxu0 %v1610
      %1630 = vmatprep.subr.mxu0 0.0
      %1631 = vmatpush1.msra.mxu0 0.0
      %1632 = vmatprep.subr.mxu0 0.0
      %1633 = vmatpush1.msra.mxu0 0.0
      %1634 = vmatprep.subr.mxu0 0.0
      %1635 = vmatpush1.msra.mxu0 0.0
      %1636 = vmatprep.subr.mxu0 0.0
      %1637 = vmatpush1.msra.mxu0 0.0
      %1638 = vmatprep.subr.mxu0 0.0
      %1639 = vmatpush1.msra.mxu0 0.0
      %1640 = vmatprep.subr.mxu0 0.0
      %1641 = vmatpush1.msra.mxu0 0.0
      %1642 = vmatprep.subr.mxu0 0.0
      %1643 = vmatpush1.msra.mxu0 0.0
      %1644 = vmatprep.subr.mxu0 0.0
      %1645 = vmatpush1.msra.mxu0 0.0
      %1646 = vmatprep.subr.mxu0 0.0
      %1647 = vmatpush1.msra.mxu0 0.0
      %1648 = vmatprep.subr.mxu0 0.0
      %1649 = vmatpush1.msra.mxu0 0.0
      %1650 = vmatprep.subr.mxu0 0.0
      %1651 = vmatpush1.msra.mxu0 0.0
      %1652 = vmatprep.subr.mxu0 0.0
      %1653 = vmatpush1.msra.mxu0 0.0
      %1654 = vmatprep.subr.mxu0 0.0
      %1655 = vmatpush1.msra.mxu0 0.0
      %1656 = vmatprep.subr.mxu0 0.0
      %1657 = vmatpush1.msra.mxu0 0.0
      %1658 = vmatprep.subr.mxu0 0.0
      %1659 = vmatpush1.msra.mxu0 0.0
      %1660 = vmatprep.subr.mxu0 0.0
      %1661 = vmatpush1.msra.mxu0 0.0
      %1662 = vmatprep.subr.mxu0 0.0
      %1663 = vmatpush1.msra.mxu0 0.0
      %1664 = vmatprep.subr.mxu0 0.0
      %1665 = vmatpush1.msra.mxu0 0.0
      %1666 = vmatprep.subr.mxu0 0.0
      %1667 = vmatpush1.msra.mxu0 0.0
      %1668 = vmatprep.subr.mxu0 0.0
      %1669 = vmatpush1.msra.mxu0 0.0
      %1670 = vmatprep.subr.mxu0 0.0
      %1671 = vmatpush1.msra.mxu0 0.0
      %1672 = vmatprep.subr.mxu0 0.0
      %1673 = vmatpush1.msra.mxu0 0.0
      %1674 = vmatprep.subr.mxu0 0.0
      %1675 = vmatpush1.msra.mxu0 0.0
      %1676 = vmatprep.subr.mxu0 0.0
      %1677 = vmatpush1.msra.mxu0 0.0
      %1678 = vmatprep.subr.mxu0 0.0
      %1679 = vmatpush1.msra.mxu0 0.0
      %1680 = vmatprep.subr.mxu0 0.0
      %1681 = vmatpush1.msra.mxu0 0.0
      %1682 = vmatprep.subr.mxu0 0.0
      %1683 = vmatpush1.msra.mxu0 0.0
      %1684 = vmatprep.subr.mxu0 0.0
      %1685 = vmatpush1.msra.mxu0 0.0
      %1686 = vmatprep.mubr.f32.mxu0 0.0
      %1687 = vmatmul.mubr.f32.gmra.mrb[0].mxu0 %v1620
      %v1688 = vpop.f32.mrb[0].mxu0
      %v1689 = vadd.f32 %v1617, %v1688
      %v1690 = vpop.f32.mrb[0].mxu0
      %1691 = vdwg.mxu0
      %s1692 = scalar_lea.vmem %s6, 32
      %v1693 = vld [vmem:[%s1692] sm:$0xff]
      %v1694 = vld [vmem:[%s1692 + $0x8] sm:$0xff]
      %v1695 = vld [vmem:[%s1692 + $0x10] sm:$0xff]
      %v1696 = vld [vmem:[%s1692 + $0x18] sm:$0xff]
      %s1697 = scalar_lea.vmem %s7, 1
      %v1698 = vld [vmem:[%s1697] sm:$0x1]
      %1700 = vrot.lane.b32.xlu0 %v1689, 96
      %v1701 = vpop.permute.xlu0 %1700
      %v1702 = vsel %vm878, %v1689, 0
      %v1704 = vsel %vm878, %v1701, 0
      %1706 = vmatprep.subr.mxu0 0.0
      %1707 = vmatpush1.xpose.msra.mxu0 %v1704
      %1708 = vmatprep.subr.mxu0 0.0
      %1709 = vmatpush1.xpose.msra.mxu0 0.0
      %1710 = vmatprep.subr.mxu0 0.0
      %1711 = vmatpush1.xpose.msra.mxu0 0.0
      %1712 = vmatprep.subr.mxu0 0.0
      %1713 = vmatpush1.xpose.msra.mxu0 0.0
      %1714 = vmatprep.subr.mxu0 0.0
      %1715 = vmatpush1.xpose.msra.mxu0 0.0
      %1716 = vmatprep.subr.mxu0 0.0
      %1717 = vmatpush1.xpose.msra.mxu0 0.0
      %1718 = vmatprep.subr.mxu0 0.0
      %1719 = vmatpush1.xpose.msra.mxu0 0.0
      %1720 = vmatprep.subr.mxu0 0.0
      %1721 = vmatpush1.xpose.msra.mxu0 0.0
      %1722 = vmatprep.subr.mxu0 0.0
      %1723 = vmatpush1.xpose.msra.mxu0 0.0
      %1724 = vmatprep.subr.mxu0 0.0
      %1725 = vmatpush1.xpose.msra.mxu0 0.0
      %1726 = vmatprep.subr.mxu0 0.0
      %1727 = vmatpush1.xpose.msra.mxu0 0.0
      %1728 = vmatprep.subr.mxu0 0.0
      %1729 = vmatpush1.xpose.msra.mxu0 0.0
      %1730 = vmatprep.subr.mxu0 0.0
      %1731 = vmatpush1.xpose.msra.mxu0 0.0
      %1732 = vmatprep.subr.mxu0 0.0
      %1733 = vmatpush1.xpose.msra.mxu0 0.0
      %1734 = vmatprep.subr.mxu0 0.0
      %1735 = vmatpush1.xpose.msra.mxu0 0.0
      %1736 = vmatprep.subr.mxu0 0.0
      %1737 = vmatpush1.xpose.msra.mxu0 0.0
      %1738 = vmatprep.subr.mxu0 0.0
      %1739 = vmatpush1.xpose.msra.mxu0 0.0
      %1740 = vmatprep.subr.mxu0 0.0
      %1741 = vmatpush1.xpose.msra.mxu0 0.0
      %1742 = vmatprep.subr.mxu0 0.0
      %1743 = vmatpush1.xpose.msra.mxu0 0.0
      %1744 = vmatprep.subr.mxu0 0.0
      %1745 = vmatpush1.xpose.msra.mxu0 0.0
      %1746 = vmatprep.subr.mxu0 0.0
      %1747 = vmatpush1.xpose.msra.mxu0 0.0
      %1748 = vmatprep.subr.mxu0 0.0
      %1749 = vmatpush1.xpose.msra.mxu0 0.0
      %1750 = vmatprep.subr.mxu0 0.0
      %1751 = vmatpush1.xpose.msra.mxu0 0.0
      %1752 = vmatprep.subr.mxu0 0.0
      %1753 = vmatpush1.xpose.msra.mxu0 0.0
      %1754 = vmatprep.subr.mxu0 0.0
      %1755 = vmatpush1.xpose.msra.mxu0 0.0
      %1756 = vmatprep.subr.mxu0 0.0
      %1757 = vmatpush1.xpose.msra.mxu0 0.0
      %1758 = vmatprep.subr.mxu0 0.0
      %1759 = vmatpush1.xpose.msra.mxu0 0.0
      %1760 = vmatprep.subr.mxu0 0.0
      %1761 = vmatpush1.xpose.msra.mxu0 0.0
      %1762 = vmatprep.subr.mxu0 0.0
      %1763 = vmatpush1.xpose.msra.mxu0 0.0
      %1764 = vmatprep.subr.mxu0 0.0
      %1765 = vmatpush1.xpose.msra.mxu0 0.0
      %1766 = vmatprep.subr.mxu0 0.0
      %1767 = vmatpush1.xpose.msra.mxu0 0.0
      %1768 = vmatprep.subr.mxu0 0.0
      %1769 = vmatpush1.xpose.msra.mxu0 0.0
      %1770 = vmatprep.mubr.f32.mxu0 0.0
      %1771 = vmatmul.mubr.f32.gmra.mrb[0].mxu0 %v1702
      %v1772 = vpop.f32.mrb[0].mxu0
      %v1773 = vadd.f32 %v873, %v1772
      %v1774 = vpop.f32.mrb[0].mxu0
      %1775 = vdwg.mxu0
      %v1776 = vsel %vm953, %v1773, -inf
      %1777 = vmax.xlane.f32.xlu0 %v1776
      %v1778 = vpop.xlane.xlu0 %1777
      %v1779 = vsub.f32 %v1773, %v1778
      %v1780 = vmul.f32 %v1779, 1.442695
      %v1781 = vpow.pop %v1780
      %v1782 = vsel %vm953, %v1781, 0.0
      %1783 = vadd.xlane.f32.xlu0 %v1782
      %v1784 = vpop.xlane.xlu0 %1783
      %v1785 = vrcp.pop %v1784
      %v1786 = vmul.f32 %v1781, %v1785
      %1787 = vrot.lane.b32.xlu0 %v1689, 64
      %v1788 = vpop.permute.xlu0 %1787
      %v1791 = vsel %vm953, %v1786, 0
      %1793 = vmatprep.subr.mxu0 0.0
      %1794 = vmatpush1.msra.mxu0 %v1788
      %1795 = vmatprep.subr.mxu0 0.0
      %1796 = vmatpush1.msra.mxu0 0.0
      %1797 = vmatprep.subr.mxu0 0.0
      %1798 = vmatpush1.msra.mxu0 0.0
      %1799 = vmatprep.subr.mxu0 0.0
      %1800 = vmatpush1.msra.mxu0 0.0
      %1801 = vmatprep.subr.mxu0 0.0
      %1802 = vmatpush1.msra.mxu0 0.0
      %1803 = vmatprep.subr.mxu0 0.0
      %1804 = vmatpush1.msra.mxu0 0.0
      %1805 = vmatprep.subr.mxu0 0.0
      %1806 = vmatpush1.msra.mxu0 0.0
      %1807 = vmatprep.subr.mxu0 0.0
      %1808 = vmatpush1.msra.mxu0 0.0
      %1809 = vmatprep.subr.mxu0 0.0
      %1810 = vmatpush1.msra.mxu0 0.0
      %1811 = vmatprep.subr.mxu0 0.0
      %1812 = vmatpush1.msra.mxu0 0.0
      %1813 = vmatprep.subr.mxu0 0.0
      %1814 = vmatpush1.msra.mxu0 0.0
      %1815 = vmatprep.subr.mxu0 0.0
      %1816 = vmatpush1.msra.mxu0 0.0
      %1817 = vmatprep.subr.mxu0 0.0
      %1818 = vmatpush1.msra.mxu0 0.0
      %1819 = vmatprep.subr.mxu0 0.0
      %1820 = vmatpush1.msra.mxu0 0.0
      %1821 = vmatprep.subr.mxu0 0.0
      %1822 = vmatpush1.msra.mxu0 0.0
      %1823 = vmatprep.subr.mxu0 0.0
      %1824 = vmatpush1.msra.mxu0 0.0
      %1825 = vmatprep.subr.mxu0 0.0
      %1826 = vmatpush1.msra.mxu0 0.0
      %1827 = vmatprep.subr.mxu0 0.0
      %1828 = vmatpush1.msra.mxu0 0.0
      %1829 = vmatprep.subr.mxu0 0.0
      %1830 = vmatpush1.msra.mxu0 0.0
      %1831 = vmatprep.subr.mxu0 0.0
      %1832 = vmatpush1.msra.mxu0 0.0
      %1833 = vmatprep.subr.mxu0 0.0
      %1834 = vmatpush1.msra.mxu0 0.0
      %1835 = vmatprep.subr.mxu0 0.0
      %1836 = vmatpush1.msra.mxu0 0.0
      %1837 = vmatprep.subr.mxu0 0.0
      %1838 = vmatpush1.msra.mxu0 0.0
      %1839 = vmatprep.subr.mxu0 0.0
      %1840 = vmatpush1.msra.mxu0 0.0
      %1841 = vmatprep.subr.mxu0 0.0
      %1842 = vmatpush1.msra.mxu0 0.0
      %1843 = vmatprep.subr.mxu0 0.0
      %1844 = vmatpush1.msra.mxu0 0.0
      %1845 = vmatprep.subr.mxu0 0.0
      %1846 = vmatpush1.msra.mxu0 0.0
      %1847 = vmatprep.subr.mxu0 0.0
      %1848 = vmatpush1.msra.mxu0 0.0
      %1849 = vmatprep.subr.mxu0 0.0
      %1850 = vmatpush1.msra.mxu0 0.0
      %1851 = vmatprep.subr.mxu0 0.0
      %1852 = vmatpush1.msra.mxu0 0.0
      %1853 = vmatprep.subr.mxu0 0.0
      %1854 = vmatpush1.msra.mxu0 0.0
      %1855 = vmatprep.subr.mxu0 0.0
      %1856 = vmatpush1.msra.mxu0 0.0
      %1857 = vmatprep.mubr.f32.mxu0 0.0
      %1858 = vmatmul.mubr.f32.gmra.mrb[0].mxu0 %v1791
      %v1859 = vpop.f32.mrb[0].mxu0
      %v1860 = vadd.f32 0.0, %v1859
      %v1861 = vpop.f32.mrb[0].mxu0
      %1862 = vdwg.mxu0
      %v1864 = vsel %vm878, %v1860, 0
      %1866 = vmatprep.subr.mxu0 0.0
      %1867 = vmatpush1.msra.mxu0 %v1693
      %1868 = vmatprep.subr.mxu0 0.0
      %1869 = vmatpush1.msra.mxu0 %v1694
      %1870 = vmatprep.subr.mxu0 0.0
      %1871 = vmatpush1.msra.mxu0 0.0
      %1872 = vmatprep.subr.mxu0 0.0
      %1873 = vmatpush1.msra.mxu0 0.0
      %1874 = vmatprep.subr.mxu0 0.0
      %1875 = vmatpush1.msra.mxu0 0.0
      %1876 = vmatprep.subr.mxu0 0.0
      %1877 = vmatpush1.msra.mxu0 0.0
      %1878 = vmatprep.subr.mxu0 0.0
      %1879 = vmatpush1.msra.mxu0 0.0
      %1880 = vmatprep.subr.mxu0 0.0
      %1881 = vmatpush1.msra.mxu0 0.0
      %1882 = vmatprep.subr.mxu0 0.0
      %1883 = vmatpush1.msra.mxu0 0.0
      %1884 = vmatprep.subr.mxu0 0.0
      %1885 = vmatpush1.msra.mxu0 0.0
      %1886 = vmatprep.subr.mxu0 0.0
      %1887 = vmatpush1.msra.mxu0 0.0
      %1888 = vmatprep.subr.mxu0 0.0
      %1889 = vmatpush1.msra.mxu0 0.0
      %1890 = vmatprep.subr.mxu0 0.0
      %1891 = vmatpush1.msra.mxu0 0.0
      %1892 = vmatprep.subr.mxu0 0.0
      %1893 = vmatpush1.msra.mxu0 0.0
      %1894 = vmatprep.subr.mxu0 0.0
      %1895 = vmatpush1.msra.mxu0 0.0
      %1896 = vmatprep.subr.mxu0 0.0
      %1897 = vmatpush1.msra.mxu0 0.0
      %1898 = vmatprep.subr.mxu0 0.0
      %1899 = vmatpush1.msra.mxu0 0.0
      %1900 = vmatprep.subr.mxu0 0.0
      %1901 = vmatpush1.msra.mxu0 0.0
      %1902 = vmatprep.subr.mxu0 0.0
      %1903 = vmatpush1.msra.mxu0 0.0
      %1904 = vmatprep.subr.mxu0 0.0
      %1905 = vmatpush1.msra.mxu0 0.0
      %1906 = vmatprep.subr.mxu0 0.0
      %1907 = vmatpush1.msra.mxu0 0.0
      %1908 = vmatprep.subr.mxu0 0.0
      %1909 = vmatpush1.msra.mxu0 0.0
      %1910 = vmatprep.subr.mxu0 0.0
      %1911 = vmatpush1.msra.mxu0 0.0
      %1912 = vmatprep.subr.mxu0 0.0
      %1913 = vmatpush1.msra.mxu0 0.0
      %1914 = vmatprep.subr.mxu0 0.0
      %1915 = vmatpush1.msra.mxu0 0.0
      %1916 = vmatprep.subr.mxu0 0.0
      %1917 = vmatpush1.msra.mxu0 0.0
      %1918 = vmatprep.subr.mxu0 0.0
      %1919 = vmatpush1.msra.mxu0 0.0
      %1920 = vmatprep.subr.mxu0 0.0
      %1921 = vmatpush1.msra.mxu0 0.0
      %1922 = vmatprep.subr.mxu0 0.0
      %1923 = vmatpush1.msra.mxu0 0.0
      %1924 = vmatprep.subr.mxu0 0.0
      %1925 = vmatpush1.msra.mxu0 0.0
      %1926 = vmatprep.subr.mxu0 0.0
      %1927 = vmatpush1.msra.mxu0 0.0
      %1928 = vmatprep.subr.mxu0 0.0
      %1929 = vmatpush1.msra.mxu0 0.0
      %1930 = vmatprep.mubr.f32.mxu0 0.0
      %1931 = vmatmul.mubr.f32.gmra.mrb[0].mxu0 %v1864
      %v1932 = vpop.f32.mrb[0].mxu0
      %v1933 = vadd.f32 0.0, %v1932
      %v1934 = vpop.f32.mrb[0].mxu0
      %1935 = vdwg.mxu0
      %v1937 = vlaneseq
      %v1938 = vshrl.u32 %v1937, 7
      %v1939 = vsub.s32 0, %v1938
      %v1940 = vrot.slane %v1698, %v1939
      %v1942 = vadd.f32 %v1940, %v1933
      %1943 = vrot.lane.b32.xlu0 %v1689, 112
      %v1944 = vpop.permute.xlu0 %1943
      %1945 = vrot.lane.b32.xlu0 %v1689, 80
      %v1946 = vpop.permute.xlu0 %1945
      %v1947 = vsel %vm878, %v1944, 0
      %v1949 = vsel %vm878, %v1946, 0
      %1951 = vmatprep.subr.mxu0 0.0
      %1952 = vmatpush1.xpose.msra.mxu0 %v1949
      %1953 = vmatprep.subr.mxu0 0.0
      %1954 = vmatpush1.xpose.msra.mxu0 0.0
      %1955 = vmatprep.subr.mxu0 0.0
      %1956 = vmatpush1.xpose.msra.mxu0 0.0
      %1957 = vmatprep.subr.mxu0 0.0
      %1958 = vmatpush1.xpose.msra.mxu0 0.0
      %1959 = vmatprep.subr.mxu0 0.0
      %1960 = vmatpush1.xpose.msra.mxu0 0.0
      %1961 = vmatprep.subr.mxu0 0.0
      %1962 = vmatpush1.xpose.msra.mxu0 0.0
      %1963 = vmatprep.subr.mxu0 0.0
      %1964 = vmatpush1.xpose.msra.mxu0 0.0
      %1965 = vmatprep.subr.mxu0 0.0
      %1966 = vmatpush1.xpose.msra.mxu0 0.0
      %1967 = vmatprep.subr.mxu0 0.0
      %1968 = vmatpush1.xpose.msra.mxu0 0.0
      %1969 = vmatprep.subr.mxu0 0.0
      %1970 = vmatpush1.xpose.msra.mxu0 0.0
      %1971 = vmatprep.subr.mxu0 0.0
      %1972 = vmatpush1.xpose.msra.mxu0 0.0
      %1973 = vmatprep.subr.mxu0 0.0
      %1974 = vmatpush1.xpose.msra.mxu0 0.0
      %1975 = vmatprep.subr.mxu0 0.0
      %1976 = vmatpush1.xpose.msra.mxu0 0.0
      %1977 = vmatprep.subr.mxu0 0.0
      %1978 = vmatpush1.xpose.msra.mxu0 0.0
      %1979 = vmatprep.subr.mxu0 0.0
      %1980 = vmatpush1.xpose.msra.mxu0 0.0
      %1981 = vmatprep.subr.mxu0 0.0
      %1982 = vmatpush1.xpose.msra.mxu0 0.0
      %1983 = vmatprep.subr.mxu0 0.0
      %1984 = vmatpush1.xpose.msra.mxu0 0.0
      %1985 = vmatprep.subr.mxu0 0.0
      %1986 = vmatpush1.xpose.msra.mxu0 0.0
      %1987 = vmatprep.subr.mxu0 0.0
      %1988 = vmatpush1.xpose.msra.mxu0 0.0
      %1989 = vmatprep.subr.mxu0 0.0
      %1990 = vmatpush1.xpose.msra.mxu0 0.0
      %1991 = vmatprep.subr.mxu0 0.0
      %1992 = vmatpush1.xpose.msra.mxu0 0.0
      %1993 = vmatprep.subr.mxu0 0.0
      %1994 = vmatpush1.xpose.msra.mxu0 0.0
      %1995 = vmatprep.subr.mxu0 0.0
      %1996 = vmatpush1.xpose.msra.mxu0 0.0
      %1997 = vmatprep.subr.mxu0 0.0
      %1998 = vmatpush1.xpose.msra.mxu0 0.0
      %1999 = vmatprep.subr.mxu0 0.0
      %2000 = vmatpush1.xpose.msra.mxu0 0.0
      %2001 = vmatprep.subr.mxu0 0.0
      %2002 = vmatpush1.xpose.msra.mxu0 0.0
      %2003 = vmatprep.subr.mxu0 0.0
      %2004 = vmatpush1.xpose.msra.mxu0 0.0
      %2005 = vmatprep.subr.mxu0 0.0
      %2006 = vmatpush1.xpose.msra.mxu0 0.0
      %2007 = vmatprep.subr.mxu0 0.0
      %2008 = vmatpush1.xpose.msra.mxu0 0.0
      %2009 = vmatprep.subr.mxu0 0.0
      %2010 = vmatpush1.xpose.msra.mxu0 0.0
      %2011 = vmatprep.subr.mxu0 0.0
      %2012 = vmatpush1.xpose.msra.mxu0 0.0
      %2013 = vmatprep.subr.mxu0 0.0
      %2014 = vmatpush1.xpose.msra.mxu0 0.0
      %2015 = vmatprep.mubr.f32.mxu0 0.0
      %2016 = vmatmul.mubr.f32.gmra.mrb[0].mxu0 %v1947
      %v2017 = vpop.f32.mrb[0].mxu0
      %v2018 = vadd.f32 %v873, %v2017
      %v2019 = vpop.f32.mrb[0].mxu0
      %2020 = vdwg.mxu0
      %v2021 = vsel %vm953, %v2018, -inf
      %2022 = vmax.xlane.f32.xlu0 %v2021
      %v2023 = vpop.xlane.xlu0 %2022
      %v2024 = vsub.f32 %v2018, %v2023
      %v2025 = vmul.f32 %v2024, 1.442695
      %v2026 = vpow.pop %v2025
      %v2027 = vsel %vm953, %v2026, 0.0
      %2028 = vadd.xlane.f32.xlu0 %v2027
      %v2029 = vpop.xlane.xlu0 %2028
      %v2030 = vrcp.pop %v2029
      %v2031 = vmul.f32 %v2026, %v2030
      %2032 = vrot.lane.b32.xlu0 %v1689, 48
      %v2033 = vpop.permute.xlu0 %2032
      %v2036 = vsel %vm953, %v2031, 0
      %2038 = vmatprep.subr.mxu0 0.0
      %2039 = vmatpush1.msra.mxu0 %v2033
      %2040 = vmatprep.subr.mxu0 0.0
      %2041 = vmatpush1.msra.mxu0 0.0
      %2042 = vmatprep.subr.mxu0 0.0
      %2043 = vmatpush1.msra.mxu0 0.0
      %2044 = vmatprep.subr.mxu0 0.0
      %2045 = vmatpush1.msra.mxu0 0.0
      %2046 = vmatprep.subr.mxu0 0.0
      %2047 = vmatpush1.msra.mxu0 0.0
      %2048 = vmatprep.subr.mxu0 0.0
      %2049 = vmatpush1.msra.mxu0 0.0
      %2050 = vmatprep.subr.mxu0 0.0
      %2051 = vmatpush1.msra.mxu0 0.0
      %2052 = vmatprep.subr.mxu0 0.0
      %2053 = vmatpush1.msra.mxu0 0.0
      %2054 = vmatprep.subr.mxu0 0.0
      %2055 = vmatpush1.msra.mxu0 0.0
      %2056 = vmatprep.subr.mxu0 0.0
      %2057 = vmatpush1.msra.mxu0 0.0
      %2058 = vmatprep.subr.mxu0 0.0
      %2059 = vmatpush1.msra.mxu0 0.0
      %2060 = vmatprep.subr.mxu0 0.0
      %2061 = vmatpush1.msra.mxu0 0.0
      %2062 = vmatprep.subr.mxu0 0.0
      %2063 = vmatpush1.msra.mxu0 0.0
      %2064 = vmatprep.subr.mxu0 0.0
      %2065 = vmatpush1.msra.mxu0 0.0
      %2066 = vmatprep.subr.mxu0 0.0
      %2067 = vmatpush1.msra.mxu0 0.0
      %2068 = vmatprep.subr.mxu0 0.0
      %2069 = vmatpush1.msra.mxu0 0.0
      %2070 = vmatprep.subr.mxu0 0.0
      %2071 = vmatpush1.msra.mxu0 0.0
      %2072 = vmatprep.subr.mxu0 0.0
      %2073 = vmatpush1.msra.mxu0 0.0
      %2074 = vmatprep.subr.mxu0 0.0
      %2075 = vmatpush1.msra.mxu0 0.0
      %2076 = vmatprep.subr.mxu0 0.0
      %2077 = vmatpush1.msra.mxu0 0.0
      %2078 = vmatprep.subr.mxu0 0.0
      %2079 = vmatpush1.msra.mxu0 0.0
      %2080 = vmatprep.subr.mxu0 0.0
      %2081 = vmatpush1.msra.mxu0 0.0
      %2082 = vmatprep.subr.mxu0 0.0
      %2083 = vmatpush1.msra.mxu0 0.0
      %2084 = vmatprep.subr.mxu0 0.0
      %2085 = vmatpush1.msra.mxu0 0.0
      %2086 = vmatprep.subr.mxu0 0.0
      %2087 = vmatpush1.msra.mxu0 0.0
      %2088 = vmatprep.subr.mxu0 0.0
      %2089 = vmatpush1.msra.mxu0 0.0
      %2090 = vmatprep.subr.mxu0 0.0
      %2091 = vmatpush1.msra.mxu0 0.0
      %2092 = vmatprep.subr.mxu0 0.0
      %2093 = vmatpush1.msra.mxu0 0.0
      %2094 = vmatprep.subr.mxu0 0.0
      %2095 = vmatpush1.msra.mxu0 0.0
      %2096 = vmatprep.subr.mxu0 0.0
      %2097 = vmatpush1.msra.mxu0 0.0
      %2098 = vmatprep.subr.mxu0 0.0
      %2099 = vmatpush1.msra.mxu0 0.0
      %2100 = vmatprep.subr.mxu0 0.0
      %2101 = vmatpush1.msra.mxu0 0.0
      %2102 = vmatprep.mubr.f32.mxu0 0.0
      %2103 = vmatmul.mubr.f32.gmra.mrb[0].mxu0 %v2036
      %v2104 = vpop.f32.mrb[0].mxu0
      %v2105 = vadd.f32 0.0, %v2104
      %v2106 = vpop.f32.mrb[0].mxu0
      %2107 = vdwg.mxu0
      %v2109 = vsel %vm878, %v2105, 0
      %2111 = vmatprep.subr.mxu0 0.0
      %2112 = vmatpush1.msra.mxu0 %v1695
      %2113 = vmatprep.subr.mxu0 0.0
      %2114 = vmatpush1.msra.mxu0 %v1696
      %2115 = vmatprep.subr.mxu0 0.0
      %2116 = vmatpush1.msra.mxu0 0.0
      %2117 = vmatprep.subr.mxu0 0.0
      %2118 = vmatpush1.msra.mxu0 0.0
      %2119 = vmatprep.subr.mxu0 0.0
      %2120 = vmatpush1.msra.mxu0 0.0
      %2121 = vmatprep.subr.mxu0 0.0
      %2122 = vmatpush1.msra.mxu0 0.0
      %2123 = vmatprep.subr.mxu0 0.0
      %2124 = vmatpush1.msra.mxu0 0.0
      %2125 = vmatprep.subr.mxu0 0.0
      %2126 = vmatpush1.msra.mxu0 0.0
      %2127 = vmatprep.subr.mxu0 0.0
      %2128 = vmatpush1.msra.mxu0 0.0
      %2129 = vmatprep.subr.mxu0 0.0
      %2130 = vmatpush1.msra.mxu0 0.0
      %2131 = vmatprep.subr.mxu0 0.0
      %2132 = vmatpush1.msra.mxu0 0.0
      %2133 = vmatprep.subr.mxu0 0.0
      %2134 = vmatpush1.msra.mxu0 0.0
      %2135 = vmatprep.subr.mxu0 0.0
      %2136 = vmatpush1.msra.mxu0 0.0
      %2137 = vmatprep.subr.mxu0 0.0
      %2138 = vmatpush1.msra.mxu0 0.0
      %2139 = vmatprep.subr.mxu0 0.0
      %2140 = vmatpush1.msra.mxu0 0.0
      %2141 = vmatprep.subr.mxu0 0.0
      %2142 = vmatpush1.msra.mxu0 0.0
      %2143 = vmatprep.subr.mxu0 0.0
      %2144 = vmatpush1.msra.mxu0 0.0
      %2145 = vmatprep.subr.mxu0 0.0
      %2146 = vmatpush1.msra.mxu0 0.0
      %2147 = vmatprep.subr.mxu0 0.0
      %2148 = vmatpush1.msra.mxu0 0.0
      %2149 = vmatprep.subr.mxu0 0.0
      %2150 = vmatpush1.msra.mxu0 0.0
      %2151 = vmatprep.subr.mxu0 0.0
      %2152 = vmatpush1.msra.mxu0 0.0
      %2153 = vmatprep.subr.mxu0 0.0
      %2154 = vmatpush1.msra.mxu0 0.0
      %2155 = vmatprep.subr.mxu0 0.0
      %2156 = vmatpush1.msra.mxu0 0.0
      %2157 = vmatprep.subr.mxu0 0.0
      %2158 = vmatpush1.msra.mxu0 0.0
      %2159 = vmatprep.subr.mxu0 0.0
      %2160 = vmatpush1.msra.mxu0 0.0
      %2161 = vmatprep.subr.mxu0 0.0
      %2162 = vmatpush1.msra.mxu0 0.0
      %2163 = vmatprep.subr.mxu0 0.0
      %2164 = vmatpush1.msra.mxu0 0.0
      %2165 = vmatprep.subr.mxu0 0.0
      %2166 = vmatpush1.msra.mxu0 0.0
      %2167 = vmatprep.subr.mxu0 0.0
      %2168 = vmatpush1.msra.mxu0 0.0
      %2169 = vmatprep.subr.mxu0 0.0
      %2170 = vmatpush1.msra.mxu0 0.0
      %2171 = vmatprep.subr.mxu0 0.0
      %2172 = vmatpush1.msra.mxu0 0.0
      %2173 = vmatprep.subr.mxu0 0.0
      %2174 = vmatpush1.msra.mxu0 0.0
      %2175 = vmatprep.mubr.f32.mxu0 0.0
      %2176 = vmatmul.mubr.f32.gmra.mrb[0].mxu0 %v2109
      %v2177 = vpop.f32.mrb[0].mxu0
      %v2178 = vadd.f32 0.0, %v2177
      %v2179 = vpop.f32.mrb[0].mxu0
      %2180 = vdwg.mxu0
      %v2181 = vadd.f32 %v1942, %v2178
      %v2182 = vadd.f32 %v2181, %v1605
      %s2183 = scalar_lea.vmem %s8, 1
      %v2184 = vld [vmem:[%s2183] sm:$0x1]
      %s2185 = scalar_lea.vmem %s9, 1
      %v2186 = vld [vmem:[%s2185] sm:$0x1]
      %v2187 = vsel %vm748, %v2182, 0.0
      %2188 = vadd.xlane.f32.xlu0 %v2187
      %v2189 = vpop.xlane.xlu0 %2188
      %v2190 = vmul.f32 %v2189, %v752
      %v2191 = vsub.f32 %v2182, %v2190
      %v2192 = vmul.f32 %v2191, %v2191
      %v2193 = vsel %vm748, %v2192, 0.0
      %2194 = vadd.xlane.f32.xlu0 %v2193
      %v2195 = vpop.xlane.xlu0 %2194
      %v2196 = vmul.f32 %v2195, %v752
      %v2197 = vadd.f32 %v2196, 1e-12
      %v2198 = vrsqrt.pop %v2197
      %v2199 = vmul.f32 %v2191, %v2198
      %v2201 = vlaneseq
      %v2202 = vshrl.u32 %v2201, 7
      %v2203 = vsub.s32 0, %v2202
      %v2204 = vrot.slane %v2184, %v2203
      %v2206 = vmul.f32 %v2199, %v2204
      %v2208 = vlaneseq
      %v2209 = vshrl.u32 %v2208, 7
      %v2210 = vsub.s32 0, %v2209
      %v2211 = vrot.slane %v2186, %v2210
      %v2213 = vadd.f32 %v2206, %v2211
      %s2214 = scalar_lea.vmem %s10, 32
      %v2215 = vld [vmem:[%s2214] sm:$0xff]
      %v2216 = vld [vmem:[%s2214 + $0x8] sm:$0xff]
      %v2217 = vld [vmem:[%s2214 + $0x10] sm:$0xff]
      %v2218 = vld [vmem:[%s2214 + $0x18] sm:$0xff]
      %s2219 = scalar_lea.vmem %s11, 1
      %v2220 = vld [vmem:[%s2219] sm:$0x1]
      %v2222 = vlaneseq
      %v2223 = vshrl.u32 %v2222, 7
      %v2224 = vsub.s32 0, %v2223
      %v2225 = vrot.slane %v2220, %v2224
      %v2228 = vsel %vm748, %v2213, 0
      %2230 = vmatprep.subr.mxu0 0.0
      %2231 = vmatpush1.msra.mxu0 %v2215
      %2232 = vmatprep.subr.mxu0 0.0
      %2233 = vmatpush1.msra.mxu0 %v2216
      %2234 = vmatprep.subr.mxu0 0.0
      %2235 = vmatpush1.msra.mxu0 %v2217
      %2236 = vmatprep.subr.mxu0 0.0
      %2237 = vmatpush1.msra.mxu0 %v2218
      %2238 = vmatprep.subr.mxu0 0.0
      %2239 = vmatpush1.msra.mxu0 0.0
      %2240 = vmatprep.subr.mxu0 0.0
      %2241 = vmatpush1.msra.mxu0 0.0
      %2242 = vmatprep.subr.mxu0 0.0
      %2243 = vmatpush1.msra.mxu0 0.0
      %2244 = vmatprep.subr.mxu0 0.0
      %2245 = vmatpush1.msra.mxu0 0.0
      %2246 = vmatprep.subr.mxu0 0.0
      %2247 = vmatpush1.msra.mxu0 0.0
      %2248 = vmatprep.subr.mxu0 0.0
      %2249 = vmatpush1.msra.mxu0 0.0
      %2250 = vmatprep.subr.mxu0 0.0
      %2251 = vmatpush1.msra.mxu0 0.0
      %2252 = vmatprep.subr.mxu0 0.0
      %2253 = vmatpush1.msra.mxu0 0.0
      %2254 = vmatprep.subr.mxu0 0.0
      %2255 = vmatpush1.msra.mxu0 0.0
      %2256 = vmatprep.subr.mxu0 0.0
      %2257 = vmatpush1.msra.mxu0 0.0
      %2258 = vmatprep.subr.mxu0 0.0
      %2259 = vmatpush1.msra.mxu0 0.0
      %2260 = vmatprep.subr.mxu0 0.0
      %2261 = vmatpush1.msra.mxu0 0.0
      %2262 = vmatprep.subr.mxu0 0.0
      %2263 = vmatpush1.msra.mxu0 0.0
      %2264 = vmatprep.subr.mxu0 0.0
      %2265 = vmatpush1.msra.mxu0 0.0
      %2266 = vmatprep.subr.mxu0 0.0
      %2267 = vmatpush1.msra.mxu0 0.0
      %2268 = vmatprep.subr.mxu0 0.0
      %2269 = vmatpush1.msra.mxu0 0.0
      %2270 = vmatprep.subr.mxu0 0.0
      %2271 = vmatpush1.msra.mxu0 0.0
      %2272 = vmatprep.subr.mxu0 0.0
      %2273 = vmatpush1.msra.mxu0 0.0
      %2274 = vmatprep.subr.mxu0 0.0
      %2275 = vmatpush1.msra.mxu0 0.0
      %2276 = vmatprep.subr.mxu0 0.0
      %2277 = vmatpush1.msra.mxu0 0.0
      %2278 = vmatprep.subr.mxu0 0.0
      %2279 = vmatpush1.msra.mxu0 0.0
      %2280 = vmatprep.subr.mxu0 0.0
      %2281 = vmatpush1.msra.mxu0 0.0
      %2282 = vmatprep.subr.mxu0 0.0
      %2283 = vmatpush1.msra.mxu0 0.0
      %2284 = vmatprep.subr.mxu0 0.0
      %2285 = vmatpush1.msra.mxu0 0.0
      %2286 = vmatprep.subr.mxu0 0.0
      %2287 = vmatpush1.msra.mxu0 0.0
      %2288 = vmatprep.subr.mxu0 0.0
      %2289 = vmatpush1.msra.mxu0 0.0
      %2290 = vmatprep.subr.mxu0 0.0
      %2291 = vmatpush1.msra.mxu0 0.0
      %2292 = vmatprep.subr.mxu0 0.0
      %2293 = vmatpush1.msra.mxu0 0.0
      %2294 = vmatprep.mubr.f32.mxu0 0.0
      %2295 = vmatmul.mubr.f32.gmra.mrb[0].mxu0 %v2228
      %v2296 = vpop.f32.mrb[0].mxu0
      %v2297 = vadd.f32 %v2225, %v2296
      %v2298 = vpop.f32.mrb[0].mxu0
      %2299 = vdwg.mxu0
      %v2300 = vmul.f32 %v2297, 0.5
      %v2301 = vmul.f32 %v2297, 0.044715
      %v2302 = vmul.f32 %v2301, %v2297
      %v2303 = vmul.f32 %v2302, %v2297
      %v2304 = vadd.f32 %v2297, %v2303
      %v2305 = vmul.f32 %v2304, 0.7978846
      %v2306 = vtanh.pop %v2305
      %v2307 = vadd.f32 %v2306, 1.0
      %v2308 = vmul.f32 %v2300, %v2307
      %s2309 = scalar_lea.vmem %s12, 128
      %v2310 = vld [vmem:[%s2309] sm:$0xff]
      %v2311 = vld [vmem:[%s2309 + $0x8] sm:$0xff]
      %v2312 = vld [vmem:[%s2309 + $0x10] sm:$0xff]
      %v2313 = vld [vmem:[%s2309 + $0x18] sm:$0xff]
      %v2314 = vld [vmem:[%s2309 + $0x20] sm:$0xff]
      %v2315 = vld [vmem:[%s2309 + $0x28] sm:$0xff]
      %v2316 = vld [vmem:[%s2309 + $0x30] sm:$0xff]
      %v2317 = vld [vmem:[%s2309 + $0x38] sm:$0xff]
      %v2318 = vld [vmem:[%s2309 + $0x40] sm:$0xff]
      %v2319 = vld [vmem:[%s2309 + $0x48] sm:$0xff]
      %v2320 = vld [vmem:[%s2309 + $0x50] sm:$0xff]
      %v2321 = vld [vmem:[%s2309 + $0x58] sm:$0xff]
      %v2322 = vld [vmem:[%s2309 + $0x60] sm:$0xff]
      %v2323 = vld [vmem:[%s2309 + $0x68] sm:$0xff]
      %v2324 = vld [vmem:[%s2309 + $0x70] sm:$0xff]
      %v2325 = vld [vmem:[%s2309 + $0x78] sm:$0xff]
      %s2326 = scalar_lea.vmem %s13, 1
      %v2327 = vld [vmem:[%s2326] sm:$0x1]
      %v2329 = vlaneseq
      %v2330 = vshrl.u32 %v2329, 7
      %v2331 = vsub.s32 0, %v2330
      %v2332 = vrot.slane %v2327, %v2331
      %2334 = vmatprep.subr.mxu0 0.0
      %2335 = vmatpush1.msra.mxu0 %v2310
      %2336 = vmatprep.subr.mxu0 0.0
      %2337 = vmatpush1.msra.mxu0 %v2311
      %2338 = vmatprep.subr.mxu0 0.0
      %2339 = vmatpush1.msra.mxu0 %v2312
      %2340 = vmatprep.subr.mxu0 0.0
      %2341 = vmatpush1.msra.mxu0 %v2313
      %2342 = vmatprep.subr.mxu0 0.0
      %2343 = vmatpush1.msra.mxu0 %v2314
      %2344 = vmatprep.subr.mxu0 0.0
      %2345 = vmatpush1.msra.mxu0 %v2315
      %2346 = vmatprep.subr.mxu0 0.0
      %2347 = vmatpush1.msra.mxu0 %v2316
      %2348 = vmatprep.subr.mxu0 0.0
      %2349 = vmatpush1.msra.mxu0 %v2317
      %2350 = vmatprep.subr.mxu0 0.0
      %2351 = vmatpush1.msra.mxu0 %v2318
      %2352 = vmatprep.subr.mxu0 0.0
      %2353 = vmatpush1.msra.mxu0 %v2319
      %2354 = vmatprep.subr.mxu0 0.0
      %2355 = vmatpush1.msra.mxu0 %v2320
      %2356 = vmatprep.subr.mxu0 0.0
      %2357 = vmatpush1.msra.mxu0 %v2321
      %2358 = vmatprep.subr.mxu0 0.0
      %2359 = vmatpush1.msra.mxu0 %v2322
      %2360 = vmatprep.subr.mxu0 0.0
      %2361 = vmatpush1.msra.mxu0 %v2323
      %2362 = vmatprep.subr.mxu0 0.0
      %2363 = vmatpush1.msra.mxu0 %v2324
      %2364 = vmatprep.subr.mxu0 0.0
      %2365 = vmatpush1.msra.mxu0 %v2325
      %2366 = vmatprep.subr.mxu0 0.0
      %2367 = vmatpush1.msra.mxu0 0.0
      %2368 = vmatprep.subr.mxu0 0.0
      %2369 = vmatpush1.msra.mxu0 0.0
      %2370 = vmatprep.subr.mxu0 0.0
      %2371 = vmatpush1.msra.mxu0 0.0
      %2372 = vmatprep.subr.mxu0 0.0
      %2373 = vmatpush1.msra.mxu0 0.0
      %2374 = vmatprep.subr.mxu0 0.0
      %2375 = vmatpush1.msra.mxu0 0.0
      %2376 = vmatprep.subr.mxu0 0.0
      %2377 = vmatpush1.msra.mxu0 0.0
      %2378 = vmatprep.subr.mxu0 0.0
      %2379 = vmatpush1.msra.mxu0 0.0
      %2380 = vmatprep.subr.mxu0 0.0
      %2381 = vmatpush1.msra.mxu0 0.0
      %2382 = vmatprep.subr.mxu0 0.0
      %2383 = vmatpush1.msra.mxu0 0.0
      %2384 = vmatprep.subr.mxu0 0.0
      %2385 = vmatpush1.msra.mxu0 0.0
      %2386 = vmatprep.subr.mxu0 0.0
      %2387 = vmatpush1.msra.mxu0 0.0
      %2388 = vmatprep.subr.mxu0 0.0
      %2389 = vmatpush1.msra.mxu0 0.0
      %2390 = vmatprep.subr.mxu0 0.0
      %2391 = vmatpush1.msra.mxu0 0.0
      %2392 = vmatprep.subr.mxu0 0.0
      %2393 = vmatpush1.msra.mxu0 0.0
      %2394 = vmatprep.subr.mxu0 0.0
      %2395 = vmatpush1.msra.mxu0 0.0
      %2396 = vmatprep.subr.mxu0 0.0
      %2397 = vmatpush1.msra.mxu0 0.0
      %2398 = vmatprep.mubr.f32.mxu0 0.0
      %2399 = vmatmul.mubr.f32.gmra.mrb[0].mxu0 %v2308
      %v2400 = vpop.f32.mrb[0].mxu0
      %v2401 = vadd.f32 %v2332, %v2400
      %v2402 = vpop.f32.mrb[0].mxu0
      %2403 = vdwg.mxu0
      %v2404 = vadd.f32 %v2401, %v2213
      %s2405 = scalar_lea.vmem %s14, 1
      %v2406 = vld [vmem:[%s2405] sm:$0x1]
      %s2407 = scalar_lea.vmem %s15, 1
      %v2408 = vld [vmem:[%s2407] sm:$0x1]
      %v2409 = vsel %vm748, %v2404, 0.0
      %2410 = vadd.xlane.f32.xlu0 %v2409
      %v2411 = vpop.xlane.xlu0 %2410
      %v2412 = vmul.f32 %v2411, %v752
      %v2413 = vsub.f32 %v2404, %v2412
      %v2414 = vmul.f32 %v2413, %v2413
      %v2415 = vsel %vm748, %v2414, 0.0
      %2416 = vadd.xlane.f32.xlu0 %v2415
      %v2417 = vpop.xlane.xlu0 %2416
      %v2418 = vmul.f32 %v2417, %v752
      %v2419 = vadd.f32 %v2418, 1e-12
      %v2420 = vrsqrt.pop %v2419
      %v2421 = vmul.f32 %v2413, %v2420
      %v2423 = vlaneseq
      %v2424 = vshrl.u32 %v2423, 7
      %v2425 = vsub.s32 0, %v2424
      %v2426 = vrot.slane %v2406, %v2425
      %v2428 = vmul.f32 %v2421, %v2426
      %v2430 = vlaneseq
      %v2431 = vshrl.u32 %v2430, 7
      %v2432 = vsub.s32 0, %v2431
      %v2433 = vrot.slane %v2408, %v2432
      %v2435 = vadd.f32 %v2428, %v2433
      %v2436 = vld [vmem:[%s16] sm:$0xff]
      %v2437 = vld [vmem:[%s16 + $0x8] sm:$0xff]
      %v2438 = vld [vmem:[%s16 + $0x10] sm:$0xff]
      %v2439 = vld [vmem:[%s16 + $0x18] sm:$0xff]
      %v2440 = vld [vmem:[%s17] sm:$0x1]
      %v2442 = vsel %vm748, %v2435, 0
      %2444 = vmatprep.subr.mxu0 0.0
      %2445 = vmatpush1.msra.mxu0 %v2436
      %2446 = vmatprep.subr.mxu0 0.0
      %2447 = vmatpush1.msra.mxu0 %v2437
      %2448 = vmatprep.subr.mxu0 0.0
      %2449 = vmatpush1.msra.mxu0 %v2438
      %2450 = vmatprep.subr.mxu0 0.0
      %2451 = vmatpush1.msra.mxu0 %v2439
      %2452 = vmatprep.subr.mxu0 0.0
      %2453 = vmatpush1.msra.mxu0 0.0
      %2454 = vmatprep.subr.mxu0 0.0
      %2455 = vmatpush1.msra.mxu0 0.0
      %2456 = vmatprep.subr.mxu0 0.0
      %2457 = vmatpush1.msra.mxu0 0.0
      %2458 = vmatprep.subr.mxu0 0.0
      %2459 = vmatpush1.msra.mxu0 0.0
      %2460 = vmatprep.subr.mxu0 0.0
      %2461 = vmatpush1.msra.mxu0 0.0
      %2462 = vmatprep.subr.mxu0 0.0
      %2463 = vmatpush1.msra.mxu0 0.0
      %2464 = vmatprep.subr.mxu0 0.0
      %2465 = vmatpush1.msra.mxu0 0.0
      %2466 = vmatprep.subr.mxu0 0.0
      %2467 = vmatpush1.msra.mxu0 0.0
      %2468 = vmatprep.subr.mxu0 0.0
      %2469 = vmatpush1.msra.mxu0 0.0
      %2470 = vmatprep.subr.mxu0 0.0
      %2471 = vmatpush1.msra.mxu0 0.0
      %2472 = vmatprep.subr.mxu0 0.0
      %2473 = vmatpush1.msra.mxu0 0.0
      %2474 = vmatprep.subr.mxu0 0.0
      %2475 = vmatpush1.msra.mxu0 0.0
      %2476 = vmatprep.subr.mxu0 0.0
      %2477 = vmatpush1.msra.mxu0 0.0
      %2478 = vmatprep.subr.mxu0 0.0
      %2479 = vmatpush1.msra.mxu0 0.0
      %2480 = vmatprep.subr.mxu0 0.0
      %2481 = vmatpush1.msra.mxu0 0.0
      %2482 = vmatprep.subr.mxu0 0.0
      %2483 = vmatpush1.msra.mxu0 0.0
      %2484 = vmatprep.subr.mxu0 0.0
      %2485 = vmatpush1.msra.mxu0 0.0
      %2486 = vmatprep.subr.mxu0 0.0
      %2487 = vmatpush1.msra.mxu0 0.0
      %2488 = vmatprep.subr.mxu0 0.0
      %2489 = vmatpush1.msra.mxu0 0.0
      %2490 = vmatprep.subr.mxu0 0.0
      %2491 = vmatpush1.msra.mxu0 0.0
      %2492 = vmatprep.subr.mxu0 0.0
      %2493 = vmatpush1.msra.mxu0 0.0
      %2494 = vmatprep.subr.mxu0 0.0
      %2495 = vmatpush1.msra.mxu0 0.0
      %2496 = vmatprep.subr.mxu0 0.0
      %2497 = vmatpush1.msra.mxu0 0.0
      %2498 = vmatprep.subr.mxu0 0.0
      %2499 = vmatpush1.msra.mxu0 0.0
      %2500 = vmatprep.subr.mxu0 0.0
      %2501 = vmatpush1.msra.mxu0 0.0
      %2502 = vmatprep.subr.mxu0 0.0
      %2503 = vmatpush1.msra.mxu0 0.0
      %2504 = vmatprep.subr.mxu0 0.0
      %2505 = vmatpush1.msra.mxu0 0.0
      %2506 = vmatprep.subr.mxu0 0.0
      %2507 = vmatpush1.msra.mxu0 0.0
      %2508 = vmatprep.mubr.f32.mxu0 0.0
      %2509 = vmatmul.mubr.f32.gmra.mrb[0].mxu0 %v2442
      %v2510 = vpop.f32.mrb[0].mxu0
      %v2511 = vadd.f32 %v2440, %v2510
      %v2512 = vpop.f32.mrb[0].mxu0
      %2513 = vdwg.mxu0
      %v2514 = vtanh.pop %v2511
      %v2515 = vld [vmem:[%s18] sm:$0xff]
      %v2516 = vld [vmem:[%s18 + $0x8] sm:$0xff]
      %v2517 = vld [vmem:[%s18 + $0x10] sm:$0xff]
      %v2518 = vld [vmem:[%s18 + $0x18] sm:$0xff]
      %v2519 = vld [vmem:[%s19] sm:$0x1]
      %v2521 = vsel %vm748, %v2514, 0
      %2523 = vmatprep.subr.mxu0 0.0
      %2524 = vmatpush1.msra.mxu0 %v2515
      %2525 = vmatprep.subr.mxu0 0.0
      %2526 = vmatpush1.msra.mxu0 %v2516
      %2527 = vmatprep.subr.mxu0 0.0
      %2528 = vmatpush1.msra.mxu0 %v2517
      %2529 = vmatprep.subr.mxu0 0.0
      %2530 = vmatpush1.msra.mxu0 %v2518
      %2531 = vmatprep.subr.mxu0 0.0
      %2532 = vmatpush1.msra.mxu0 0.0
      %2533 = vmatprep.subr.mxu0 0.0
      %2534 = vmatpush1.msra.mxu0 0.0
      %2535 = vmatprep.subr.mxu0 0.0
      %2536 = vmatpush1.msra.mxu0 0.0
      %2537 = vmatprep.subr.mxu0 0.0
      %2538 = vmatpush1.msra.mxu0 0.0
      %2539 = vmatprep.subr.mxu0 0.0
      %2540 = vmatpush1.msra.mxu0 0.0
      %2541 = vmatprep.subr.mxu0 0.0
      %2542 = vmatpush1.msra.mxu0 0.0
      %2543 = vmatprep.subr.mxu0 0.0
      %2544 = vmatpush1.msra.mxu0 0.0
      %2545 = vmatprep.subr.mxu0 0.0
      %2546 = vmatpush1.msra.mxu0 0.0
      %2547 = vmatprep.subr.mxu0 0.0
      %2548 = vmatpush1.msra.mxu0 0.0
      %2549 = vmatprep.subr.mxu0 0.0
      %2550 = vmatpush1.msra.mxu0 0.0
      %2551 = vmatprep.subr.mxu0 0.0
      %2552 = vmatpush1.msra.mxu0 0.0
      %2553 = vmatprep.subr.mxu0 0.0
      %2554 = vmatpush1.msra.mxu0 0.0
      %2555 = vmatprep.subr.mxu0 0.0
      %2556 = vmatpush1.msra.mxu0 0.0
      %2557 = vmatprep.subr.mxu0 0.0
      %2558 = vmatpush1.msra.mxu0 0.0
      %2559 = vmatprep.subr.mxu0 0.0
      %2560 = vmatpush1.msra.mxu0 0.0
      %2561 = vmatprep.subr.mxu0 0.0
      %2562 = vmatpush1.msra.mxu0 0.0
      %2563 = vmatprep.subr.mxu0 0.0
      %2564 = vmatpush1.msra.mxu0 0.0
      %2565 = vmatprep.subr.mxu0 0.0
      %2566 = vmatpush1.msra.mxu0 0.0
      %2567 = vmatprep.subr.mxu0 0.0
      %2568 = vmatpush1.msra.mxu0 0.0
      %2569 = vmatprep.subr.mxu0 0.0
      %2570 = vmatpush1.msra.mxu0 0.0
      %2571 = vmatprep.subr.mxu0 0.0
      %2572 = vmatpush1.msra.mxu0 0.0
      %2573 = vmatprep.subr.mxu0 0.0
      %2574 = vmatpush1.msra.mxu0 0.0
      %2575 = vmatprep.subr.mxu0 0.0
      %2576 = vmatpush1.msra.mxu0 0.0
      %2577 = vmatprep.subr.mxu0 0.0
      %2578 = vmatpush1.msra.mxu0 0.0
      %2579 = vmatprep.subr.mxu0 0.0
      %2580 = vmatpush1.msra.mxu0 0.0
      %2581 = vmatprep.subr.mxu0 0.0
      %2582 = vmatpush1.msra.mxu0 0.0
      %2583 = vmatprep.subr.mxu0 0.0
      %2584 = vmatpush1.msra.mxu0 0.0
      %2585 = vmatprep.subr.mxu0 0.0
      %2586 = vmatpush1.msra.mxu0 0.0
      %2587 = vmatprep.mubr.f32.mxu0 0.0
      %2588 = vmatmul.mubr.f32.gmra.mrb[0].mxu0 %v2521
      %v2589 = vpop.f32.mrb[0].mxu0
      %v2590 = vadd.f32 %v2519, %v2589
      %v2591 = vpop.f32.mrb[0].mxu0
      %2592 = vdwg.mxu0
      %v2593 = vmax.f32 %v2590, 0.0
      %v2594 = vld [vmem:[%s20] sm:$0xff]
      %v2595 = vld [vmem:[%s20 + $0x8] sm:$0xff]
      %v2596 = vld [vmem:[%s20 + $0x10] sm:$0xff]
      %v2597 = vld [vmem:[%s20 + $0x18] sm:$0xff]
      %v2598 = vld [vmem:[%s20 + $0x20] sm:$0xff]
      %v2599 = vld [vmem:[%s20 + $0x28] sm:$0xff]
      %v2600 = vld [vmem:[%s20 + $0x30] sm:$0xff]
      %v2601 = vld [vmem:[%s20 + $0x38] sm:$0xff]
      %v2602 = vld [vmem:[%s20 + $0x40] sm:$0xff]
      %v2603 = vld [vmem:[%s20 + $0x48] sm:$0xff]
      %v2604 = vld [vmem:[%s20 + $0x50] sm:$0xff]
      %v2605 = vld [vmem:[%s20 + $0x58] sm:$0xff]
      %v2606 = vld [vmem:[%s20 + $0x60] sm:$0xff]
      %v2607 = vld [vmem:[%s20 + $0x68] sm:$0xff]
      %v2608 = vld [vmem:[%s20 + $0x70] sm:$0xff]
      %v2609 = vld [vmem:[%s20 + $0x78] sm:$0xff]
      %v2610 = vld [vmem:[%s21] sm:$0x1]
      %2611 = vmatprep.subr.mxu0 0.0
      %2612 = vmatpush1.msra.mxu0 %v2594
      %2613 = vmatprep.subr.mxu0 0.0
      %2614 = vmatpush1.msra.mxu0 %v2595
      %2615 = vmatprep.subr.mxu0 0.0
      %2616 = vmatpush1.msra.mxu0 %v2596
      %2617 = vmatprep.subr.mxu0 0.0
      %2618 = vmatpush1.msra.mxu0 %v2597
      %2619 = vmatprep.subr.mxu0 0.0
      %2620 = vmatpush1.msra.mxu0 %v2598
      %2621 = vmatprep.subr.mxu0 0.0
      %2622 = vmatpush1.msra.mxu0 %v2599
      %2623 = vmatprep.subr.mxu0 0.0
      %2624 = vmatpush1.msra.mxu0 %v2600
      %2625 = vmatprep.subr.mxu0 0.0
      %2626 = vmatpush1.msra.mxu0 %v2601
      %2627 = vmatprep.subr.mxu0 0.0
      %2628 = vmatpush1.msra.mxu0 %v2602
      %2629 = vmatprep.subr.mxu0 0.0
      %2630 = vmatpush1.msra.mxu0 %v2603
      %2631 = vmatprep.subr.mxu0 0.0
      %2632 = vmatpush1.msra.mxu0 %v2604
      %2633 = vmatprep.subr.mxu0 0.0
      %2634 = vmatpush1.msra.mxu0 %v2605
      %2635 = vmatprep.subr.mxu0 0.0
      %2636 = vmatpush1.msra.mxu0 %v2606
      %2637 = vmatprep.subr.mxu0 0.0
      %2638 = vmatpush1.msra.mxu0 %v2607
      %2639 = vmatprep.subr.mxu0 0.0
      %2640 = vmatpush1.msra.mxu0 %v2608
      %2641 = vmatprep.subr.mxu0 0.0
      %2642 = vmatpush1.msra.mxu0 %v2609
      %2643 = vmatprep.subr.mxu0 0.0
      %2644 = vmatpush1.msra.mxu0 0.0
      %2645 = vmatprep.subr.mxu0 0.0
      %2646 = vmatpush1.msra.mxu0 0.0
      %2647 = vmatprep.subr.mxu0 0.0
      %2648 = vmatpush1.msra.mxu0 0.0
      %2649 = vmatprep.subr.mxu0 0.0
      %2650 = vmatpush1.msra.mxu0 0.0
      %2651 = vmatprep.subr.mxu0 0.0
      %2652 = vmatpush1.msra.mxu0 0.0
      %2653 = vmatprep.subr.mxu0 0.0
      %2654 = vmatpush1.msra.mxu0 0.0
      %2655 = vmatprep.subr.mxu0 0.0
      %2656 = vmatpush1.msra.mxu0 0.0
      %2657 = vmatprep.subr.mxu0 0.0
      %2658 = vmatpush1.msra.mxu0 0.0
      %2659 = vmatprep.subr.mxu0 0.0
      %2660 = vmatpush1.msra.mxu0 0.0
      %2661 = vmatprep.subr.mxu0 0.0
      %2662 = vmatpush1.msra.mxu0 0.0
      %2663 = vmatprep.subr.mxu0 0.0
      %2664 = vmatpush1.msra.mxu0 0.0
      %2665 = vmatprep.subr.mxu0 0.0
      %2666 = vmatpush1.msra.mxu0 0.0
      %2667 = vmatprep.subr.mxu0 0.0
      %2668 = vmatpush1.msra.mxu0 0.0
      %2669 = vmatprep.subr.mxu0 0.0
      %2670 = vmatpush1.msra.mxu0 0.0
      %2671 = vmatprep.subr.mxu0 0.0
      %2672 = vmatpush1.msra.mxu0 0.0
      %2673 = vmatprep.subr.mxu0 0.0
      %2674 = vmatpush1.msra.mxu0 0.0
      %2675 = vmatprep.mubr.f32.mxu0 0.0
      %2676 = vmatmul.mubr.f32.gmra.mrb[0].mxu0 %v2593
      %v2677 = vpop.f32.mrb[0].mxu0
      %v2678 = vadd.f32 %v2610, %v2677
      %v2679 = vpop.f32.mrb[0].mxu0
      %2680 = vdwg.mxu0
      %v2681 = vmax.f32 %v2678, 0.0
      %v2682 = vld [vmem:[%s22] sm:$0xff]
      %v2683 = vld [vmem:[%s22 + $0x8] sm:$0xff]
      %v2684 = vld [vmem:[%s22 + $0x10] sm:$0xff]
      %v2685 = vld [vmem:[%s22 + $0x18] sm:$0xff]
      %v2686 = vld [vmem:[%s22 + $0x20] sm:$0xff]
      %v2687 = vld [vmem:[%s22 + $0x28] sm:$0xff]
      %v2688 = vld [vmem:[%s22 + $0x30] sm:$0xff]
      %v2689 = vld [vmem:[%s22 + $0x38] sm:$0xff]
      %v2690 = vld [vmem:[%s22 + $0x40] sm:$0xff]
      %v2691 = vld [vmem:[%s22 + $0x48] sm:$0xff]
      %v2692 = vld [vmem:[%s22 + $0x50] sm:$0xff]
      %v2693 = vld [vmem:[%s22 + $0x58] sm:$0xff]
      %v2694 = vld [vmem:[%s22 + $0x60] sm:$0xff]
      %v2695 = vld [vmem:[%s22 + $0x68] sm:$0xff]
      %v2696 = vld [vmem:[%s22 + $0x70] sm:$0xff]
      %v2697 = vld [vmem:[%s22 + $0x78] sm:$0xff]
      %v2698 = vld [vmem:[%s23] sm:$0x1]
      %2699 = vmatprep.subr.mxu0 0.0
      %2700 = vmatpush1.msra.mxu0 %v2682
      %2701 = vmatprep.subr.mxu0 0.0
      %2702 = vmatpush1.msra.mxu0 %v2683
      %2703 = vmatprep.subr.mxu0 0.0
      %2704 = vmatpush1.msra.mxu0 %v2684
      %2705 = vmatprep.subr.mxu0 0.0
      %2706 = vmatpush1.msra.mxu0 %v2685
      %2707 = vmatprep.subr.mxu0 0.0
      %2708 = vmatpush1.msra.mxu0 %v2686
      %2709 = vmatprep.subr.mxu0 0.0
      %2710 = vmatpush1.msra.mxu0 %v2687
      %2711 = vmatprep.subr.mxu0 0.0
      %2712 = vmatpush1.msra.mxu0 %v2688
      %2713 = vmatprep.subr.mxu0 0.0
      %2714 = vmatpush1.msra.mxu0 %v2689
      %2715 = vmatprep.subr.mxu0 0.0
      %2716 = vmatpush1.msra.mxu0 %v2690
      %2717 = vmatprep.subr.mxu0 0.0
      %2718 = vmatpush1.msra.mxu0 %v2691
      %2719 = vmatprep.subr.mxu0 0.0
      %2720 = vmatpush1.msra.mxu0 %v2692
      %2721 = vmatprep.subr.mxu0 0.0
      %2722 = vmatpush1.msra.mxu0 %v2693
      %2723 = vmatprep.subr.mxu0 0.0
      %2724 = vmatpush1.msra.mxu0 %v2694
      %2725 = vmatprep.subr.mxu0 0.0
      %2726 = vmatpush1.msra.mxu0 %v2695
      %2727 = vmatprep.subr.mxu0 0.0
      %2728 = vmatpush1.msra.mxu0 %v2696
      %2729 = vmatprep.subr.mxu0 0.0
      %2730 = vmatpush1.msra.mxu0 %v2697
      %2731 = vmatprep.subr.mxu0 0.0
      %2732 = vmatpush1.msra.mxu0 0.0
      %2733 = vmatprep.subr.mxu0 0.0
      %2734 = vmatpush1.msra.mxu0 0.0
      %2735 = vmatprep.subr.mxu0 0.0
      %2736 = vmatpush1.msra.mxu0 0.0
      %2737 = vmatprep.subr.mxu0 0.0
      %2738 = vmatpush1.msra.mxu0 0.0
      %2739 = vmatprep.subr.mxu0 0.0
      %2740 = vmatpush1.msra.mxu0 0.0
      %2741 = vmatprep.subr.mxu0 0.0
      %2742 = vmatpush1.msra.mxu0 0.0
      %2743 = vmatprep.subr.mxu0 0.0
      %2744 = vmatpush1.msra.mxu0 0.0
      %2745 = vmatprep.subr.mxu0 0.0
      %2746 = vmatpush1.msra.mxu0 0.0
      %2747 = vmatprep.subr.mxu0 0.0
      %2748 = vmatpush1.msra.mxu0 0.0
      %2749 = vmatprep.subr.mxu0 0.0
      %2750 = vmatpush1.msra.mxu0 0.0
      %2751 = vmatprep.subr.mxu0 0.0
      %2752 = vmatpush1.msra.mxu0 0.0
      %2753 = vmatprep.subr.mxu0 0.0
      %2754 = vmatpush1.msra.mxu0 0.0
      %2755 = vmatprep.subr.mxu0 0.0
      %2756 = vmatpush1.msra.mxu0 0.0
      %2757 = vmatprep.subr.mxu0 0.0
      %2758 = vmatpush1.msra.mxu0 0.0
      %2759 = vmatprep.subr.mxu0 0.0
      %2760 = vmatpush1.msra.mxu0 0.0
      %2761 = vmatprep.subr.mxu0 0.0
      %2762 = vmatpush1.msra.mxu0 0.0
      %2763 = vmatprep.mubr.f32.mxu0 0.0
      %2764 = vmatmul.mubr.f32.gmra.mrb[0].mxu0 %v2681
      %v2765 = vpop.f32.mrb[0].mxu0
      %v2766 = vadd.f32 %v2698, %v2765
      %v2767 = vpop.f32.mrb[0].mxu0
      %2768 = vdwg.mxu0
      %2769 = vst [vmem:[%s744] sm:$0x1] %v2766
      %p2770 = scmp.lt.s32.totalorder %s35, 1
      %s2771 = scalar_select %p2770, %s35, 1
      %s2772 = scalar_lea.vmem %s24, %s2771
      // Predicated region
      $region117: #{bert_multitask_forward.1} parent=115 // pred_check
        %p2773 = pneg %p567
      $region118: #{bert_multitask_forward.1} parent=115 // pred_check_branch
        %2775 = sbr.rel (%p2773) target = $region120
      $region119: #{bert_multitask_forward.1} parent=115 // pred_region
        _
      $region120: #{bert_multitask_forward.1} parent=115 // pred_fallthru
        _
    $region116: #{bert_multitask_forward.1} parent=5 // pred_fallthru
      _
    %p2776 = scmp.le.s32.totalorder 2, %s30
    // Predicated region
    $region121: #{bert_multitask_forward.1} parent=5 // pred_check
      %p2777 = pneg %p2776
    $region122: #{bert_multitask_forward.1} parent=5 // pred_check_branch
      %2779 = sbr.rel (%p2777) target = $region124
    $region123: #{bert_multitask_forward.1} parent=5 // pred_region
      %s2780 = ssub.s32 %s30, 2
      // Predicated region
      $region125: #{bert_multitask_forward.1} parent=123 // pred_check
        %p2781 = pneg %p573
      $region126: #{bert_multitask_forward.1} parent=123 // pred_check_branch
        %2783 = sbr.rel (%p2781) target = $region128
      $region127: #{bert_multitask_forward.1} parent=123 // pred_region
        %p2784 = scmp.lt.s32.totalorder %s36, 1
        %s2785 = scalar_select %p2784, %s36, 1
        %s2786 = scalar_lea.vmem %s24, %s2785
      $region128: #{bert_multitask_forward.1} parent=123 // pred_fallthru
        _
    $region124: #{bert_multitask_forward.1} parent=5 // pred_fallthru
      _
  $region6: #{bert_multitask_forward.1} parent=0 // loop_footer
    %s34 = sadd.s32 1, %s30
  $region7: #{bert_multitask_forward.1} parent=0 // loop_footer_branch
    %29 = sbr.rel target = $region3
  $region8: #{bert_multitask_forward.1} parent=0 // loop_exit
    _

</llo_original>
